<compile_context>
chip_gen: v7x
topology: tpu7x:2x2x1
jax: 0.10.0
libtpu: 0.0.40
codegen_flags: <defaults>
</compile_context>

<pallas_src>
import functools

import numpy as np

import jax
import jax.numpy as jnp
from jax.experimental import pallas as pl
from jax.experimental.pallas import tpu as pltpu


# ------------------------- fused forward kernel ----------------------------

def _fused_cnn_kernel(a0_ref, g1_ref, b1_ref, g2_ref, b2_ref, g3_ref, b3_ref,
                      h4_ref, b4_ref, out_ref, lhs4_ref, *,
                      n, kh2, oh2, kh3, oh3):
    """Whole CNN forward on VMEM-resident data.

    a0_ref : (OH1*n, KH1*W0)  bf16   conv1 LHS (kernel rows pre-folded into K)
    g1_ref : (KH1*W0, OW1*C1) bf16   conv1 weights as one dense-K matrix
    gK_ref : (KH, W*Cin, colW) bf16  banded per-kernel-row conv matrices
    bK_ref : (1, colW)        f32    bias tiled across output width
    h4_ref : (OH3*col3, 32)   bf16   conv4 + global-avg-pool folded weights
    b4_ref : (1, 32)          f32
    out_ref: (n, 32)          f32
    lhs4_ref: (n, OH3*col3)   bf16   scratch: conv4 LHS gathered along lanes
    """
    bf16 = jnp.bfloat16

    def banded_conv_relu(a_f32, g_ref, b_ref, kh, oh):
        rows = oh * n                                   # multiple of 8
        acc = jnp.dot(a_f32[0:rows, :].astype(bf16), g_ref[0],
                      preferred_element_type=jnp.float32)
        for i in range(1, kh):                          # i*n is 8-aligned
            acc = acc + jnp.dot(a_f32[i * n:i * n + rows, :].astype(bf16),
                                g_ref[i], preferred_element_type=jnp.float32)
        return jnp.maximum(acc + b_ref[...], 0.0)

    # Conv2d(1, 8, 6) + ReLU -- single wide-K (K = KH1*W0) dot.
    a1 = jnp.maximum(
        jnp.dot(a0_ref[...], g1_ref[...], preferred_element_type=jnp.float32)
        + b1_ref[...], 0.0)

    a2 = banded_conv_relu(a1, g2_ref, b2_ref, kh2, oh2)   # Conv2d(8, 16, 6)+ReLU
    a3 = banded_conv_relu(a2, g3_ref, b3_ref, kh3, oh3)   # Conv2d(16, 32, 5)+ReLU
    # a3: (oh3*n, col3) with col3 a multiple of 128 (lane-padded at pack time).

    # Conv2d(32, 32, 5) + AdaptiveAvgPool2d(1) + Flatten, folded algebraically
    # into ONE dot: gather the oh3 row-blocks of a3 side-by-side along lanes
    # (8-row, 128-lane aligned stores into VMEM scratch), then
    #   out = lhs4 @ H4 + b4.
    col = a3.shape[1]
    for h in range(oh3):
        lhs4_ref[:, h * col:(h + 1) * col] = a3[h * n:(h + 1) * n, :].astype(bf16)
    out_ref[...] = (jnp.dot(lhs4_ref[...], h4_ref[...],
                            preferred_element_type=jnp.float32)
                    + b4_ref[...]).astype(out_ref.dtype)


def cnn_forward(x_nchw, packed, cfg):
    """Equivalent of CNN.forward: (N, 1, H, W) -> (N, 32)."""
    kh1, kh2, oh2, kh3, oh3 = cfg
    N, C, H0, W0 = x_nchw.shape
    assert C == 1
    oh1 = H0 - kh1 + 1

    # Pad batch to a multiple of 8 so every in-kernel row slice is
    # sublane-aligned; padded rows are dropped at the end.
    n_pad = -(-N // 8) * 8
    xp = x_nchw[:, 0, :, :]
    if n_pad != N:
        xp = jnp.pad(xp, ((0, n_pad - N), (0, 0), (0, 0)))

    # Conv1 height-fold (host/XLA side, tiny):
    #   a0[oh*n_pad + n, i*W0 + w] = x[n, 0, oh+i, w]
    cols = [jnp.transpose(xp[:, i:i + oh1, :], (1, 0, 2)).reshape(oh1 * n_pad, W0)
            for i in range(kh1)]
    a0 = jnp.concatenate(cols, axis=-1).astype(jnp.bfloat16)

    g1, b1, g2, b2, g3, b3, h4, b4 = packed
    n_out = h4.shape[-1]
    vmem = pl.BlockSpec(memory_space=pltpu.MemorySpace.VMEM)
    out = pl.pallas_call(
        functools.partial(_fused_cnn_kernel, n=n_pad,
                          kh2=kh2, oh2=oh2, kh3=kh3, oh3=oh3),
        out_shape=jax.ShapeDtypeStruct((n_pad, n_out), jnp.float32),
        in_specs=[vmem] * 9,
        out_specs=vmem,
        scratch_shapes=[pltpu.VMEM((n_pad, h4.shape[0]), jnp.bfloat16)],
    )(a0, g1, b1, g2, b2, g3, b3, h4, b4)
    return out[:N]


# --------------------- one-time host-side weight packing --------------------

def _banded_conv_weights(w, in_w, out_cols=None):
    """(Cout, Cin, KH, KW) -> (KH, in_w*Cin, out_cols) banded matrices G_i with
    G_i[w*Cin + c, ow*Cout + co] = w[co, c, i, w - ow] when 0 <= w-ow < KW.
    Columns beyond OW*Cout (lane padding) are zero."""
    cout, cin, kh, kw = w.shape
    ow_n = in_w - kw + 1
    cols = ow_n * cout if out_cols is None else out_cols
    wt = np.transpose(w, (2, 3, 1, 0))                 # (kh, kw, cin, cout)
    g = np.zeros((kh, in_w * cin, cols), np.float32)
    for i in range(kh):
        for ow in range(ow_n):
            for j in range(kw):
                wi = ow + j
                g[i, wi * cin:(wi + 1) * cin, ow * cout:(ow + 1) * cout] = wt[i, j]
    return g


def _conv_pool_folded_weights(w, in_h, in_w, col_stride):
    """Fold Conv2d (no ReLU) + AdaptiveAvgPool2d(1) into a single flattened
    matrix H of shape (in_h*col_stride, Cout) matching the lane-gathered LHS
    lhs4[n, h*col_stride + w*Cin + c] = A[h*Npad + n, w*Cin + c]."""
    cout, cin, kh, kw = w.shape
    oh_n, ow_n = in_h - kh + 1, in_w - kw + 1
    scale = 1.0 / float(oh_n * ow_n)
    wt = np.transpose(w, (2, 3, 1, 0))                 # (kh, kw, cin, cout)
    v = np.zeros((in_h, col_stride, cout), np.float32)
    for oh in range(oh_n):
        for ow in range(ow_n):
            for i in range(kh):
                for j in range(kw):
                    v[oh + i, (ow + j) * cin:(ow + j + 1) * cin, :] += scale * wt[i, j]
    return v.reshape(in_h * col_stride, cout)


def prepare_params(params, in_hw):
    """Pack PyTorch-layout conv params once (hoisted out of the jitted fwd).
    Weight matrices are stored bf16 (MXU fast path); biases stay f32."""
    H0, W0 = in_hw
    (w1, b1), (w2, b2), (w3, b3), (w4, b4) = [
        (np.asarray(w, np.float32), np.asarray(b, np.float32)) for w, b in params]

    # Conv1: fold kernel rows into K -> one (KH1*W0, OW1*C1) matrix.
    c1, _, kh1, kw1 = w1.shape
    oh1, ow1 = H0 - kh1 + 1, W0 - kw1 + 1
    g1 = _banded_conv_weights(w1, W0).reshape(kh1 * W0, ow1 * c1)
    b1t = np.tile(b1, ow1).reshape(1, ow1 * c1)

    # Conv2: banded per-kernel-row matrices.
    c2, _, kh2, kw2 = w2.shape
    oh2, ow2 = oh1 - kh2 + 1, ow1 - kw2 + 1
    g2 = _banded_conv_weights(w2, ow1)
    b2t = np.tile(b2, ow2).reshape(1, ow2 * c2)

    # Conv3: banded, output width lane-padded to a multiple of 128 so the
    # conv4 lane-gather uses only aligned offsets.
    c3, _, kh3, kw3 = w3.shape
    oh3, ow3 = oh2 - kh3 + 1, ow2 - kw3 + 1
    col3 = -(-(ow3 * c3) // 128) * 128
    g3 = _banded_conv_weights(w3, ow2, out_cols=col3)
    b3t = np.zeros((1, col3), np.float32)
    b3t[0, :ow3 * c3] = np.tile(b3, ow3)

    # Conv4 + AdaptiveAvgPool2d(1): folded + flattened to (oh3*col3, Cout).
    h4 = _conv_pool_folded_weights(w4, oh3, ow3, col3)
    b4r = b4.reshape(1, -1)

    bf = jnp.bfloat16
    packed = (jnp.asarray(g1, bf), jnp.asarray(b1t),
              jnp.asarray(g2, bf), jnp.asarray(b2t),
              jnp.asarray(g3, bf), jnp.asarray(b3t),
              jnp.asarray(h4, bf), jnp.asarray(b4r))
    cfg = (kh1, kh2, oh2, kh3, oh3)
    return packed, cfg


# ------------------------------ param init ---------------------------------

def init_conv_params(key, cout, cin, k):
    """Deterministic init mimicking PyTorch Conv2d default (U(+-1/sqrt(fan_in)))."""
    kw_, kb_ = jax.random.split(key)
    fan_in = cin * k * k
    bound = 1.0 / (fan_in ** 0.5)
    w = jax.random.uniform(kw_, (cout, cin, k, k), jnp.float32, -bound, bound)
    b = jax.random.uniform(kb_, (cout,), jnp.float32, -bound, bound)
    return w, b


# ------------------------------- reference ---------------------------------

def cnn_reference(x_nchw, params):
    x = x_nchw
    for i, (w, b) in enumerate(params):
        x = jax.lax.conv_general_dilated(
            x, w, window_strides=(1, 1), padding="VALID",
            dimension_numbers=("NCHW", "OIHW", "NCHW"),
            precision=jax.lax.Precision.HIGHEST)
        x = x + b.reshape(1, -1, 1, 1)
        if i < 3:
            x = jnp.maximum(x, 0.0)
    return jnp.mean(x, axis=(2, 3))                    # (N, 32)


# ---------------------------------- main ------------------------------------

if __name__ == "__main__":
    key = jax.random.PRNGKey(0)
    k_in, k1, k2, k3, k4 = jax.random.split(key, 5)

    # Minimum spatial size for this conv stack is 19; use a 20x20 1-channel input.
    x = jax.random.normal(k_in, (2, 1, 20, 20), jnp.float32)

    params = [
        init_conv_params(k1, 8, 1, 6),
        init_conv_params(k2, 16, 8, 6),
        init_conv_params(k3, 32, 16, 5),
        init_conv_params(k4, 32, 32, 5),
    ]

    packed, cfg = prepare_params(params, (20, 20))

    fwd = jax.jit(cnn_forward, static_argnums=(2,))
    out = jax.block_until_ready(fwd(x, packed, cfg))

    assert out.shape == (2, 32), out.shape
    ref = cnn_reference(x, params)
    max_err = float(jnp.max(jnp.abs(out - ref)))
    # bf16 operands / f32 accumulation (matches the MXU fast path) -> 1e-2 tol.
    assert jnp.allclose(out, ref, rtol=1e-2, atol=1e-2), ("max abs err", max_err)

    print("KERNEL_OK")
</pallas_src>

<mosaic_0001>
module attributes {stable_mosaic.version = 11 : i64} {
  func.func @_fused_cnn_kernel(%arg0: memref<120x120xbf16, #tpu.memory_space<vmem>>, %arg1: memref<120x120xbf16, #tpu.memory_space<vmem>>, %arg2: memref<1x120xf32, #tpu.memory_space<vmem>>, %arg3: memref<6x120x160xbf16, #tpu.memory_space<vmem>>, %arg4: memref<1x160xf32, #tpu.memory_space<vmem>>, %arg5: memref<5x160x256xbf16, #tpu.memory_space<vmem>>, %arg6: memref<1x256xf32, #tpu.memory_space<vmem>>, %arg7: memref<1536x32xbf16, #tpu.memory_space<vmem>>, %arg8: memref<1x32xf32, #tpu.memory_space<vmem>>, %arg9: memref<8x32xf32, #tpu.memory_space<vmem>>, %arg10: memref<8x1536xbf16, #tpu.memory_space<vmem>>) attributes {dimension_semantics = [], scalar_prefetch = 0 : i64, scratch_operands = 1 : i64, tpu.core_type = #tpu.core_type<tc>} {
    %c0 = arith.constant 0 : index
    %c0_0 = arith.constant 0 : index
    %0 = vector.load %arg0[%c0, %c0_0] : memref<120x120xbf16, #tpu.memory_space<vmem>>, vector<120x120xbf16>
    %c0_1 = arith.constant 0 : index
    %c0_2 = arith.constant 0 : index
    %1 = vector.load %arg1[%c0_1, %c0_2] : memref<120x120xbf16, #tpu.memory_space<vmem>>, vector<120x120xbf16>
    %cst = arith.constant dense<0.000000e+00> : vector<120x120xf32>
    %2 = tpu.matmul %0, %1, %cst {dimension_numbers = #tpu.dot_dimension_numbers<[1], [0], [0], [1], [0, 0, 1, 1], [], []>} : vector<120x120xbf16>, vector<120x120xbf16>, vector<120x120xf32> -> vector<120x120xf32>
    %c0_3 = arith.constant 0 : index
    %c0_4 = arith.constant 0 : index
    %3 = vector.load %arg2[%c0_3, %c0_4] : memref<1x120xf32, #tpu.memory_space<vmem>>, vector<1x120xf32>
    %4 = vector.broadcast %3 : vector<1x120xf32> to vector<120x120xf32>
    %5 = arith.addf %2, %4 : vector<120x120xf32>
    %cst_5 = arith.constant 0.000000e+00 : f32
    %6 = vector.broadcast %cst_5 : f32 to vector<120x120xf32>
    %7 = arith.maximumf %5, %6 : vector<120x120xf32>
    %8 = vector.extract_strided_slice %7 {offsets = [0, 0], sizes = [80, 120], strides = [1, 1]} : vector<120x120xf32> to vector<80x120xf32>
    %9 = arith.truncf %8 : vector<80x120xf32> to vector<80x120xbf16>
    %c0_6 = arith.constant 0 : index
    %c0_7 = arith.constant 0 : index
    %c0_8 = arith.constant 0 : index
    %10 = vector.load %arg3[%c0_6, %c0_7, %c0_8] : memref<6x120x160xbf16, #tpu.memory_space<vmem>>, vector<1x120x160xbf16>
    %11 = vector.shape_cast %10 : vector<1x120x160xbf16> to vector<120x160xbf16>
    %cst_9 = arith.constant dense<0.000000e+00> : vector<80x160xf32>
    %12 = tpu.matmul %9, %11, %cst_9 {dimension_numbers = #tpu.dot_dimension_numbers<[1], [0], [0], [1], [0, 0, 1, 1], [], []>} : vector<80x120xbf16>, vector<120x160xbf16>, vector<80x160xf32> -> vector<80x160xf32>
    %13 = vector.extract_strided_slice %7 {offsets = [8, 0], sizes = [80, 120], strides = [1, 1]} : vector<120x120xf32> to vector<80x120xf32>
    %14 = arith.truncf %13 : vector<80x120xf32> to vector<80x120xbf16>
    %c1 = arith.constant 1 : index
    %c0_10 = arith.constant 0 : index
    %c0_11 = arith.constant 0 : index
    %15 = vector.load %arg3[%c1, %c0_10, %c0_11] : memref<6x120x160xbf16, #tpu.memory_space<vmem>>, vector<1x120x160xbf16>
    %16 = vector.shape_cast %15 : vector<1x120x160xbf16> to vector<120x160xbf16>
    %cst_12 = arith.constant dense<0.000000e+00> : vector<80x160xf32>
    %17 = tpu.matmul %14, %16, %cst_12 {dimension_numbers = #tpu.dot_dimension_numbers<[1], [0], [0], [1], [0, 0, 1, 1], [], []>} : vector<80x120xbf16>, vector<120x160xbf16>, vector<80x160xf32> -> vector<80x160xf32>
    %18 = arith.addf %12, %17 : vector<80x160xf32>
    %19 = vector.extract_strided_slice %7 {offsets = [16, 0], sizes = [80, 120], strides = [1, 1]} : vector<120x120xf32> to vector<80x120xf32>
    %20 = arith.truncf %19 : vector<80x120xf32> to vector<80x120xbf16>
    %c2 = arith.constant 2 : index
    %c0_13 = arith.constant 0 : index
    %c0_14 = arith.constant 0 : index
    %21 = vector.load %arg3[%c2, %c0_13, %c0_14] : memref<6x120x160xbf16, #tpu.memory_space<vmem>>, vector<1x120x160xbf16>
    %22 = vector.shape_cast %21 : vector<1x120x160xbf16> to vector<120x160xbf16>
    %cst_15 = arith.constant dense<0.000000e+00> : vector<80x160xf32>
    %23 = tpu.matmul %20, %22, %cst_15 {dimension_numbers = #tpu.dot_dimension_numbers<[1], [0], [0], [1], [0, 0, 1, 1], [], []>} : vector<80x120xbf16>, vector<120x160xbf16>, vector<80x160xf32> -> vector<80x160xf32>
    %24 = arith.addf %18, %23 : vector<80x160xf32>
    %25 = vector.extract_strided_slice %7 {offsets = [24, 0], sizes = [80, 120], strides = [1, 1]} : vector<120x120xf32> to vector<80x120xf32>
    %26 = arith.truncf %25 : vector<80x120xf32> to vector<80x120xbf16>
    %c3 = arith.constant 3 : index
    %c0_16 = arith.constant 0 : index
    %c0_17 = arith.constant 0 : index
    %27 = vector.load %arg3[%c3, %c0_16, %c0_17] : memref<6x120x160xbf16, #tpu.memory_space<vmem>>, vector<1x120x160xbf16>
    %28 = vector.shape_cast %27 : vector<1x120x160xbf16> to vector<120x160xbf16>
    %cst_18 = arith.constant dense<0.000000e+00> : vector<80x160xf32>
    %29 = tpu.matmul %26, %28, %cst_18 {dimension_numbers = #tpu.dot_dimension_numbers<[1], [0], [0], [1], [0, 0, 1, 1], [], []>} : vector<80x120xbf16>, vector<120x160xbf16>, vector<80x160xf32> -> vector<80x160xf32>
    %30 = arith.addf %24, %29 : vector<80x160xf32>
    %31 = vector.extract_strided_slice %7 {offsets = [32, 0], sizes = [80, 120], strides = [1, 1]} : vector<120x120xf32> to vector<80x120xf32>
    %32 = arith.truncf %31 : vector<80x120xf32> to vector<80x120xbf16>
    %c4 = arith.constant 4 : index
    %c0_19 = arith.constant 0 : index
    %c0_20 = arith.constant 0 : index
    %33 = vector.load %arg3[%c4, %c0_19, %c0_20] : memref<6x120x160xbf16, #tpu.memory_space<vmem>>, vector<1x120x160xbf16>
    %34 = vector.shape_cast %33 : vector<1x120x160xbf16> to vector<120x160xbf16>
    %cst_21 = arith.constant dense<0.000000e+00> : vector<80x160xf32>
    %35 = tpu.matmul %32, %34, %cst_21 {dimension_numbers = #tpu.dot_dimension_numbers<[1], [0], [0], [1], [0, 0, 1, 1], [], []>} : vector<80x120xbf16>, vector<120x160xbf16>, vector<80x160xf32> -> vector<80x160xf32>
    %36 = arith.addf %30, %35 : vector<80x160xf32>
    %37 = vector.extract_strided_slice %7 {offsets = [40, 0], sizes = [80, 120], strides = [1, 1]} : vector<120x120xf32> to vector<80x120xf32>
    %38 = arith.truncf %37 : vector<80x120xf32> to vector<80x120xbf16>
    %c5 = arith.constant 5 : index
    %c0_22 = arith.constant 0 : index
    %c0_23 = arith.constant 0 : index
    %39 = vector.load %arg3[%c5, %c0_22, %c0_23] : memref<6x120x160xbf16, #tpu.memory_space<vmem>>, vector<1x120x160xbf16>
    %40 = vector.shape_cast %39 : vector<1x120x160xbf16> to vector<120x160xbf16>
    %cst_24 = arith.constant dense<0.000000e+00> : vector<80x160xf32>
    %41 = tpu.matmul %38, %40, %cst_24 {dimension_numbers = #tpu.dot_dimension_numbers<[1], [0], [0], [1], [0, 0, 1, 1], [], []>} : vector<80x120xbf16>, vector<120x160xbf16>, vector<80x160xf32> -> vector<80x160xf32>
    %42 = arith.addf %36, %41 : vector<80x160xf32>
    %c0_25 = arith.constant 0 : index
    %c0_26 = arith.constant 0 : index
    %43 = vector.load %arg4[%c0_25, %c0_26] : memref<1x160xf32, #tpu.memory_space<vmem>>, vector<1x160xf32>
    %44 = vector.broadcast %43 : vector<1x160xf32> to vector<80x160xf32>
    %45 = arith.addf %42, %44 : vector<80x160xf32>
    %cst_27 = arith.constant 0.000000e+00 : f32
    %46 = vector.broadcast %cst_27 : f32 to vector<80x160xf32>
    %47 = arith.maximumf %45, %46 : vector<80x160xf32>
    %48 = vector.extract_strided_slice %47 {offsets = [0, 0], sizes = [48, 160], strides = [1, 1]} : vector<80x160xf32> to vector<48x160xf32>
    %49 = arith.truncf %48 : vector<48x160xf32> to vector<48x160xbf16>
    %c0_28 = arith.constant 0 : index
    %c0_29 = arith.constant 0 : index
    %c0_30 = arith.constant 0 : index
    %50 = vector.load %arg5[%c0_28, %c0_29, %c0_30] : memref<5x160x256xbf16, #tpu.memory_space<vmem>>, vector<1x160x256xbf16>
    %51 = vector.shape_cast %50 : vector<1x160x256xbf16> to vector<160x256xbf16>
    %cst_31 = arith.constant dense<0.000000e+00> : vector<48x256xf32>
    %52 = tpu.matmul %49, %51, %cst_31 {dimension_numbers = #tpu.dot_dimension_numbers<[1], [0], [0], [1], [0, 0, 1, 1], [], []>} : vector<48x160xbf16>, vector<160x256xbf16>, vector<48x256xf32> -> vector<48x256xf32>
    %53 = vector.extract_strided_slice %47 {offsets = [8, 0], sizes = [48, 160], strides = [1, 1]} : vector<80x160xf32> to vector<48x160xf32>
    %54 = arith.truncf %53 : vector<48x160xf32> to vector<48x160xbf16>
    %c1_32 = arith.constant 1 : index
    %c0_33 = arith.constant 0 : index
    %c0_34 = arith.constant 0 : index
    %55 = vector.load %arg5[%c1_32, %c0_33, %c0_34] : memref<5x160x256xbf16, #tpu.memory_space<vmem>>, vector<1x160x256xbf16>
    %56 = vector.shape_cast %55 : vector<1x160x256xbf16> to vector<160x256xbf16>
    %cst_35 = arith.constant dense<0.000000e+00> : vector<48x256xf32>
    %57 = tpu.matmul %54, %56, %cst_35 {dimension_numbers = #tpu.dot_dimension_numbers<[1], [0], [0], [1], [0, 0, 1, 1], [], []>} : vector<48x160xbf16>, vector<160x256xbf16>, vector<48x256xf32> -> vector<48x256xf32>
    %58 = arith.addf %52, %57 : vector<48x256xf32>
    %59 = vector.extract_strided_slice %47 {offsets = [16, 0], sizes = [48, 160], strides = [1, 1]} : vector<80x160xf32> to vector<48x160xf32>
    %60 = arith.truncf %59 : vector<48x160xf32> to vector<48x160xbf16>
    %c2_36 = arith.constant 2 : index
    %c0_37 = arith.constant 0 : index
    %c0_38 = arith.constant 0 : index
    %61 = vector.load %arg5[%c2_36, %c0_37, %c0_38] : memref<5x160x256xbf16, #tpu.memory_space<vmem>>, vector<1x160x256xbf16>
    %62 = vector.shape_cast %61 : vector<1x160x256xbf16> to vector<160x256xbf16>
    %cst_39 = arith.constant dense<0.000000e+00> : vector<48x256xf32>
    %63 = tpu.matmul %60, %62, %cst_39 {dimension_numbers = #tpu.dot_dimension_numbers<[1], [0], [0], [1], [0, 0, 1, 1], [], []>} : vector<48x160xbf16>, vector<160x256xbf16>, vector<48x256xf32> -> vector<48x256xf32>
    %64 = arith.addf %58, %63 : vector<48x256xf32>
    %65 = vector.extract_strided_slice %47 {offsets = [24, 0], sizes = [48, 160], strides = [1, 1]} : vector<80x160xf32> to vector<48x160xf32>
    %66 = arith.truncf %65 : vector<48x160xf32> to vector<48x160xbf16>
    %c3_40 = arith.constant 3 : index
    %c0_41 = arith.constant 0 : index
    %c0_42 = arith.constant 0 : index
    %67 = vector.load %arg5[%c3_40, %c0_41, %c0_42] : memref<5x160x256xbf16, #tpu.memory_space<vmem>>, vector<1x160x256xbf16>
    %68 = vector.shape_cast %67 : vector<1x160x256xbf16> to vector<160x256xbf16>
    %cst_43 = arith.constant dense<0.000000e+00> : vector<48x256xf32>
    %69 = tpu.matmul %66, %68, %cst_43 {dimension_numbers = #tpu.dot_dimension_numbers<[1], [0], [0], [1], [0, 0, 1, 1], [], []>} : vector<48x160xbf16>, vector<160x256xbf16>, vector<48x256xf32> -> vector<48x256xf32>
    %70 = arith.addf %64, %69 : vector<48x256xf32>
    %71 = vector.extract_strided_slice %47 {offsets = [32, 0], sizes = [48, 160], strides = [1, 1]} : vector<80x160xf32> to vector<48x160xf32>
    %72 = arith.truncf %71 : vector<48x160xf32> to vector<48x160xbf16>
    %c4_44 = arith.constant 4 : index
    %c0_45 = arith.constant 0 : index
    %c0_46 = arith.constant 0 : index
    %73 = vector.load %arg5[%c4_44, %c0_45, %c0_46] : memref<5x160x256xbf16, #tpu.memory_space<vmem>>, vector<1x160x256xbf16>
    %74 = vector.shape_cast %73 : vector<1x160x256xbf16> to vector<160x256xbf16>
    %cst_47 = arith.constant dense<0.000000e+00> : vector<48x256xf32>
    %75 = tpu.matmul %72, %74, %cst_47 {dimension_numbers = #tpu.dot_dimension_numbers<[1], [0], [0], [1], [0, 0, 1, 1], [], []>} : vector<48x160xbf16>, vector<160x256xbf16>, vector<48x256xf32> -> vector<48x256xf32>
    %76 = arith.addf %70, %75 : vector<48x256xf32>
    %c0_48 = arith.constant 0 : index
    %c0_49 = arith.constant 0 : index
    %77 = vector.load %arg6[%c0_48, %c0_49] : memref<1x256xf32, #tpu.memory_space<vmem>>, vector<1x256xf32>
    %78 = vector.broadcast %77 : vector<1x256xf32> to vector<48x256xf32>
    %79 = arith.addf %76, %78 : vector<48x256xf32>
    %cst_50 = arith.constant 0.000000e+00 : f32
    %80 = vector.broadcast %cst_50 : f32 to vector<48x256xf32>
    %81 = arith.maximumf %79, %80 : vector<48x256xf32>
    %82 = vector.extract_strided_slice %81 {offsets = [0, 0], sizes = [8, 256], strides = [1, 1]} : vector<48x256xf32> to vector<8x256xf32>
    %83 = arith.truncf %82 : vector<8x256xf32> to vector<8x256xbf16>
    %c0_51 = arith.constant 0 : index
    %c0_52 = arith.constant 0 : index
    %84 = vector.load %arg10[%c0_51, %c0_52] : memref<8x1536xbf16, #tpu.memory_space<vmem>>, vector<8x256xbf16>
    tpu.vector_store %arg10[%c0_51, %c0_52], %83 {strides = array<i32>} : memref<8x1536xbf16, #tpu.memory_space<vmem>>, vector<8x256xbf16>,
    %85 = vector.extract_strided_slice %81 {offsets = [8, 0], sizes = [8, 256], strides = [1, 1]} : vector<48x256xf32> to vector<8x256xf32>
    %86 = arith.truncf %85 : vector<8x256xf32> to vector<8x256xbf16>
    %c0_53 = arith.constant 0 : index
    %c256 = arith.constant 256 : index
    %87 = vector.load %arg10[%c0_53, %c256] : memref<8x1536xbf16, #tpu.memory_space<vmem>>, vector<8x256xbf16>
    tpu.vector_store %arg10[%c0_53, %c256], %86 {strides = array<i32>} : memref<8x1536xbf16, #tpu.memory_space<vmem>>, vector<8x256xbf16>,
    %88 = vector.extract_strided_slice %81 {offsets = [16, 0], sizes = [8, 256], strides = [1, 1]} : vector<48x256xf32> to vector<8x256xf32>
    %89 = arith.truncf %88 : vector<8x256xf32> to vector<8x256xbf16>
    %c0_54 = arith.constant 0 : index
    %c512 = arith.constant 512 : index
    %90 = vector.load %arg10[%c0_54, %c512] : memref<8x1536xbf16, #tpu.memory_space<vmem>>, vector<8x256xbf16>
    tpu.vector_store %arg10[%c0_54, %c512], %89 {strides = array<i32>} : memref<8x1536xbf16, #tpu.memory_space<vmem>>, vector<8x256xbf16>,
    %91 = vector.extract_strided_slice %81 {offsets = [24, 0], sizes = [8, 256], strides = [1, 1]} : vector<48x256xf32> to vector<8x256xf32>
    %92 = arith.truncf %91 : vector<8x256xf32> to vector<8x256xbf16>
    %c0_55 = arith.constant 0 : index
    %c768 = arith.constant 768 : index
    %93 = vector.load %arg10[%c0_55, %c768] : memref<8x1536xbf16, #tpu.memory_space<vmem>>, vector<8x256xbf16>
    tpu.vector_store %arg10[%c0_55, %c768], %92 {strides = array<i32>} : memref<8x1536xbf16, #tpu.memory_space<vmem>>, vector<8x256xbf16>,
    %94 = vector.extract_strided_slice %81 {offsets = [32, 0], sizes = [8, 256], strides = [1, 1]} : vector<48x256xf32> to vector<8x256xf32>
    %95 = arith.truncf %94 : vector<8x256xf32> to vector<8x256xbf16>
    %c0_56 = arith.constant 0 : index
    %c1024 = arith.constant 1024 : index
    %96 = vector.load %arg10[%c0_56, %c1024] : memref<8x1536xbf16, #tpu.memory_space<vmem>>, vector<8x256xbf16>
    tpu.vector_store %arg10[%c0_56, %c1024], %95 {strides = array<i32>} : memref<8x1536xbf16, #tpu.memory_space<vmem>>, vector<8x256xbf16>,
    %97 = vector.extract_strided_slice %81 {offsets = [40, 0], sizes = [8, 256], strides = [1, 1]} : vector<48x256xf32> to vector<8x256xf32>
    %98 = arith.truncf %97 : vector<8x256xf32> to vector<8x256xbf16>
    %c0_57 = arith.constant 0 : index
    %c1280 = arith.constant 1280 : index
    %99 = vector.load %arg10[%c0_57, %c1280] : memref<8x1536xbf16, #tpu.memory_space<vmem>>, vector<8x256xbf16>
    tpu.vector_store %arg10[%c0_57, %c1280], %98 {strides = array<i32>} : memref<8x1536xbf16, #tpu.memory_space<vmem>>, vector<8x256xbf16>,
    %c0_58 = arith.constant 0 : index
    %c0_59 = arith.constant 0 : index
    %100 = vector.load %arg10[%c0_58, %c0_59] : memref<8x1536xbf16, #tpu.memory_space<vmem>>, vector<8x1536xbf16>
    %c0_60 = arith.constant 0 : index
    %c0_61 = arith.constant 0 : index
    %101 = vector.load %arg7[%c0_60, %c0_61] : memref<1536x32xbf16, #tpu.memory_space<vmem>>, vector<1536x32xbf16>
    %cst_62 = arith.constant dense<0.000000e+00> : vector<8x32xf32>
    %102 = tpu.matmul %100, %101, %cst_62 {dimension_numbers = #tpu.dot_dimension_numbers<[1], [0], [0], [1], [0, 0, 1, 1], [], []>} : vector<8x1536xbf16>, vector<1536x32xbf16>, vector<8x32xf32> -> vector<8x32xf32>
    %c0_63 = arith.constant 0 : index
    %c0_64 = arith.constant 0 : index
    %103 = vector.load %arg8[%c0_63, %c0_64] : memref<1x32xf32, #tpu.memory_space<vmem>>, vector<1x32xf32>
    %104 = vector.broadcast %103 : vector<1x32xf32> to vector<8x32xf32>
    %105 = arith.addf %102, %104 : vector<8x32xf32>
    %c0_65 = arith.constant 0 : index
    %c0_66 = arith.constant 0 : index
    %106 = vector.load %arg9[%c0_65, %c0_66] : memref<8x32xf32, #tpu.memory_space<vmem>>, vector<8x32xf32>
    tpu.vector_store %arg9[%c0_65, %c0_66], %105 {strides = array<i32>} : memref<8x32xf32, #tpu.memory_space<vmem>>, vector<8x32xf32>,
    return
  }
}

</mosaic_0001>

<llo_original>
// kernel: cnn_forward.1
$region0: #{cnn_forward.1}
  #allocation0 [shape = 'u32[]', space=smem, size = 0x4, offset = 0x4, fixed_abs, tag = 'smem constant byte address 0x4 - core index']
  #allocation1 [shape = 'u32[144,128]{1,0:T(1,128)}', space=vmem, size = 0x12000, scoped, tag = 'internal scratch']
  #allocation2 [shape = 'bf16[8,1536]{1,0:T(8,128)(2,1)}', space=vmem, size = 0x6000, scoped, tag = 'scratch operand']
  %s0 = inlined_call_operand.vmem [shape: bf16[120,120], index: 0, kind: input, shape index: {}]
  %s1 = inlined_call_operand.vmem [shape: bf16[120,120], index: 1, kind: input, shape index: {}]
  %s2 = inlined_call_operand.vmem [shape: f32[1,120], index: 2, kind: input, shape index: {}]
  %s3 = inlined_call_operand.vmem [shape: bf16[6,120,160], index: 3, kind: input, shape index: {}]
  %s4 = inlined_call_operand.vmem [shape: f32[1,160], index: 4, kind: input, shape index: {}]
  %s5 = inlined_call_operand.vmem [shape: bf16[5,160,256], index: 5, kind: input, shape index: {}]
  %s6 = inlined_call_operand.vmem [shape: f32[1,256], index: 6, kind: input, shape index: {}]
  %s7 = inlined_call_operand.vmem [shape: bf16[1536,32], index: 7, kind: input, shape index: {}]
  %s8 = inlined_call_operand.vmem [shape: f32[1,32], index: 8, kind: input, shape index: {}]
  %s9 = inlined_call_operand.vmem [shape: f32[8,32], index: 9, kind: output, shape index: {}]
  %s10 = sld [smem:[#allocation0]]
  $region46: #{cnn_forward.1} parent=0
    _
  %s12 = ssub.s32 1, %s10
  %s13 = scalar_select 0, %s12, %s10
  // Predicated region
  $region2: #{cnn_forward.1} parent=0 // pred_check
    _
  $region3: #{cnn_forward.1} parent=0 // pred_check_branch
    %15 = sbr.rel (0) target = $region5
  $region4: #{cnn_forward.1} parent=0 // pred_region
    _
  $region5: #{cnn_forward.1} parent=0 // pred_fallthru
    _
  // Predicated region
  $region6: #{cnn_forward.1} parent=0 // pred_check
    _
  $region7: #{cnn_forward.1} parent=0 // pred_check_branch
    %17 = sbr.rel (0) target = $region9
  $region8: #{cnn_forward.1} parent=0 // pred_region
    _
  $region9: #{cnn_forward.1} parent=0 // pred_fallthru
    _
  // Predicated region
  $region10: #{cnn_forward.1} parent=0 // pred_check
    _
  $region11: #{cnn_forward.1} parent=0 // pred_check_branch
    %19 = sbr.rel (0) target = $region13
  $region12: #{cnn_forward.1} parent=0 // pred_region
    _
  $region13: #{cnn_forward.1} parent=0 // pred_fallthru
    _
  // Predicated region
  $region14: #{cnn_forward.1} parent=0 // pred_check
    _
  $region15: #{cnn_forward.1} parent=0 // pred_check_branch
    %21 = sbr.rel (0) target = $region17
  $region16: #{cnn_forward.1} parent=0 // pred_region
    _
  $region17: #{cnn_forward.1} parent=0 // pred_fallthru
    _
  // Predicated region
  $region18: #{cnn_forward.1} parent=0 // pred_check
    _
  $region19: #{cnn_forward.1} parent=0 // pred_check_branch
    %23 = sbr.rel (0) target = $region21
  $region20: #{cnn_forward.1} parent=0 // pred_region
    _
  $region21: #{cnn_forward.1} parent=0 // pred_fallthru
    _
  // Predicated region
  $region22: #{cnn_forward.1} parent=0 // pred_check
    _
  $region23: #{cnn_forward.1} parent=0 // pred_check_branch
    %25 = sbr.rel (0) target = $region25
  $region24: #{cnn_forward.1} parent=0 // pred_region
    _
  $region25: #{cnn_forward.1} parent=0 // pred_fallthru
    _
  // Predicated region
  $region26: #{cnn_forward.1} parent=0 // pred_check
    _
  $region27: #{cnn_forward.1} parent=0 // pred_check_branch
    %27 = sbr.rel (0) target = $region29
  $region28: #{cnn_forward.1} parent=0 // pred_region
    _
  $region29: #{cnn_forward.1} parent=0 // pred_fallthru
    _
  // Predicated region
  $region30: #{cnn_forward.1} parent=0 // pred_check
    _
  $region31: #{cnn_forward.1} parent=0 // pred_check_branch
    %29 = sbr.rel (0) target = $region33
  $region32: #{cnn_forward.1} parent=0 // pred_region
    _
  $region33: #{cnn_forward.1} parent=0 // pred_fallthru
    _
  // Predicated region
  $region34: #{cnn_forward.1} parent=0 // pred_check
    _
  $region35: #{cnn_forward.1} parent=0 // pred_check_branch
    %31 = sbr.rel (0) target = $region37
  $region36: #{cnn_forward.1} parent=0 // pred_region
    _
  $region37: #{cnn_forward.1} parent=0 // pred_fallthru
    _
  %v33 = vld [vmem:[%s0] sm:$0xf]
  %v34 = vld [vmem:[%s0 + $0x4] sm:$0xf]
  %v35 = vld [vmem:[%s0 + $0x8] sm:$0xf]
  %v36 = vld [vmem:[%s0 + $0xc] sm:$0xf]
  %v37 = vld [vmem:[%s0 + $0x10] sm:$0xf]
  %v38 = vld [vmem:[%s0 + $0x14] sm:$0xf]
  %v39 = vld [vmem:[%s0 + $0x18] sm:$0xf]
  %v40 = vld [vmem:[%s0 + $0x1c] sm:$0xf]
  %v41 = vld [vmem:[%s0 + $0x20] sm:$0xf]
  %v42 = vld [vmem:[%s0 + $0x24] sm:$0xf]
  %v43 = vld [vmem:[%s0 + $0x28] sm:$0xf]
  %v44 = vld [vmem:[%s0 + $0x2c] sm:$0xf]
  %v45 = vld [vmem:[%s0 + $0x30] sm:$0xf]
  %v46 = vld [vmem:[%s0 + $0x34] sm:$0xf]
  %v47 = vld [vmem:[%s0 + $0x38] sm:$0xf]
  %v48 = vld [vmem:[%s1] sm:$0xf]
  %v49 = vld [vmem:[%s1 + $0x4] sm:$0xf]
  %v50 = vld [vmem:[%s1 + $0x8] sm:$0xf]
  %v51 = vld [vmem:[%s1 + $0xc] sm:$0xf]
  %v52 = vld [vmem:[%s1 + $0x10] sm:$0xf]
  %v53 = vld [vmem:[%s1 + $0x14] sm:$0xf]
  %v54 = vld [vmem:[%s1 + $0x18] sm:$0xf]
  %v55 = vld [vmem:[%s1 + $0x1c] sm:$0xf]
  %v56 = vld [vmem:[%s1 + $0x20] sm:$0xf]
  %v57 = vld [vmem:[%s1 + $0x24] sm:$0xf]
  %v58 = vld [vmem:[%s1 + $0x28] sm:$0xf]
  %v59 = vld [vmem:[%s1 + $0x2c] sm:$0xf]
  %v60 = vld [vmem:[%s1 + $0x30] sm:$0xf]
  %v61 = vld [vmem:[%s1 + $0x34] sm:$0xf]
  %v62 = vld [vmem:[%s1 + $0x38] sm:$0xf]
  %v63 = vld [vmem:[%s2] sm:$0x1]
  %v65 = vlaneseq
  %v66 = vshrl.u32 %v65, 7
  %v67 = vsub.s32 0, %v66
  %v68 = vrot.slane %v63, %v67
  %v85 = vunpack.c.l.b16 %v33
  %v86 = vunpack.c.l.b16 %v34
  %v87 = vunpack.c.l.b16 %v35
  %v88 = vunpack.c.l.b16 %v36
  %v89 = vunpack.c.l.b16 %v37
  %v90 = vunpack.c.l.b16 %v38
  %v91 = vunpack.c.l.b16 %v39
  %v92 = vunpack.c.l.b16 %v40
  %v93 = vunpack.c.l.b16 %v41
  %v94 = vunpack.c.l.b16 %v42
  %v95 = vunpack.c.l.b16 %v43
  %v96 = vunpack.c.l.b16 %v44
  %v97 = vunpack.c.l.b16 %v45
  %v98 = vunpack.c.l.b16 %v46
  %v99 = vunpack.c.l.b16 %v47
  %v100 = vpack.c.b16 %v86, %v85
  %v101 = vpack.c.b16 %v88, %v87
  %v102 = vpack.c.b16 %v90, %v89
  %v103 = vpack.c.b16 %v92, %v91
  %v104 = vpack.c.b16 %v94, %v93
  %v105 = vpack.c.b16 %v96, %v95
  %v106 = vpack.c.b16 %v98, %v97
  %v107 = vpack.c.b16 %v99, %v99
  %v123 = vunpack.c.l.b16 %v48
  %v124 = vunpack.c.l.b16 %v49
  %v125 = vunpack.c.l.b16 %v50
  %v126 = vunpack.c.l.b16 %v51
  %v127 = vunpack.c.l.b16 %v52
  %v128 = vunpack.c.l.b16 %v53
  %v129 = vunpack.c.l.b16 %v54
  %v130 = vunpack.c.l.b16 %v55
  %v131 = vunpack.c.l.b16 %v56
  %v132 = vunpack.c.l.b16 %v57
  %v133 = vunpack.c.l.b16 %v58
  %v134 = vunpack.c.l.b16 %v59
  %v135 = vunpack.c.l.b16 %v60
  %v136 = vunpack.c.l.b16 %v61
  %v137 = vunpack.c.l.b16 %v62
  %v138 = vpack.c.b16 %v124, %v123
  %v139 = vpack.c.b16 %v126, %v125
  %v140 = vpack.c.b16 %v128, %v127
  %v141 = vpack.c.b16 %v130, %v129
  %v142 = vpack.c.b16 %v132, %v131
  %v143 = vpack.c.b16 %v134, %v133
  %v144 = vpack.c.b16 %v136, %v135
  %v145 = vpack.c.b16 %v137, %v137
  %vm153 = vcmask 982016
  %v155 = vsel %vm153, %v100, 0
  %v158 = vsel %vm153, %v101, 0
  %v161 = vsel %vm153, %v102, 0
  %v164 = vsel %vm153, %v103, 0
  %v167 = vsel %vm153, %v104, 0
  %v170 = vsel %vm153, %v105, 0
  %v173 = vsel %vm153, %v106, 0
  %v176 = vsel %vm153, %v107, 0
  %vm178 = vcmask 1043456
  %v180 = vsel %vm178, %v145, 0
  %182 = vmatprep.subr.bf16.mxu0 0
  %183 = vmatpush1.bf16.msra.mxu0 %v138
  %184 = vmatprep.subr.bf16.mxu0 0
  %185 = vmatpush1.bf16.msra.mxu0 %v139
  %186 = vmatprep.subr.bf16.mxu0 0
  %187 = vmatpush1.bf16.msra.mxu0 %v140
  %188 = vmatprep.subr.bf16.mxu0 0
  %189 = vmatpush1.bf16.msra.mxu0 %v141
  %190 = vmatprep.subr.bf16.mxu0 0
  %191 = vmatpush1.bf16.msra.mxu0 %v142
  %192 = vmatprep.subr.bf16.mxu0 0
  %193 = vmatpush1.bf16.msra.mxu0 %v143
  %194 = vmatprep.subr.bf16.mxu0 0
  %195 = vmatpush1.bf16.msra.mxu0 %v144
  %196 = vmatprep.subr.bf16.mxu0 0
  %197 = vmatpush1.bf16.msra.mxu0 %v180
  %198 = vmatprep.subr.bf16.mxu0 0
  %199 = vmatpush1.bf16.msra.mxu0 0
  %200 = vmatprep.subr.bf16.mxu0 0
  %201 = vmatpush1.bf16.msra.mxu0 0
  %202 = vmatprep.subr.bf16.mxu0 0
  %203 = vmatpush1.bf16.msra.mxu0 0
  %204 = vmatprep.subr.bf16.mxu0 0
  %205 = vmatpush1.bf16.msra.mxu0 0
  %206 = vmatprep.subr.bf16.mxu0 0
  %207 = vmatpush1.bf16.msra.mxu0 0
  %208 = vmatprep.subr.bf16.mxu0 0
  %209 = vmatpush1.bf16.msra.mxu0 0
  %210 = vmatprep.subr.bf16.mxu0 0
  %211 = vmatpush1.bf16.msra.mxu0 0
  %212 = vmatprep.subr.bf16.mxu0 0
  %213 = vmatpush1.bf16.msra.mxu0 0
  %214 = vmatprep.mubr.bf16.mxu0 0
  %215 = vmatmul.mubr.bf16.gmra.mrb[0].mxu0 %v155
  %v216 = vpop.f32.mrb[0].mxu0
  %v217 = vadd.f32 %v68, %v216
  %v218 = vpop.f32.mrb[0].mxu0
  %v219 = vpop.f32.mrb[0].mxu0
  %v220 = vadd.f32 %v68, %v219
  %v221 = vpop.f32.mrb[0].mxu0
  %222 = vmatprep.mubr.bf16.mxu0 0
  %223 = vmatmul.mubr.bf16.gmra.mrb[0].mxu0 %v158
  %v224 = vpop.f32.mrb[0].mxu0
  %v225 = vadd.f32 %v68, %v224
  %v226 = vpop.f32.mrb[0].mxu0
  %v227 = vpop.f32.mrb[0].mxu0
  %v228 = vadd.f32 %v68, %v227
  %v229 = vpop.f32.mrb[0].mxu0
  %230 = vmatprep.mubr.bf16.mxu0 0
  %231 = vmatmul.mubr.bf16.gmra.mrb[0].mxu0 %v161
  %v232 = vpop.f32.mrb[0].mxu0
  %v233 = vadd.f32 %v68, %v232
  %v234 = vpop.f32.mrb[0].mxu0
  %v235 = vpop.f32.mrb[0].mxu0
  %v236 = vadd.f32 %v68, %v235
  %v237 = vpop.f32.mrb[0].mxu0
  %238 = vmatprep.mubr.bf16.mxu0 0
  %239 = vmatmul.mubr.bf16.gmra.mrb[0].mxu0 %v164
  %v240 = vpop.f32.mrb[0].mxu0
  %v241 = vadd.f32 %v68, %v240
  %v242 = vpop.f32.mrb[0].mxu0
  %v243 = vpop.f32.mrb[0].mxu0
  %v244 = vadd.f32 %v68, %v243
  %v245 = vpop.f32.mrb[0].mxu0
  %246 = vmatprep.mubr.bf16.mxu0 0
  %247 = vmatmul.mubr.bf16.gmra.mrb[0].mxu0 %v167
  %v248 = vpop.f32.mrb[0].mxu0
  %v249 = vadd.f32 %v68, %v248
  %v250 = vpop.f32.mrb[0].mxu0
  %v251 = vpop.f32.mrb[0].mxu0
  %v252 = vadd.f32 %v68, %v251
  %v253 = vpop.f32.mrb[0].mxu0
  %254 = vmatprep.mubr.bf16.mxu0 0
  %255 = vmatmul.mubr.bf16.gmra.mrb[0].mxu0 %v170
  %v256 = vpop.f32.mrb[0].mxu0
  %v257 = vadd.f32 %v68, %v256
  %v258 = vpop.f32.mrb[0].mxu0
  %v259 = vpop.f32.mrb[0].mxu0
  %v260 = vadd.f32 %v68, %v259
  %v261 = vpop.f32.mrb[0].mxu0
  %262 = vmatprep.mubr.bf16.mxu0 0
  %263 = vmatmul.mubr.bf16.gmra.mrb[0].mxu0 %v173
  %v264 = vpop.f32.mrb[0].mxu0
  %v265 = vadd.f32 %v68, %v264
  %v266 = vpop.f32.mrb[0].mxu0
  %v267 = vpop.f32.mrb[0].mxu0
  %v268 = vadd.f32 %v68, %v267
  %v269 = vpop.f32.mrb[0].mxu0
  %270 = vmatprep.mubr.bf16.mxu0 0
  %271 = vmatmul.mubr.bf16.gmra.mrb[0].mxu0 %v176
  %v272 = vpop.f32.mrb[0].mxu0
  %v273 = vadd.f32 %v68, %v272
  %v274 = vpop.f32.mrb[0].mxu0
  %v275 = vpop.f32.mrb[0].mxu0
  %v276 = vpop.f32.mrb[0].mxu0
  %277 = vdwg.mxu0
  %v278 = vmax.f32 %v217, 0.0
  %v279 = vmax.f32 %v220, 0.0
  %v280 = vmax.f32 %v225, 0.0
  %v281 = vmax.f32 %v228, 0.0
  %v282 = vmax.f32 %v233, 0.0
  %v283 = vmax.f32 %v236, 0.0
  %v284 = vmax.f32 %v241, 0.0
  %v285 = vmax.f32 %v244, 0.0
  %v286 = vmax.f32 %v249, 0.0
  %v287 = vmax.f32 %v252, 0.0
  %v288 = vmax.f32 %v257, 0.0
  %v289 = vmax.f32 %v260, 0.0
  %v290 = vmax.f32 %v265, 0.0
  %v291 = vmax.f32 %v268, 0.0
  %v292 = vmax.f32 %v273, 0.0
  %v293 = vpack.c.bf16 %v279, %v278
  %v294 = vpack.c.bf16 %v281, %v280
  %v295 = vpack.c.bf16 %v283, %v282
  %v296 = vpack.c.bf16 %v285, %v284
  %v297 = vpack.c.bf16 %v287, %v286
  %v298 = vld [vmem:[%s3] sm:$0xff]
  %v299 = vld [vmem:[%s3 + $0x8] sm:$0xff]
  %v300 = vld [vmem:[%s3 + $0x10] sm:$0xff]
  %v301 = vld [vmem:[%s3 + $0x18] sm:$0xff]
  %v302 = vld [vmem:[%s3 + $0x20] sm:$0xff]
  %v303 = vld [vmem:[%s3 + $0x28] sm:$0xff]
  %v304 = vld [vmem:[%s3 + $0x30] sm:$0xff]
  %v305 = vld [vmem:[%s3 + $0x38] sm:$0xff]
  %v306 = vld [vmem:[%s3 + $0x40] sm:$0xff]
  %v307 = vld [vmem:[%s3 + $0x48] sm:$0xff]
  %v308 = vld [vmem:[%s3 + $0x50] sm:$0xff]
  %v309 = vld [vmem:[%s3 + $0x58] sm:$0xff]
  %v310 = vld [vmem:[%s3 + $0x60] sm:$0xff]
  %v311 = vld [vmem:[%s3 + $0x68] sm:$0xff]
  %v312 = vld [vmem:[%s3 + $0x70] sm:$0xff]
  %v313 = vpack.c.bf16 %v280, %v279
  %v314 = vpack.c.bf16 %v282, %v281
  %v315 = vpack.c.bf16 %v284, %v283
  %v316 = vpack.c.bf16 %v286, %v285
  %v317 = vpack.c.bf16 %v288, %v287
  %s318 = scalar_lea.vmem %s3, 120
  %v319 = vld [vmem:[%s318] sm:$0xff]
  %v320 = vld [vmem:[%s318 + $0x8] sm:$0xff]
  %v321 = vld [vmem:[%s318 + $0x10] sm:$0xff]
  %v322 = vld [vmem:[%s318 + $0x18] sm:$0xff]
  %v323 = vld [vmem:[%s318 + $0x20] sm:$0xff]
  %v324 = vld [vmem:[%s318 + $0x28] sm:$0xff]
  %v325 = vld [vmem:[%s318 + $0x30] sm:$0xff]
  %v326 = vld [vmem:[%s318 + $0x38] sm:$0xff]
  %v327 = vld [vmem:[%s318 + $0x40] sm:$0xff]
  %v328 = vld [vmem:[%s318 + $0x48] sm:$0xff]
  %v329 = vld [vmem:[%s318 + $0x50] sm:$0xff]
  %v330 = vld [vmem:[%s318 + $0x58] sm:$0xff]
  %v331 = vld [vmem:[%s318 + $0x60] sm:$0xff]
  %v332 = vld [vmem:[%s318 + $0x68] sm:$0xff]
  %v333 = vld [vmem:[%s318 + $0x70] sm:$0xff]
  %v349 = vunpack.c.l.b16 %v319
  %v350 = vunpack.c.h.b16 %v319
  %v351 = vunpack.c.l.b16 %v320
  %v352 = vunpack.c.h.b16 %v320
  %v353 = vunpack.c.l.b16 %v321
  %v354 = vunpack.c.h.b16 %v321
  %v355 = vunpack.c.l.b16 %v322
  %v356 = vunpack.c.h.b16 %v322
  %v357 = vunpack.c.l.b16 %v323
  %v358 = vunpack.c.h.b16 %v323
  %v359 = vunpack.c.l.b16 %v324
  %v360 = vunpack.c.h.b16 %v324
  %v361 = vunpack.c.l.b16 %v325
  %v362 = vunpack.c.h.b16 %v325
  %v363 = vunpack.c.l.b16 %v326
  %v364 = vunpack.c.h.b16 %v326
  %v365 = vunpack.c.l.b16 %v327
  %v366 = vunpack.c.h.b16 %v327
  %v367 = vunpack.c.l.b16 %v328
  %v368 = vunpack.c.h.b16 %v328
  %v369 = vunpack.c.l.b16 %v329
  %v370 = vunpack.c.h.b16 %v329
  %v371 = vunpack.c.l.b16 %v330
  %v372 = vunpack.c.h.b16 %v330
  %v373 = vunpack.c.l.b16 %v331
  %v374 = vunpack.c.h.b16 %v331
  %v375 = vunpack.c.l.b16 %v332
  %v376 = vunpack.c.h.b16 %v332
  %v377 = vunpack.c.l.b16 %v333
  %v378 = vunpack.c.h.b16 %v333
  %v379 = vpack.c.b16 %v351, %v349
  %v380 = vpack.c.b16 %v352, %v350
  %v381 = vpack.c.b16 %v355, %v353
  %v382 = vpack.c.b16 %v356, %v354
  %v383 = vpack.c.b16 %v359, %v357
  %v384 = vpack.c.b16 %v360, %v358
  %v385 = vpack.c.b16 %v363, %v361
  %v386 = vpack.c.b16 %v364, %v362
  %v387 = vpack.c.b16 %v367, %v365
  %v388 = vpack.c.b16 %v368, %v366
  %v389 = vpack.c.b16 %v371, %v369
  %v390 = vpack.c.b16 %v372, %v370
  %v391 = vpack.c.b16 %v375, %v373
  %v392 = vpack.c.b16 %v376, %v374
  %v393 = vpack.c.b16 %v377, %v377
  %v394 = vpack.c.b16 %v378, %v378
  %v410 = vsel %vm153, %v313, 0
  %v413 = vsel %vm153, %v314, 0
  %v416 = vsel %vm153, %v315, 0
  %v419 = vsel %vm153, %v316, 0
  %v422 = vsel %vm153, %v317, 0
  %v425 = vsel %vm178, %v393, 0
  %v428 = vsel %vm178, %v394, 0
  %430 = vmatprep.subr.bf16.mxu0 %v380
  %431 = vmatpush1.bf16.msra.mxu0 %v379
  %432 = vmatprep.subr.bf16.mxu0 %v382
  %433 = vmatpush1.bf16.msra.mxu0 %v381
  %434 = vmatprep.subr.bf16.mxu0 %v384
  %435 = vmatpush1.bf16.msra.mxu0 %v383
  %436 = vmatprep.subr.bf16.mxu0 %v386
  %437 = vmatpush1.bf16.msra.mxu0 %v385
  %438 = vmatprep.subr.bf16.mxu0 %v388
  %439 = vmatpush1.bf16.msra.mxu0 %v387
  %440 = vmatprep.subr.bf16.mxu0 %v390
  %441 = vmatpush1.bf16.msra.mxu0 %v389
  %442 = vmatprep.subr.bf16.mxu0 %v392
  %443 = vmatpush1.bf16.msra.mxu0 %v391
  %444 = vmatprep.subr.bf16.mxu0 %v428
  %445 = vmatpush1.bf16.msra.mxu0 %v425
  %446 = vmatprep.subr.bf16.mxu0 0
  %447 = vmatpush1.bf16.msra.mxu0 0
  %448 = vmatprep.subr.bf16.mxu0 0
  %449 = vmatpush1.bf16.msra.mxu0 0
  %450 = vmatprep.subr.bf16.mxu0 0
  %451 = vmatpush1.bf16.msra.mxu0 0
  %452 = vmatprep.subr.bf16.mxu0 0
  %453 = vmatpush1.bf16.msra.mxu0 0
  %454 = vmatprep.subr.bf16.mxu0 0
  %455 = vmatpush1.bf16.msra.mxu0 0
  %456 = vmatprep.subr.bf16.mxu0 0
  %457 = vmatpush1.bf16.msra.mxu0 0
  %458 = vmatprep.subr.bf16.mxu0 0
  %459 = vmatpush1.bf16.msra.mxu0 0
  %460 = vmatprep.subr.bf16.mxu0 0
  %461 = vmatpush1.bf16.msra.mxu0 0
  %462 = vmatprep.mubr.bf16.mxu0 0
  %463 = vmatmul.mubr.bf16.gmra.mrb[0].mxu0 %v410
  %v464 = vpop.f32.mrb[0].mxu0
  %v465 = vadd.f32 0.0, %v464
  %v466 = vpop.f32.mrb[0].mxu0
  %v467 = vadd.f32 0.0, %v466
  %v468 = vpop.f32.mrb[0].mxu0
  %v469 = vadd.f32 0.0, %v468
  %v470 = vpop.f32.mrb[0].mxu0
  %v471 = vadd.f32 0.0, %v470
  %472 = vmatprep.mubr.bf16.mxu0 0
  %473 = vmatmul.mubr.bf16.gmra.mrb[0].mxu0 %v413
  %v474 = vpop.f32.mrb[0].mxu0
  %v475 = vadd.f32 0.0, %v474
  %v476 = vpop.f32.mrb[0].mxu0
  %v477 = vadd.f32 0.0, %v476
  %v478 = vpop.f32.mrb[0].mxu0
  %v479 = vadd.f32 0.0, %v478
  %v480 = vpop.f32.mrb[0].mxu0
  %v481 = vadd.f32 0.0, %v480
  %482 = vmatprep.mubr.bf16.mxu0 0
  %483 = vmatmul.mubr.bf16.gmra.mrb[0].mxu0 %v416
  %v484 = vpop.f32.mrb[0].mxu0
  %v485 = vadd.f32 0.0, %v484
  %v486 = vpop.f32.mrb[0].mxu0
  %v487 = vadd.f32 0.0, %v486
  %v488 = vpop.f32.mrb[0].mxu0
  %v489 = vadd.f32 0.0, %v488
  %v490 = vpop.f32.mrb[0].mxu0
  %v491 = vadd.f32 0.0, %v490
  %492 = vmatprep.mubr.bf16.mxu0 0
  %493 = vmatmul.mubr.bf16.gmra.mrb[0].mxu0 %v419
  %v494 = vpop.f32.mrb[0].mxu0
  %v495 = vadd.f32 0.0, %v494
  %v496 = vpop.f32.mrb[0].mxu0
  %v497 = vadd.f32 0.0, %v496
  %v498 = vpop.f32.mrb[0].mxu0
  %v499 = vadd.f32 0.0, %v498
  %v500 = vpop.f32.mrb[0].mxu0
  %v501 = vadd.f32 0.0, %v500
  %502 = vmatprep.mubr.bf16.mxu0 0
  %503 = vmatmul.mubr.bf16.gmra.mrb[0].mxu0 %v422
  %v504 = vpop.f32.mrb[0].mxu0
  %v505 = vadd.f32 0.0, %v504
  %v506 = vpop.f32.mrb[0].mxu0
  %v507 = vadd.f32 0.0, %v506
  %v508 = vpop.f32.mrb[0].mxu0
  %v509 = vadd.f32 0.0, %v508
  %v510 = vpop.f32.mrb[0].mxu0
  %v511 = vadd.f32 0.0, %v510
  %512 = vdwg.mxu0
  %v528 = vunpack.c.l.b16 %v298
  %v529 = vunpack.c.h.b16 %v298
  %v530 = vunpack.c.l.b16 %v299
  %v531 = vunpack.c.h.b16 %v299
  %v532 = vunpack.c.l.b16 %v300
  %v533 = vunpack.c.h.b16 %v300
  %v534 = vunpack.c.l.b16 %v301
  %v535 = vunpack.c.h.b16 %v301
  %v536 = vunpack.c.l.b16 %v302
  %v537 = vunpack.c.h.b16 %v302
  %v538 = vunpack.c.l.b16 %v303
  %v539 = vunpack.c.h.b16 %v303
  %v540 = vunpack.c.l.b16 %v304
  %v541 = vunpack.c.h.b16 %v304
  %v542 = vunpack.c.l.b16 %v305
  %v543 = vunpack.c.h.b16 %v305
  %v544 = vunpack.c.l.b16 %v306
  %v545 = vunpack.c.h.b16 %v306
  %v546 = vunpack.c.l.b16 %v307
  %v547 = vunpack.c.h.b16 %v307
  %v548 = vunpack.c.l.b16 %v308
  %v549 = vunpack.c.h.b16 %v308
  %v550 = vunpack.c.l.b16 %v309
  %v551 = vunpack.c.h.b16 %v309
  %v552 = vunpack.c.l.b16 %v310
  %v553 = vunpack.c.h.b16 %v310
  %v554 = vunpack.c.l.b16 %v311
  %v555 = vunpack.c.h.b16 %v311
  %v556 = vunpack.c.l.b16 %v312
  %v557 = vunpack.c.h.b16 %v312
  %v558 = vpack.c.b16 %v530, %v528
  %v559 = vpack.c.b16 %v531, %v529
  %v560 = vpack.c.b16 %v534, %v532
  %v561 = vpack.c.b16 %v535, %v533
  %v562 = vpack.c.b16 %v538, %v536
  %v563 = vpack.c.b16 %v539, %v537
  %v564 = vpack.c.b16 %v542, %v540
  %v565 = vpack.c.b16 %v543, %v541
  %v566 = vpack.c.b16 %v546, %v544
  %v567 = vpack.c.b16 %v547, %v545
  %v568 = vpack.c.b16 %v550, %v548
  %v569 = vpack.c.b16 %v551, %v549
  %v570 = vpack.c.b16 %v554, %v552
  %v571 = vpack.c.b16 %v555, %v553
  %v572 = vpack.c.b16 %v556, %v556
  %v573 = vpack.c.b16 %v557, %v557
  %v589 = vsel %vm153, %v293, 0
  %v592 = vsel %vm153, %v294, 0
  %v595 = vsel %vm153, %v295, 0
  %v598 = vsel %vm153, %v296, 0
  %v601 = vsel %vm153, %v297, 0
  %v604 = vsel %vm178, %v572, 0
  %v607 = vsel %vm178, %v573, 0
  %609 = vmatprep.subr.bf16.mxu0 %v559
  %610 = vmatpush1.bf16.msra.mxu0 %v558
  %611 = vmatprep.subr.bf16.mxu0 %v561
  %612 = vmatpush1.bf16.msra.mxu0 %v560
  %613 = vmatprep.subr.bf16.mxu0 %v563
  %614 = vmatpush1.bf16.msra.mxu0 %v562
  %615 = vmatprep.subr.bf16.mxu0 %v565
  %616 = vmatpush1.bf16.msra.mxu0 %v564
  %617 = vmatprep.subr.bf16.mxu0 %v567
  %618 = vmatpush1.bf16.msra.mxu0 %v566
  %619 = vmatprep.subr.bf16.mxu0 %v569
  %620 = vmatpush1.bf16.msra.mxu0 %v568
  %621 = vmatprep.subr.bf16.mxu0 %v571
  %622 = vmatpush1.bf16.msra.mxu0 %v570
  %623 = vmatprep.subr.bf16.mxu0 %v607
  %624 = vmatpush1.bf16.msra.mxu0 %v604
  %625 = vmatprep.subr.bf16.mxu0 0
  %626 = vmatpush1.bf16.msra.mxu0 0
  %627 = vmatprep.subr.bf16.mxu0 0
  %628 = vmatpush1.bf16.msra.mxu0 0
  %629 = vmatprep.subr.bf16.mxu0 0
  %630 = vmatpush1.bf16.msra.mxu0 0
  %631 = vmatprep.subr.bf16.mxu0 0
  %632 = vmatpush1.bf16.msra.mxu0 0
  %633 = vmatprep.subr.bf16.mxu0 0
  %634 = vmatpush1.bf16.msra.mxu0 0
  %635 = vmatprep.subr.bf16.mxu0 0
  %636 = vmatpush1.bf16.msra.mxu0 0
  %637 = vmatprep.subr.bf16.mxu0 0
  %638 = vmatpush1.bf16.msra.mxu0 0
  %639 = vmatprep.subr.bf16.mxu0 0
  %640 = vmatpush1.bf16.msra.mxu0 0
  %641 = vmatprep.mubr.bf16.mxu0 0
  %642 = vmatmul.mubr.bf16.gmra.mrb[0].mxu0 %v589
  %v643 = vpop.f32.mrb[0].mxu0
  %v644 = vadd.f32 %v465, %v643
  %v645 = vpop.f32.mrb[0].mxu0
  %v646 = vadd.f32 %v467, %v645
  %v647 = vpop.f32.mrb[0].mxu0
  %v648 = vadd.f32 %v469, %v647
  %v649 = vpop.f32.mrb[0].mxu0
  %v650 = vadd.f32 %v471, %v649
  %651 = vmatprep.mubr.bf16.mxu0 0
  %652 = vmatmul.mubr.bf16.gmra.mrb[0].mxu0 %v592
  %v653 = vpop.f32.mrb[0].mxu0
  %v654 = vadd.f32 %v475, %v653
  %v655 = vpop.f32.mrb[0].mxu0
  %v656 = vadd.f32 %v477, %v655
  %v657 = vpop.f32.mrb[0].mxu0
  %v658 = vadd.f32 %v479, %v657
  %v659 = vpop.f32.mrb[0].mxu0
  %v660 = vadd.f32 %v481, %v659
  %661 = vmatprep.mubr.bf16.mxu0 0
  %662 = vmatmul.mubr.bf16.gmra.mrb[0].mxu0 %v595
  %v663 = vpop.f32.mrb[0].mxu0
  %v664 = vadd.f32 %v485, %v663
  %v665 = vpop.f32.mrb[0].mxu0
  %v666 = vadd.f32 %v487, %v665
  %v667 = vpop.f32.mrb[0].mxu0
  %v668 = vadd.f32 %v489, %v667
  %v669 = vpop.f32.mrb[0].mxu0
  %v670 = vadd.f32 %v491, %v669
  %671 = vmatprep.mubr.bf16.mxu0 0
  %672 = vmatmul.mubr.bf16.gmra.mrb[0].mxu0 %v598
  %v673 = vpop.f32.mrb[0].mxu0
  %v674 = vadd.f32 %v495, %v673
  %v675 = vpop.f32.mrb[0].mxu0
  %v676 = vadd.f32 %v497, %v675
  %v677 = vpop.f32.mrb[0].mxu0
  %v678 = vadd.f32 %v499, %v677
  %v679 = vpop.f32.mrb[0].mxu0
  %v680 = vadd.f32 %v501, %v679
  %681 = vmatprep.mubr.bf16.mxu0 0
  %682 = vmatmul.mubr.bf16.gmra.mrb[0].mxu0 %v601
  %v683 = vpop.f32.mrb[0].mxu0
  %v684 = vadd.f32 %v505, %v683
  %v685 = vpop.f32.mrb[0].mxu0
  %v686 = vadd.f32 %v507, %v685
  %v687 = vpop.f32.mrb[0].mxu0
  %v688 = vadd.f32 %v509, %v687
  %v689 = vpop.f32.mrb[0].mxu0
  %v690 = vadd.f32 %v511, %v689
  %691 = vdwg.mxu0
  %v692 = vpack.c.bf16 %v289, %v288
  %s693 = scalar_lea.vmem %s3, 240
  %v694 = vld [vmem:[%s693] sm:$0xff]
  %v695 = vld [vmem:[%s693 + $0x8] sm:$0xff]
  %v696 = vld [vmem:[%s693 + $0x10] sm:$0xff]
  %v697 = vld [vmem:[%s693 + $0x18] sm:$0xff]
  %v698 = vld [vmem:[%s693 + $0x20] sm:$0xff]
  %v699 = vld [vmem:[%s693 + $0x28] sm:$0xff]
  %v700 = vld [vmem:[%s693 + $0x30] sm:$0xff]
  %v701 = vld [vmem:[%s693 + $0x38] sm:$0xff]
  %v702 = vld [vmem:[%s693 + $0x40] sm:$0xff]
  %v703 = vld [vmem:[%s693 + $0x48] sm:$0xff]
  %v704 = vld [vmem:[%s693 + $0x50] sm:$0xff]
  %v705 = vld [vmem:[%s693 + $0x58] sm:$0xff]
  %v706 = vld [vmem:[%s693 + $0x60] sm:$0xff]
  %v707 = vld [vmem:[%s693 + $0x68] sm:$0xff]
  %v708 = vld [vmem:[%s693 + $0x70] sm:$0xff]
  %v724 = vunpack.c.l.b16 %v694
  %v725 = vunpack.c.h.b16 %v694
  %v726 = vunpack.c.l.b16 %v695
  %v727 = vunpack.c.h.b16 %v695
  %v728 = vunpack.c.l.b16 %v696
  %v729 = vunpack.c.h.b16 %v696
  %v730 = vunpack.c.l.b16 %v697
  %v731 = vunpack.c.h.b16 %v697
  %v732 = vunpack.c.l.b16 %v698
  %v733 = vunpack.c.h.b16 %v698
  %v734 = vunpack.c.l.b16 %v699
  %v735 = vunpack.c.h.b16 %v699
  %v736 = vunpack.c.l.b16 %v700
  %v737 = vunpack.c.h.b16 %v700
  %v738 = vunpack.c.l.b16 %v701
  %v739 = vunpack.c.h.b16 %v701
  %v740 = vunpack.c.l.b16 %v702
  %v741 = vunpack.c.h.b16 %v702
  %v742 = vunpack.c.l.b16 %v703
  %v743 = vunpack.c.h.b16 %v703
  %v744 = vunpack.c.l.b16 %v704
  %v745 = vunpack.c.h.b16 %v704
  %v746 = vunpack.c.l.b16 %v705
  %v747 = vunpack.c.h.b16 %v705
  %v748 = vunpack.c.l.b16 %v706
  %v749 = vunpack.c.h.b16 %v706
  %v750 = vunpack.c.l.b16 %v707
  %v751 = vunpack.c.h.b16 %v707
  %v752 = vunpack.c.l.b16 %v708
  %v753 = vunpack.c.h.b16 %v708
  %v754 = vpack.c.b16 %v726, %v724
  %v755 = vpack.c.b16 %v727, %v725
  %v756 = vpack.c.b16 %v730, %v728
  %v757 = vpack.c.b16 %v731, %v729
  %v758 = vpack.c.b16 %v734, %v732
  %v759 = vpack.c.b16 %v735, %v733
  %v760 = vpack.c.b16 %v738, %v736
  %v761 = vpack.c.b16 %v739, %v737
  %v762 = vpack.c.b16 %v742, %v740
  %v763 = vpack.c.b16 %v743, %v741
  %v764 = vpack.c.b16 %v746, %v744
  %v765 = vpack.c.b16 %v747, %v745
  %v766 = vpack.c.b16 %v750, %v748
  %v767 = vpack.c.b16 %v751, %v749
  %v768 = vpack.c.b16 %v752, %v752
  %v769 = vpack.c.b16 %v753, %v753
  %v785 = vsel %vm153, %v692, 0
  %v788 = vsel %vm178, %v768, 0
  %v791 = vsel %vm178, %v769, 0
  %793 = vmatprep.subr.bf16.mxu0 %v755
  %794 = vmatpush1.bf16.msra.mxu0 %v754
  %795 = vmatprep.subr.bf16.mxu0 %v757
  %796 = vmatpush1.bf16.msra.mxu0 %v756
  %797 = vmatprep.subr.bf16.mxu0 %v759
  %798 = vmatpush1.bf16.msra.mxu0 %v758
  %799 = vmatprep.subr.bf16.mxu0 %v761
  %800 = vmatpush1.bf16.msra.mxu0 %v760
  %801 = vmatprep.subr.bf16.mxu0 %v763
  %802 = vmatpush1.bf16.msra.mxu0 %v762
  %803 = vmatprep.subr.bf16.mxu0 %v765
  %804 = vmatpush1.bf16.msra.mxu0 %v764
  %805 = vmatprep.subr.bf16.mxu0 %v767
  %806 = vmatpush1.bf16.msra.mxu0 %v766
  %807 = vmatprep.subr.bf16.mxu0 %v791
  %808 = vmatpush1.bf16.msra.mxu0 %v788
  %809 = vmatprep.subr.bf16.mxu0 0
  %810 = vmatpush1.bf16.msra.mxu0 0
  %811 = vmatprep.subr.bf16.mxu0 0
  %812 = vmatpush1.bf16.msra.mxu0 0
  %813 = vmatprep.subr.bf16.mxu0 0
  %814 = vmatpush1.bf16.msra.mxu0 0
  %815 = vmatprep.subr.bf16.mxu0 0
  %816 = vmatpush1.bf16.msra.mxu0 0
  %817 = vmatprep.subr.bf16.mxu0 0
  %818 = vmatpush1.bf16.msra.mxu0 0
  %819 = vmatprep.subr.bf16.mxu0 0
  %820 = vmatpush1.bf16.msra.mxu0 0
  %821 = vmatprep.subr.bf16.mxu0 0
  %822 = vmatpush1.bf16.msra.mxu0 0
  %823 = vmatprep.subr.bf16.mxu0 0
  %824 = vmatpush1.bf16.msra.mxu0 0
  %825 = vmatprep.mubr.bf16.mxu0 0
  %826 = vmatmul.mubr.bf16.gmra.mrb[0].mxu0 %v592
  %v827 = vpop.f32.mrb[0].mxu0
  %v828 = vadd.f32 0.0, %v827
  %v829 = vpop.f32.mrb[0].mxu0
  %v830 = vadd.f32 0.0, %v829
  %v831 = vpop.f32.mrb[0].mxu0
  %v832 = vadd.f32 0.0, %v831
  %v833 = vpop.f32.mrb[0].mxu0
  %v834 = vadd.f32 0.0, %v833
  %835 = vmatprep.mubr.bf16.mxu0 0
  %836 = vmatmul.mubr.bf16.gmra.mrb[0].mxu0 %v595
  %v837 = vpop.f32.mrb[0].mxu0
  %v838 = vadd.f32 0.0, %v837
  %v839 = vpop.f32.mrb[0].mxu0
  %v840 = vadd.f32 0.0, %v839
  %v841 = vpop.f32.mrb[0].mxu0
  %v842 = vadd.f32 0.0, %v841
  %v843 = vpop.f32.mrb[0].mxu0
  %v844 = vadd.f32 0.0, %v843
  %845 = vmatprep.mubr.bf16.mxu0 0
  %846 = vmatmul.mubr.bf16.gmra.mrb[0].mxu0 %v598
  %v847 = vpop.f32.mrb[0].mxu0
  %v848 = vadd.f32 0.0, %v847
  %v849 = vpop.f32.mrb[0].mxu0
  %v850 = vadd.f32 0.0, %v849
  %v851 = vpop.f32.mrb[0].mxu0
  %v852 = vadd.f32 0.0, %v851
  %v853 = vpop.f32.mrb[0].mxu0
  %v854 = vadd.f32 0.0, %v853
  %855 = vmatprep.mubr.bf16.mxu0 0
  %856 = vmatmul.mubr.bf16.gmra.mrb[0].mxu0 %v601
  %v857 = vpop.f32.mrb[0].mxu0
  %v858 = vadd.f32 0.0, %v857
  %v859 = vpop.f32.mrb[0].mxu0
  %v860 = vadd.f32 0.0, %v859
  %v861 = vpop.f32.mrb[0].mxu0
  %v862 = vadd.f32 0.0, %v861
  %v863 = vpop.f32.mrb[0].mxu0
  %v864 = vadd.f32 0.0, %v863
  %865 = vmatprep.mubr.bf16.mxu0 0
  %866 = vmatmul.mubr.bf16.gmra.mrb[0].mxu0 %v785
  %v867 = vpop.f32.mrb[0].mxu0
  %v868 = vadd.f32 0.0, %v867
  %v869 = vpop.f32.mrb[0].mxu0
  %v870 = vadd.f32 0.0, %v869
  %v871 = vpop.f32.mrb[0].mxu0
  %v872 = vadd.f32 0.0, %v871
  %v873 = vpop.f32.mrb[0].mxu0
  %v874 = vadd.f32 0.0, %v873
  %875 = vdwg.mxu0
  %v876 = vadd.f32 %v644, %v828
  %v877 = vadd.f32 %v646, %v830
  %v878 = vadd.f32 %v648, %v832
  %v879 = vadd.f32 %v650, %v834
  %v880 = vadd.f32 %v654, %v838
  %v881 = vadd.f32 %v656, %v840
  %v882 = vadd.f32 %v658, %v842
  %v883 = vadd.f32 %v660, %v844
  %v884 = vadd.f32 %v664, %v848
  %v885 = vadd.f32 %v666, %v850
  %v886 = vadd.f32 %v668, %v852
  %v887 = vadd.f32 %v670, %v854
  %v888 = vadd.f32 %v674, %v858
  %v889 = vadd.f32 %v676, %v860
  %v890 = vadd.f32 %v678, %v862
  %v891 = vadd.f32 %v680, %v864
  %v892 = vadd.f32 %v684, %v868
  %v893 = vadd.f32 %v686, %v870
  %v894 = vadd.f32 %v688, %v872
  %v895 = vadd.f32 %v690, %v874
  %v896 = vpack.c.bf16 %v290, %v289
  %s897 = scalar_lea.vmem %s3, 360
  %v898 = vld [vmem:[%s897] sm:$0xff]
  %v899 = vld [vmem:[%s897 + $0x8] sm:$0xff]
  %v900 = vld [vmem:[%s897 + $0x10] sm:$0xff]
  %v901 = vld [vmem:[%s897 + $0x18] sm:$0xff]
  %v902 = vld [vmem:[%s897 + $0x20] sm:$0xff]
  %v903 = vld [vmem:[%s897 + $0x28] sm:$0xff]
  %v904 = vld [vmem:[%s897 + $0x30] sm:$0xff]
  %v905 = vld [vmem:[%s897 + $0x38] sm:$0xff]
  %v906 = vld [vmem:[%s897 + $0x40] sm:$0xff]
  %v907 = vld [vmem:[%s897 + $0x48] sm:$0xff]
  %v908 = vld [vmem:[%s897 + $0x50] sm:$0xff]
  %v909 = vld [vmem:[%s897 + $0x58] sm:$0xff]
  %v910 = vld [vmem:[%s897 + $0x60] sm:$0xff]
  %v911 = vld [vmem:[%s897 + $0x68] sm:$0xff]
  %v912 = vld [vmem:[%s897 + $0x70] sm:$0xff]
  %v928 = vunpack.c.l.b16 %v898
  %v929 = vunpack.c.h.b16 %v898
  %v930 = vunpack.c.l.b16 %v899
  %v931 = vunpack.c.h.b16 %v899
  %v932 = vunpack.c.l.b16 %v900
  %v933 = vunpack.c.h.b16 %v900
  %v934 = vunpack.c.l.b16 %v901
  %v935 = vunpack.c.h.b16 %v901
  %v936 = vunpack.c.l.b16 %v902
  %v937 = vunpack.c.h.b16 %v902
  %v938 = vunpack.c.l.b16 %v903
  %v939 = vunpack.c.h.b16 %v903
  %v940 = vunpack.c.l.b16 %v904
  %v941 = vunpack.c.h.b16 %v904
  %v942 = vunpack.c.l.b16 %v905
  %v943 = vunpack.c.h.b16 %v905
  %v944 = vunpack.c.l.b16 %v906
  %v945 = vunpack.c.h.b16 %v906
  %v946 = vunpack.c.l.b16 %v907
  %v947 = vunpack.c.h.b16 %v907
  %v948 = vunpack.c.l.b16 %v908
  %v949 = vunpack.c.h.b16 %v908
  %v950 = vunpack.c.l.b16 %v909
  %v951 = vunpack.c.h.b16 %v909
  %v952 = vunpack.c.l.b16 %v910
  %v953 = vunpack.c.h.b16 %v910
  %v954 = vunpack.c.l.b16 %v911
  %v955 = vunpack.c.h.b16 %v911
  %v956 = vunpack.c.l.b16 %v912
  %v957 = vunpack.c.h.b16 %v912
  %v958 = vpack.c.b16 %v930, %v928
  %v959 = vpack.c.b16 %v931, %v929
  %v960 = vpack.c.b16 %v934, %v932
  %v961 = vpack.c.b16 %v935, %v933
  %v962 = vpack.c.b16 %v938, %v936
  %v963 = vpack.c.b16 %v939, %v937
  %v964 = vpack.c.b16 %v942, %v940
  %v965 = vpack.c.b16 %v943, %v941
  %v966 = vpack.c.b16 %v946, %v944
  %v967 = vpack.c.b16 %v947, %v945
  %v968 = vpack.c.b16 %v950, %v948
  %v969 = vpack.c.b16 %v951, %v949
  %v970 = vpack.c.b16 %v954, %v952
  %v971 = vpack.c.b16 %v955, %v953
  %v972 = vpack.c.b16 %v956, %v956
  %v973 = vpack.c.b16 %v957, %v957
  %v989 = vsel %vm153, %v896, 0
  %v992 = vsel %vm178, %v972, 0
  %v995 = vsel %vm178, %v973, 0
  %997 = vmatprep.subr.bf16.mxu0 %v959
  %998 = vmatpush1.bf16.msra.mxu0 %v958
  %999 = vmatprep.subr.bf16.mxu0 %v961
  %1000 = vmatpush1.bf16.msra.mxu0 %v960
  %1001 = vmatprep.subr.bf16.mxu0 %v963
  %1002 = vmatpush1.bf16.msra.mxu0 %v962
  %1003 = vmatprep.subr.bf16.mxu0 %v965
  %1004 = vmatpush1.bf16.msra.mxu0 %v964
  %1005 = vmatprep.subr.bf16.mxu0 %v967
  %1006 = vmatpush1.bf16.msra.mxu0 %v966
  %1007 = vmatprep.subr.bf16.mxu0 %v969
  %1008 = vmatpush1.bf16.msra.mxu0 %v968
  %1009 = vmatprep.subr.bf16.mxu0 %v971
  %1010 = vmatpush1.bf16.msra.mxu0 %v970
  %1011 = vmatprep.subr.bf16.mxu0 %v995
  %1012 = vmatpush1.bf16.msra.mxu0 %v992
  %1013 = vmatprep.subr.bf16.mxu0 0
  %1014 = vmatpush1.bf16.msra.mxu0 0
  %1015 = vmatprep.subr.bf16.mxu0 0
  %1016 = vmatpush1.bf16.msra.mxu0 0
  %1017 = vmatprep.subr.bf16.mxu0 0
  %1018 = vmatpush1.bf16.msra.mxu0 0
  %1019 = vmatprep.subr.bf16.mxu0 0
  %1020 = vmatpush1.bf16.msra.mxu0 0
  %1021 = vmatprep.subr.bf16.mxu0 0
  %1022 = vmatpush1.bf16.msra.mxu0 0
  %1023 = vmatprep.subr.bf16.mxu0 0
  %1024 = vmatpush1.bf16.msra.mxu0 0
  %1025 = vmatprep.subr.bf16.mxu0 0
  %1026 = vmatpush1.bf16.msra.mxu0 0
  %1027 = vmatprep.subr.bf16.mxu0 0
  %1028 = vmatpush1.bf16.msra.mxu0 0
  %1029 = vmatprep.mubr.bf16.mxu0 0
  %1030 = vmatmul.mubr.bf16.gmra.mrb[0].mxu0 %v413
  %v1031 = vpop.f32.mrb[0].mxu0
  %v1032 = vadd.f32 0.0, %v1031
  %v1033 = vpop.f32.mrb[0].mxu0
  %v1034 = vadd.f32 0.0, %v1033
  %v1035 = vpop.f32.mrb[0].mxu0
  %v1036 = vadd.f32 0.0, %v1035
  %v1037 = vpop.f32.mrb[0].mxu0
  %v1038 = vadd.f32 0.0, %v1037
  %1039 = vmatprep.mubr.bf16.mxu0 0
  %1040 = vmatmul.mubr.bf16.gmra.mrb[0].mxu0 %v416
  %v1041 = vpop.f32.mrb[0].mxu0
  %v1042 = vadd.f32 0.0, %v1041
  %v1043 = vpop.f32.mrb[0].mxu0
  %v1044 = vadd.f32 0.0, %v1043
  %v1045 = vpop.f32.mrb[0].mxu0
  %v1046 = vadd.f32 0.0, %v1045
  %v1047 = vpop.f32.mrb[0].mxu0
  %v1048 = vadd.f32 0.0, %v1047
  %1049 = vmatprep.mubr.bf16.mxu0 0
  %1050 = vmatmul.mubr.bf16.gmra.mrb[0].mxu0 %v419
  %v1051 = vpop.f32.mrb[0].mxu0
  %v1052 = vadd.f32 0.0, %v1051
  %v1053 = vpop.f32.mrb[0].mxu0
  %v1054 = vadd.f32 0.0, %v1053
  %v1055 = vpop.f32.mrb[0].mxu0
  %v1056 = vadd.f32 0.0, %v1055
  %v1057 = vpop.f32.mrb[0].mxu0
  %v1058 = vadd.f32 0.0, %v1057
  %1059 = vmatprep.mubr.bf16.mxu0 0
  %1060 = vmatmul.mubr.bf16.gmra.mrb[0].mxu0 %v422
  %v1061 = vpop.f32.mrb[0].mxu0
  %v1062 = vadd.f32 0.0, %v1061
  %v1063 = vpop.f32.mrb[0].mxu0
  %v1064 = vadd.f32 0.0, %v1063
  %v1065 = vpop.f32.mrb[0].mxu0
  %v1066 = vadd.f32 0.0, %v1065
  %v1067 = vpop.f32.mrb[0].mxu0
  %v1068 = vadd.f32 0.0, %v1067
  %1069 = vmatprep.mubr.bf16.mxu0 0
  %1070 = vmatmul.mubr.bf16.gmra.mrb[0].mxu0 %v989
  %v1071 = vpop.f32.mrb[0].mxu0
  %v1072 = vadd.f32 0.0, %v1071
  %v1073 = vpop.f32.mrb[0].mxu0
  %v1074 = vadd.f32 0.0, %v1073
  %v1075 = vpop.f32.mrb[0].mxu0
  %v1076 = vadd.f32 0.0, %v1075
  %v1077 = vpop.f32.mrb[0].mxu0
  %v1078 = vadd.f32 0.0, %v1077
  %1079 = vdwg.mxu0
  %v1080 = vadd.f32 %v876, %v1032
  %v1081 = vadd.f32 %v877, %v1034
  %v1082 = vadd.f32 %v878, %v1036
  %v1083 = vadd.f32 %v879, %v1038
  %v1084 = vadd.f32 %v880, %v1042
  %v1085 = vadd.f32 %v881, %v1044
  %v1086 = vadd.f32 %v882, %v1046
  %v1087 = vadd.f32 %v883, %v1048
  %v1088 = vadd.f32 %v884, %v1052
  %v1089 = vadd.f32 %v885, %v1054
  %v1090 = vadd.f32 %v886, %v1056
  %v1091 = vadd.f32 %v887, %v1058
  %v1092 = vadd.f32 %v888, %v1062
  %v1093 = vadd.f32 %v889, %v1064
  %v1094 = vadd.f32 %v890, %v1066
  %v1095 = vadd.f32 %v891, %v1068
  %v1096 = vadd.f32 %v892, %v1072
  %v1097 = vadd.f32 %v893, %v1074
  %v1098 = vadd.f32 %v894, %v1076
  %v1099 = vadd.f32 %v895, %v1078
  %v1100 = vpack.c.bf16 %v291, %v290
  %s1101 = scalar_lea.vmem %s3, 480
  %v1102 = vld [vmem:[%s1101] sm:$0xff]
  %v1103 = vld [vmem:[%s1101 + $0x8] sm:$0xff]
  %v1104 = vld [vmem:[%s1101 + $0x10] sm:$0xff]
  %v1105 = vld [vmem:[%s1101 + $0x18] sm:$0xff]
  %v1106 = vld [vmem:[%s1101 + $0x20] sm:$0xff]
  %v1107 = vld [vmem:[%s1101 + $0x28] sm:$0xff]
  %v1108 = vld [vmem:[%s1101 + $0x30] sm:$0xff]
  %v1109 = vld [vmem:[%s1101 + $0x38] sm:$0xff]
  %v1110 = vld [vmem:[%s1101 + $0x40] sm:$0xff]
  %v1111 = vld [vmem:[%s1101 + $0x48] sm:$0xff]
  %v1112 = vld [vmem:[%s1101 + $0x50] sm:$0xff]
  %v1113 = vld [vmem:[%s1101 + $0x58] sm:$0xff]
  %v1114 = vld [vmem:[%s1101 + $0x60] sm:$0xff]
  %v1115 = vld [vmem:[%s1101 + $0x68] sm:$0xff]
  %v1116 = vld [vmem:[%s1101 + $0x70] sm:$0xff]
  %v1132 = vunpack.c.l.b16 %v1102
  %v1133 = vunpack.c.h.b16 %v1102
  %v1134 = vunpack.c.l.b16 %v1103
  %v1135 = vunpack.c.h.b16 %v1103
  %v1136 = vunpack.c.l.b16 %v1104
  %v1137 = vunpack.c.h.b16 %v1104
  %v1138 = vunpack.c.l.b16 %v1105
  %v1139 = vunpack.c.h.b16 %v1105
  %v1140 = vunpack.c.l.b16 %v1106
  %v1141 = vunpack.c.h.b16 %v1106
  %v1142 = vunpack.c.l.b16 %v1107
  %v1143 = vunpack.c.h.b16 %v1107
  %v1144 = vunpack.c.l.b16 %v1108
  %v1145 = vunpack.c.h.b16 %v1108
  %v1146 = vunpack.c.l.b16 %v1109
  %v1147 = vunpack.c.h.b16 %v1109
  %v1148 = vunpack.c.l.b16 %v1110
  %v1149 = vunpack.c.h.b16 %v1110
  %v1150 = vunpack.c.l.b16 %v1111
  %v1151 = vunpack.c.h.b16 %v1111
  %v1152 = vunpack.c.l.b16 %v1112
  %v1153 = vunpack.c.h.b16 %v1112
  %v1154 = vunpack.c.l.b16 %v1113
  %v1155 = vunpack.c.h.b16 %v1113
  %v1156 = vunpack.c.l.b16 %v1114
  %v1157 = vunpack.c.h.b16 %v1114
  %v1158 = vunpack.c.l.b16 %v1115
  %v1159 = vunpack.c.h.b16 %v1115
  %v1160 = vunpack.c.l.b16 %v1116
  %v1161 = vunpack.c.h.b16 %v1116
  %v1162 = vpack.c.b16 %v1134, %v1132
  %v1163 = vpack.c.b16 %v1135, %v1133
  %v1164 = vpack.c.b16 %v1138, %v1136
  %v1165 = vpack.c.b16 %v1139, %v1137
  %v1166 = vpack.c.b16 %v1142, %v1140
  %v1167 = vpack.c.b16 %v1143, %v1141
  %v1168 = vpack.c.b16 %v1146, %v1144
  %v1169 = vpack.c.b16 %v1147, %v1145
  %v1170 = vpack.c.b16 %v1150, %v1148
  %v1171 = vpack.c.b16 %v1151, %v1149
  %v1172 = vpack.c.b16 %v1154, %v1152
  %v1173 = vpack.c.b16 %v1155, %v1153
  %v1174 = vpack.c.b16 %v1158, %v1156
  %v1175 = vpack.c.b16 %v1159, %v1157
  %v1176 = vpack.c.b16 %v1160, %v1160
  %v1177 = vpack.c.b16 %v1161, %v1161
  %v1193 = vsel %vm153, %v1100, 0
  %v1196 = vsel %vm178, %v1176, 0
  %v1199 = vsel %vm178, %v1177, 0
  %1201 = vmatprep.subr.bf16.mxu0 %v1163
  %1202 = vmatpush1.bf16.msra.mxu0 %v1162
  %1203 = vmatprep.subr.bf16.mxu0 %v1165
  %1204 = vmatpush1.bf16.msra.mxu0 %v1164
  %1205 = vmatprep.subr.bf16.mxu0 %v1167
  %1206 = vmatpush1.bf16.msra.mxu0 %v1166
  %1207 = vmatprep.subr.bf16.mxu0 %v1169
  %1208 = vmatpush1.bf16.msra.mxu0 %v1168
  %1209 = vmatprep.subr.bf16.mxu0 %v1171
  %1210 = vmatpush1.bf16.msra.mxu0 %v1170
  %1211 = vmatprep.subr.bf16.mxu0 %v1173
  %1212 = vmatpush1.bf16.msra.mxu0 %v1172
  %1213 = vmatprep.subr.bf16.mxu0 %v1175
  %1214 = vmatpush1.bf16.msra.mxu0 %v1174
  %1215 = vmatprep.subr.bf16.mxu0 %v1199
  %1216 = vmatpush1.bf16.msra.mxu0 %v1196
  %1217 = vmatprep.subr.bf16.mxu0 0
  %1218 = vmatpush1.bf16.msra.mxu0 0
  %1219 = vmatprep.subr.bf16.mxu0 0
  %1220 = vmatpush1.bf16.msra.mxu0 0
  %1221 = vmatprep.subr.bf16.mxu0 0
  %1222 = vmatpush1.bf16.msra.mxu0 0
  %1223 = vmatprep.subr.bf16.mxu0 0
  %1224 = vmatpush1.bf16.msra.mxu0 0
  %1225 = vmatprep.subr.bf16.mxu0 0
  %1226 = vmatpush1.bf16.msra.mxu0 0
  %1227 = vmatprep.subr.bf16.mxu0 0
  %1228 = vmatpush1.bf16.msra.mxu0 0
  %1229 = vmatprep.subr.bf16.mxu0 0
  %1230 = vmatpush1.bf16.msra.mxu0 0
  %1231 = vmatprep.subr.bf16.mxu0 0
  %1232 = vmatpush1.bf16.msra.mxu0 0
  %1233 = vmatprep.mubr.bf16.mxu0 0
  %1234 = vmatmul.mubr.bf16.gmra.mrb[0].mxu0 %v595
  %v1235 = vpop.f32.mrb[0].mxu0
  %v1236 = vadd.f32 0.0, %v1235
  %v1237 = vpop.f32.mrb[0].mxu0
  %v1238 = vadd.f32 0.0, %v1237
  %v1239 = vpop.f32.mrb[0].mxu0
  %v1240 = vadd.f32 0.0, %v1239
  %v1241 = vpop.f32.mrb[0].mxu0
  %v1242 = vadd.f32 0.0, %v1241
  %1243 = vmatprep.mubr.bf16.mxu0 0
  %1244 = vmatmul.mubr.bf16.gmra.mrb[0].mxu0 %v598
  %v1245 = vpop.f32.mrb[0].mxu0
  %v1246 = vadd.f32 0.0, %v1245
  %v1247 = vpop.f32.mrb[0].mxu0
  %v1248 = vadd.f32 0.0, %v1247
  %v1249 = vpop.f32.mrb[0].mxu0
  %v1250 = vadd.f32 0.0, %v1249
  %v1251 = vpop.f32.mrb[0].mxu0
  %v1252 = vadd.f32 0.0, %v1251
  %1253 = vmatprep.mubr.bf16.mxu0 0
  %1254 = vmatmul.mubr.bf16.gmra.mrb[0].mxu0 %v601
  %v1255 = vpop.f32.mrb[0].mxu0
  %v1256 = vadd.f32 0.0, %v1255
  %v1257 = vpop.f32.mrb[0].mxu0
  %v1258 = vadd.f32 0.0, %v1257
  %v1259 = vpop.f32.mrb[0].mxu0
  %v1260 = vadd.f32 0.0, %v1259
  %v1261 = vpop.f32.mrb[0].mxu0
  %v1262 = vadd.f32 0.0, %v1261
  %1263 = vmatprep.mubr.bf16.mxu0 0
  %1264 = vmatmul.mubr.bf16.gmra.mrb[0].mxu0 %v785
  %v1265 = vpop.f32.mrb[0].mxu0
  %v1266 = vadd.f32 0.0, %v1265
  %v1267 = vpop.f32.mrb[0].mxu0
  %v1268 = vadd.f32 0.0, %v1267
  %v1269 = vpop.f32.mrb[0].mxu0
  %v1270 = vadd.f32 0.0, %v1269
  %v1271 = vpop.f32.mrb[0].mxu0
  %v1272 = vadd.f32 0.0, %v1271
  %1273 = vmatprep.mubr.bf16.mxu0 0
  %1274 = vmatmul.mubr.bf16.gmra.mrb[0].mxu0 %v1193
  %v1275 = vpop.f32.mrb[0].mxu0
  %v1276 = vadd.f32 0.0, %v1275
  %v1277 = vpop.f32.mrb[0].mxu0
  %v1278 = vadd.f32 0.0, %v1277
  %v1279 = vpop.f32.mrb[0].mxu0
  %v1280 = vadd.f32 0.0, %v1279
  %v1281 = vpop.f32.mrb[0].mxu0
  %v1282 = vadd.f32 0.0, %v1281
  %1283 = vdwg.mxu0
  %v1284 = vadd.f32 %v1080, %v1236
  %v1285 = vadd.f32 %v1081, %v1238
  %v1286 = vadd.f32 %v1082, %v1240
  %v1287 = vadd.f32 %v1083, %v1242
  %v1288 = vadd.f32 %v1084, %v1246
  %v1289 = vadd.f32 %v1085, %v1248
  %v1290 = vadd.f32 %v1086, %v1250
  %v1291 = vadd.f32 %v1087, %v1252
  %v1292 = vadd.f32 %v1088, %v1256
  %v1293 = vadd.f32 %v1089, %v1258
  %v1294 = vadd.f32 %v1090, %v1260
  %v1295 = vadd.f32 %v1091, %v1262
  %v1296 = vadd.f32 %v1092, %v1266
  %v1297 = vadd.f32 %v1093, %v1268
  %v1298 = vadd.f32 %v1094, %v1270
  %v1299 = vadd.f32 %v1095, %v1272
  %v1300 = vadd.f32 %v1096, %v1276
  %v1301 = vadd.f32 %v1097, %v1278
  %v1302 = vadd.f32 %v1098, %v1280
  %v1303 = vadd.f32 %v1099, %v1282
  %v1304 = vpack.c.bf16 %v292, %v291
  %s1305 = scalar_lea.vmem %s3, 600
  %v1306 = vld [vmem:[%s1305] sm:$0xff]
  %v1307 = vld [vmem:[%s1305 + $0x8] sm:$0xff]
  %v1308 = vld [vmem:[%s1305 + $0x10] sm:$0xff]
  %v1309 = vld [vmem:[%s1305 + $0x18] sm:$0xff]
  %v1310 = vld [vmem:[%s1305 + $0x20] sm:$0xff]
  %v1311 = vld [vmem:[%s1305 + $0x28] sm:$0xff]
  %v1312 = vld [vmem:[%s1305 + $0x30] sm:$0xff]
  %v1313 = vld [vmem:[%s1305 + $0x38] sm:$0xff]
  %v1314 = vld [vmem:[%s1305 + $0x40] sm:$0xff]
  %v1315 = vld [vmem:[%s1305 + $0x48] sm:$0xff]
  %v1316 = vld [vmem:[%s1305 + $0x50] sm:$0xff]
  %v1317 = vld [vmem:[%s1305 + $0x58] sm:$0xff]
  %v1318 = vld [vmem:[%s1305 + $0x60] sm:$0xff]
  %v1319 = vld [vmem:[%s1305 + $0x68] sm:$0xff]
  %v1320 = vld [vmem:[%s1305 + $0x70] sm:$0xff]
  %v1336 = vunpack.c.l.b16 %v1306
  %v1337 = vunpack.c.h.b16 %v1306
  %v1338 = vunpack.c.l.b16 %v1307
  %v1339 = vunpack.c.h.b16 %v1307
  %v1340 = vunpack.c.l.b16 %v1308
  %v1341 = vunpack.c.h.b16 %v1308
  %v1342 = vunpack.c.l.b16 %v1309
  %v1343 = vunpack.c.h.b16 %v1309
  %v1344 = vunpack.c.l.b16 %v1310
  %v1345 = vunpack.c.h.b16 %v1310
  %v1346 = vunpack.c.l.b16 %v1311
  %v1347 = vunpack.c.h.b16 %v1311
  %v1348 = vunpack.c.l.b16 %v1312
  %v1349 = vunpack.c.h.b16 %v1312
  %v1350 = vunpack.c.l.b16 %v1313
  %v1351 = vunpack.c.h.b16 %v1313
  %v1352 = vunpack.c.l.b16 %v1314
  %v1353 = vunpack.c.h.b16 %v1314
  %v1354 = vunpack.c.l.b16 %v1315
  %v1355 = vunpack.c.h.b16 %v1315
  %v1356 = vunpack.c.l.b16 %v1316
  %v1357 = vunpack.c.h.b16 %v1316
  %v1358 = vunpack.c.l.b16 %v1317
  %v1359 = vunpack.c.h.b16 %v1317
  %v1360 = vunpack.c.l.b16 %v1318
  %v1361 = vunpack.c.h.b16 %v1318
  %v1362 = vunpack.c.l.b16 %v1319
  %v1363 = vunpack.c.h.b16 %v1319
  %v1364 = vunpack.c.l.b16 %v1320
  %v1365 = vunpack.c.h.b16 %v1320
  %v1366 = vpack.c.b16 %v1338, %v1336
  %v1367 = vpack.c.b16 %v1339, %v1337
  %v1368 = vpack.c.b16 %v1342, %v1340
  %v1369 = vpack.c.b16 %v1343, %v1341
  %v1370 = vpack.c.b16 %v1346, %v1344
  %v1371 = vpack.c.b16 %v1347, %v1345
  %v1372 = vpack.c.b16 %v1350, %v1348
  %v1373 = vpack.c.b16 %v1351, %v1349
  %v1374 = vpack.c.b16 %v1354, %v1352
  %v1375 = vpack.c.b16 %v1355, %v1353
  %v1376 = vpack.c.b16 %v1358, %v1356
  %v1377 = vpack.c.b16 %v1359, %v1357
  %v1378 = vpack.c.b16 %v1362, %v1360
  %v1379 = vpack.c.b16 %v1363, %v1361
  %v1380 = vpack.c.b16 %v1364, %v1364
  %v1381 = vpack.c.b16 %v1365, %v1365
  %v1397 = vsel %vm153, %v1304, 0
  %v1400 = vsel %vm178, %v1380, 0
  %v1403 = vsel %vm178, %v1381, 0
  %1405 = vmatprep.subr.bf16.mxu0 %v1367
  %1406 = vmatpush1.bf16.msra.mxu0 %v1366
  %1407 = vmatprep.subr.bf16.mxu0 %v1369
  %1408 = vmatpush1.bf16.msra.mxu0 %v1368
  %1409 = vmatprep.subr.bf16.mxu0 %v1371
  %1410 = vmatpush1.bf16.msra.mxu0 %v1370
  %1411 = vmatprep.subr.bf16.mxu0 %v1373
  %1412 = vmatpush1.bf16.msra.mxu0 %v1372
  %1413 = vmatprep.subr.bf16.mxu0 %v1375
  %1414 = vmatpush1.bf16.msra.mxu0 %v1374
  %1415 = vmatprep.subr.bf16.mxu0 %v1377
  %1416 = vmatpush1.bf16.msra.mxu0 %v1376
  %1417 = vmatprep.subr.bf16.mxu0 %v1379
  %1418 = vmatpush1.bf16.msra.mxu0 %v1378
  %1419 = vmatprep.subr.bf16.mxu0 %v1403
  %1420 = vmatpush1.bf16.msra.mxu0 %v1400
  %1421 = vmatprep.subr.bf16.mxu0 0
  %1422 = vmatpush1.bf16.msra.mxu0 0
  %1423 = vmatprep.subr.bf16.mxu0 0
  %1424 = vmatpush1.bf16.msra.mxu0 0
  %1425 = vmatprep.subr.bf16.mxu0 0
  %1426 = vmatpush1.bf16.msra.mxu0 0
  %1427 = vmatprep.subr.bf16.mxu0 0
  %1428 = vmatpush1.bf16.msra.mxu0 0
  %1429 = vmatprep.subr.bf16.mxu0 0
  %1430 = vmatpush1.bf16.msra.mxu0 0
  %1431 = vmatprep.subr.bf16.mxu0 0
  %1432 = vmatpush1.bf16.msra.mxu0 0
  %1433 = vmatprep.subr.bf16.mxu0 0
  %1434 = vmatpush1.bf16.msra.mxu0 0
  %1435 = vmatprep.subr.bf16.mxu0 0
  %1436 = vmatpush1.bf16.msra.mxu0 0
  %1437 = vmatprep.mubr.bf16.mxu0 0
  %1438 = vmatmul.mubr.bf16.gmra.mrb[0].mxu0 %v416
  %v1439 = vpop.f32.mrb[0].mxu0
  %v1440 = vadd.f32 0.0, %v1439
  %v1441 = vpop.f32.mrb[0].mxu0
  %v1442 = vadd.f32 0.0, %v1441
  %v1443 = vpop.f32.mrb[0].mxu0
  %v1444 = vadd.f32 0.0, %v1443
  %v1445 = vpop.f32.mrb[0].mxu0
  %v1446 = vadd.f32 0.0, %v1445
  %1447 = vmatprep.mubr.bf16.mxu0 0
  %1448 = vmatmul.mubr.bf16.gmra.mrb[0].mxu0 %v419
  %v1449 = vpop.f32.mrb[0].mxu0
  %v1450 = vadd.f32 0.0, %v1449
  %v1451 = vpop.f32.mrb[0].mxu0
  %v1452 = vadd.f32 0.0, %v1451
  %v1453 = vpop.f32.mrb[0].mxu0
  %v1454 = vadd.f32 0.0, %v1453
  %v1455 = vpop.f32.mrb[0].mxu0
  %v1456 = vadd.f32 0.0, %v1455
  %1457 = vmatprep.mubr.bf16.mxu0 0
  %1458 = vmatmul.mubr.bf16.gmra.mrb[0].mxu0 %v422
  %v1459 = vpop.f32.mrb[0].mxu0
  %v1460 = vadd.f32 0.0, %v1459
  %v1461 = vpop.f32.mrb[0].mxu0
  %v1462 = vadd.f32 0.0, %v1461
  %v1463 = vpop.f32.mrb[0].mxu0
  %v1464 = vadd.f32 0.0, %v1463
  %v1465 = vpop.f32.mrb[0].mxu0
  %v1466 = vadd.f32 0.0, %v1465
  %1467 = vmatprep.mubr.bf16.mxu0 0
  %1468 = vmatmul.mubr.bf16.gmra.mrb[0].mxu0 %v989
  %v1469 = vpop.f32.mrb[0].mxu0
  %v1470 = vadd.f32 0.0, %v1469
  %v1471 = vpop.f32.mrb[0].mxu0
  %v1472 = vadd.f32 0.0, %v1471
  %v1473 = vpop.f32.mrb[0].mxu0
  %v1474 = vadd.f32 0.0, %v1473
  %v1475 = vpop.f32.mrb[0].mxu0
  %v1476 = vadd.f32 0.0, %v1475
  %1477 = vmatprep.mubr.bf16.mxu0 0
  %1478 = vmatmul.mubr.bf16.gmra.mrb[0].mxu0 %v1397
  %v1479 = vpop.f32.mrb[0].mxu0
  %v1480 = vadd.f32 0.0, %v1479
  %v1481 = vpop.f32.mrb[0].mxu0
  %v1482 = vadd.f32 0.0, %v1481
  %v1483 = vpop.f32.mrb[0].mxu0
  %v1484 = vadd.f32 0.0, %v1483
  %v1485 = vpop.f32.mrb[0].mxu0
  %v1486 = vadd.f32 0.0, %v1485
  %1487 = vdwg.mxu0
  %v1488 = vadd.f32 %v1284, %v1440
  %v1489 = vadd.f32 %v1285, %v1442
  %v1490 = vadd.f32 %v1286, %v1444
  %v1491 = vadd.f32 %v1287, %v1446
  %v1492 = vadd.f32 %v1288, %v1450
  %v1493 = vadd.f32 %v1289, %v1452
  %v1494 = vadd.f32 %v1290, %v1454
  %v1495 = vadd.f32 %v1291, %v1456
  %v1496 = vadd.f32 %v1292, %v1460
  %v1497 = vadd.f32 %v1293, %v1462
  %v1498 = vadd.f32 %v1294, %v1464
  %v1499 = vadd.f32 %v1295, %v1466
  %v1500 = vadd.f32 %v1296, %v1470
  %v1501 = vadd.f32 %v1297, %v1472
  %v1502 = vadd.f32 %v1298, %v1474
  %v1503 = vadd.f32 %v1299, %v1476
  %v1504 = vadd.f32 %v1300, %v1480
  %v1505 = vadd.f32 %v1301, %v1482
  %v1506 = vadd.f32 %v1302, %v1484
  %v1507 = vadd.f32 %v1303, %v1486
  %v1508 = vld [vmem:[%s4] sm:$0x3]
  %v1510 = vlaneseq
  %v1511 = vshrl.u32 %v1510, 7
  %v1512 = vsub.s32 0, %v1511
  %v1513 = vrot.slane %v1508, %v1512
  %v1514 = vlaneseq
  %v1515 = vshrl.u32 %v1514, 7
  %v1516 = vsub.s32 1, %v1515
  %v1517 = vrot.slane %v1508, %v1516
  %v1520 = vadd.f32 %v1488, %v1513
  %v1521 = vadd.f32 %v1489, %v1517
  %v1522 = vadd.f32 %v1490, %v1513
  %v1523 = vadd.f32 %v1491, %v1517
  %v1524 = vadd.f32 %v1492, %v1513
  %v1525 = vadd.f32 %v1493, %v1517
  %v1526 = vadd.f32 %v1494, %v1513
  %v1527 = vadd.f32 %v1495, %v1517
  %v1528 = vadd.f32 %v1496, %v1513
  %v1529 = vadd.f32 %v1497, %v1517
  %v1530 = vadd.f32 %v1498, %v1513
  %v1531 = vadd.f32 %v1499, %v1517
  %v1532 = vadd.f32 %v1500, %v1513
  %v1533 = vadd.f32 %v1501, %v1517
  %v1534 = vadd.f32 %v1502, %v1513
  %v1535 = vadd.f32 %v1503, %v1517
  %v1536 = vadd.f32 %v1504, %v1513
  %v1537 = vadd.f32 %v1505, %v1517
  %v1538 = vadd.f32 %v1506, %v1513
  %v1539 = vadd.f32 %v1507, %v1517
  %v1540 = vmax.f32 %v1520, 0.0
  %v1541 = vmax.f32 %v1521, 0.0
  %v1542 = vmax.f32 %v1522, 0.0
  %v1543 = vmax.f32 %v1523, 0.0
  %v1544 = vmax.f32 %v1524, 0.0
  %v1545 = vmax.f32 %v1525, 0.0
  %v1546 = vmax.f32 %v1526, 0.0
  %v1547 = vmax.f32 %v1527, 0.0
  %v1548 = vmax.f32 %v1528, 0.0
  %v1549 = vmax.f32 %v1529, 0.0
  %v1550 = vmax.f32 %v1530, 0.0
  %v1551 = vmax.f32 %v1531, 0.0
  %v1552 = vmax.f32 %v1532, 0.0
  %v1553 = vmax.f32 %v1533, 0.0
  %v1554 = vmax.f32 %v1534, 0.0
  %v1555 = vmax.f32 %v1535, 0.0
  %v1556 = vmax.f32 %v1536, 0.0
  %v1557 = vmax.f32 %v1537, 0.0
  %v1558 = vmax.f32 %v1538, 0.0
  %v1559 = vmax.f32 %v1539, 0.0
  %v1560 = vpack.c.bf16 %v1542, %v1540
  %v1561 = vpack.c.bf16 %v1543, %v1541
  %v1562 = vpack.c.bf16 %v1546, %v1544
  %v1563 = vpack.c.bf16 %v1547, %v1545
  %v1564 = vpack.c.bf16 %v1550, %v1548
  %v1565 = vpack.c.bf16 %v1551, %v1549
  %v1566 = vld [vmem:[%s5] sm:$0xff]
  %v1567 = vld [vmem:[%s5 + $0x8] sm:$0xff]
  %v1568 = vld [vmem:[%s5 + $0x10] sm:$0xff]
  %v1569 = vld [vmem:[%s5 + $0x18] sm:$0xff]
  %v1570 = vld [vmem:[%s5 + $0x20] sm:$0xff]
  %v1571 = vld [vmem:[%s5 + $0x28] sm:$0xff]
  %v1572 = vld [vmem:[%s5 + $0x30] sm:$0xff]
  %v1573 = vld [vmem:[%s5 + $0x38] sm:$0xff]
  %v1574 = vld [vmem:[%s5 + $0x40] sm:$0xff]
  %v1575 = vld [vmem:[%s5 + $0x48] sm:$0xff]
  %v1576 = vld [vmem:[%s5 + $0x50] sm:$0xff]
  %v1577 = vld [vmem:[%s5 + $0x58] sm:$0xff]
  %v1578 = vld [vmem:[%s5 + $0x60] sm:$0xff]
  %v1579 = vld [vmem:[%s5 + $0x68] sm:$0xff]
  %v1580 = vld [vmem:[%s5 + $0x70] sm:$0xff]
  %v1581 = vld [vmem:[%s5 + $0x78] sm:$0xff]
  %v1582 = vld [vmem:[%s5 + $0x80] sm:$0xff]
  %v1583 = vld [vmem:[%s5 + $0x88] sm:$0xff]
  %v1584 = vld [vmem:[%s5 + $0x90] sm:$0xff]
  %v1585 = vld [vmem:[%s5 + $0x98] sm:$0xff]
  %v1586 = vpack.c.bf16 %v1544, %v1542
  %v1587 = vpack.c.bf16 %v1545, %v1543
  %v1588 = vpack.c.bf16 %v1548, %v1546
  %v1589 = vpack.c.bf16 %v1549, %v1547
  %v1590 = vpack.c.bf16 %v1552, %v1550
  %v1591 = vpack.c.bf16 %v1553, %v1551
  %s1592 = scalar_lea.vmem %s5, 160
  %v1593 = vld [vmem:[%s1592] sm:$0xff]
  %v1594 = vld [vmem:[%s1592 + $0x8] sm:$0xff]
  %v1595 = vld [vmem:[%s1592 + $0x10] sm:$0xff]
  %v1596 = vld [vmem:[%s1592 + $0x18] sm:$0xff]
  %v1597 = vld [vmem:[%s1592 + $0x20] sm:$0xff]
  %v1598 = vld [vmem:[%s1592 + $0x28] sm:$0xff]
  %v1599 = vld [vmem:[%s1592 + $0x30] sm:$0xff]
  %v1600 = vld [vmem:[%s1592 + $0x38] sm:$0xff]
  %v1601 = vld [vmem:[%s1592 + $0x40] sm:$0xff]
  %v1602 = vld [vmem:[%s1592 + $0x48] sm:$0xff]
  %v1603 = vld [vmem:[%s1592 + $0x50] sm:$0xff]
  %v1604 = vld [vmem:[%s1592 + $0x58] sm:$0xff]
  %v1605 = vld [vmem:[%s1592 + $0x60] sm:$0xff]
  %v1606 = vld [vmem:[%s1592 + $0x68] sm:$0xff]
  %v1607 = vld [vmem:[%s1592 + $0x70] sm:$0xff]
  %v1608 = vld [vmem:[%s1592 + $0x78] sm:$0xff]
  %v1609 = vld [vmem:[%s1592 + $0x80] sm:$0xff]
  %v1610 = vld [vmem:[%s1592 + $0x88] sm:$0xff]
  %v1611 = vld [vmem:[%s1592 + $0x90] sm:$0xff]
  %v1612 = vld [vmem:[%s1592 + $0x98] sm:$0xff]
  %v1633 = vunpack.c.l.b16 %v1593
  %v1634 = vunpack.c.h.b16 %v1593
  %v1635 = vunpack.c.l.b16 %v1594
  %v1636 = vunpack.c.h.b16 %v1594
  %v1637 = vunpack.c.l.b16 %v1595
  %v1638 = vunpack.c.h.b16 %v1595
  %v1639 = vunpack.c.l.b16 %v1596
  %v1640 = vunpack.c.h.b16 %v1596
  %v1641 = vunpack.c.l.b16 %v1597
  %v1642 = vunpack.c.h.b16 %v1597
  %v1643 = vunpack.c.l.b16 %v1598
  %v1644 = vunpack.c.h.b16 %v1598
  %v1645 = vunpack.c.l.b16 %v1599
  %v1646 = vunpack.c.h.b16 %v1599
  %v1647 = vunpack.c.l.b16 %v1600
  %v1648 = vunpack.c.h.b16 %v1600
  %v1649 = vunpack.c.l.b16 %v1601
  %v1650 = vunpack.c.h.b16 %v1601
  %v1651 = vunpack.c.l.b16 %v1602
  %v1652 = vunpack.c.h.b16 %v1602
  %v1653 = vunpack.c.l.b16 %v1603
  %v1654 = vunpack.c.h.b16 %v1603
  %v1655 = vunpack.c.l.b16 %v1604
  %v1656 = vunpack.c.h.b16 %v1604
  %v1657 = vunpack.c.l.b16 %v1605
  %v1658 = vunpack.c.h.b16 %v1605
  %v1659 = vunpack.c.l.b16 %v1606
  %v1660 = vunpack.c.h.b16 %v1606
  %v1661 = vunpack.c.l.b16 %v1607
  %v1662 = vunpack.c.h.b16 %v1607
  %v1663 = vunpack.c.l.b16 %v1608
  %v1664 = vunpack.c.h.b16 %v1608
  %v1665 = vunpack.c.l.b16 %v1609
  %v1666 = vunpack.c.h.b16 %v1609
  %v1667 = vunpack.c.l.b16 %v1610
  %v1668 = vunpack.c.h.b16 %v1610
  %v1669 = vunpack.c.l.b16 %v1611
  %v1670 = vunpack.c.h.b16 %v1611
  %v1671 = vunpack.c.l.b16 %v1612
  %v1672 = vunpack.c.h.b16 %v1612
  %v1673 = vpack.c.b16 %v1635, %v1633
  %v1674 = vpack.c.b16 %v1636, %v1634
  %v1675 = vpack.c.b16 %v1639, %v1637
  %v1676 = vpack.c.b16 %v1640, %v1638
  %v1677 = vpack.c.b16 %v1643, %v1641
  %v1678 = vpack.c.b16 %v1644, %v1642
  %v1679 = vpack.c.b16 %v1647, %v1645
  %v1680 = vpack.c.b16 %v1648, %v1646
  %v1681 = vpack.c.b16 %v1651, %v1649
  %v1682 = vpack.c.b16 %v1652, %v1650
  %v1683 = vpack.c.b16 %v1655, %v1653
  %v1684 = vpack.c.b16 %v1656, %v1654
  %v1685 = vpack.c.b16 %v1659, %v1657
  %v1686 = vpack.c.b16 %v1660, %v1658
  %v1687 = vpack.c.b16 %v1663, %v1661
  %v1688 = vpack.c.b16 %v1664, %v1662
  %v1689 = vpack.c.b16 %v1667, %v1665
  %v1690 = vpack.c.b16 %v1668, %v1666
  %v1691 = vpack.c.b16 %v1671, %v1669
  %v1692 = vpack.c.b16 %v1672, %v1670
  %vm1713 = vcmask 261120
  %v1715 = vsel %vm1713, %v1587, 0
  %v1718 = vsel %vm1713, %v1589, 0
  %v1721 = vsel %vm1713, %v1591, 0
  %1723 = vmatprep.subr.bf16.mxu0 %v1674
  %1724 = vmatpush1.bf16.msra.mxu0 %v1673
  %1725 = vmatprep.subr.bf16.mxu0 %v1676
  %1726 = vmatpush1.bf16.msra.mxu0 %v1675
  %1727 = vmatprep.subr.bf16.mxu0 %v1678
  %1728 = vmatpush1.bf16.msra.mxu0 %v1677
  %1729 = vmatprep.subr.bf16.mxu0 %v1680
  %1730 = vmatpush1.bf16.msra.mxu0 %v1679
  %1731 = vmatprep.subr.bf16.mxu0 %v1682
  %1732 = vmatpush1.bf16.msra.mxu0 %v1681
  %1733 = vmatprep.subr.bf16.mxu0 %v1684
  %1734 = vmatpush1.bf16.msra.mxu0 %v1683
  %1735 = vmatprep.subr.bf16.mxu0 %v1686
  %1736 = vmatpush1.bf16.msra.mxu0 %v1685
  %1737 = vmatprep.subr.bf16.mxu0 %v1688
  %1738 = vmatpush1.bf16.msra.mxu0 %v1687
  %1739 = vmatprep.subr.bf16.mxu0 %v1690
  %1740 = vmatpush1.bf16.msra.mxu0 %v1689
  %1741 = vmatprep.subr.bf16.mxu0 %v1692
  %1742 = vmatpush1.bf16.msra.mxu0 %v1691
  %1743 = vmatprep.subr.bf16.mxu0 0
  %1744 = vmatpush1.bf16.msra.mxu0 0
  %1745 = vmatprep.subr.bf16.mxu0 0
  %1746 = vmatpush1.bf16.msra.mxu0 0
  %1747 = vmatprep.subr.bf16.mxu0 0
  %1748 = vmatpush1.bf16.msra.mxu0 0
  %1749 = vmatprep.subr.bf16.mxu0 0
  %1750 = vmatpush1.bf16.msra.mxu0 0
  %1751 = vmatprep.subr.bf16.mxu0 0
  %1752 = vmatpush1.bf16.msra.mxu0 0
  %1753 = vmatprep.subr.bf16.mxu0 0
  %1754 = vmatpush1.bf16.msra.mxu0 0
  %1755 = vmatprep.mubr.bf16.mxu0 %v1715
  %1756 = vmatmul.mubr.bf16.gmra.mrb[0].mxu0 %v1586
  %v1757 = vpop.f32.mrb[0].mxu0
  %v1758 = vadd.f32 0.0, %v1757
  %v1759 = vpop.f32.mrb[0].mxu0
  %v1760 = vadd.f32 0.0, %v1759
  %v1761 = vpop.f32.mrb[0].mxu0
  %v1762 = vadd.f32 0.0, %v1761
  %v1763 = vpop.f32.mrb[0].mxu0
  %v1764 = vadd.f32 0.0, %v1763
  %1765 = vmatprep.mubr.bf16.mxu0 %v1718
  %1766 = vmatmul.mubr.bf16.gmra.mrb[0].mxu0 %v1588
  %v1767 = vpop.f32.mrb[0].mxu0
  %v1768 = vadd.f32 0.0, %v1767
  %v1769 = vpop.f32.mrb[0].mxu0
  %v1770 = vadd.f32 0.0, %v1769
  %v1771 = vpop.f32.mrb[0].mxu0
  %v1772 = vadd.f32 0.0, %v1771
  %v1773 = vpop.f32.mrb[0].mxu0
  %v1774 = vadd.f32 0.0, %v1773
  %1775 = vmatprep.mubr.bf16.mxu0 %v1721
  %1776 = vmatmul.mubr.bf16.gmra.mrb[0].mxu0 %v1590
  %v1777 = vpop.f32.mrb[0].mxu0
  %v1778 = vadd.f32 0.0, %v1777
  %v1779 = vpop.f32.mrb[0].mxu0
  %v1780 = vadd.f32 0.0, %v1779
  %v1781 = vpop.f32.mrb[0].mxu0
  %v1782 = vadd.f32 0.0, %v1781
  %v1783 = vpop.f32.mrb[0].mxu0
  %v1784 = vadd.f32 0.0, %v1783
  %1785 = vdwg.mxu0
  %v1806 = vunpack.c.l.b16 %v1566
  %v1807 = vunpack.c.h.b16 %v1566
  %v1808 = vunpack.c.l.b16 %v1567
  %v1809 = vunpack.c.h.b16 %v1567
  %v1810 = vunpack.c.l.b16 %v1568
  %v1811 = vunpack.c.h.b16 %v1568
  %v1812 = vunpack.c.l.b16 %v1569
  %v1813 = vunpack.c.h.b16 %v1569
  %v1814 = vunpack.c.l.b16 %v1570
  %v1815 = vunpack.c.h.b16 %v1570
  %v1816 = vunpack.c.l.b16 %v1571
  %v1817 = vunpack.c.h.b16 %v1571
  %v1818 = vunpack.c.l.b16 %v1572
  %v1819 = vunpack.c.h.b16 %v1572
  %v1820 = vunpack.c.l.b16 %v1573
  %v1821 = vunpack.c.h.b16 %v1573
  %v1822 = vunpack.c.l.b16 %v1574
  %v1823 = vunpack.c.h.b16 %v1574
  %v1824 = vunpack.c.l.b16 %v1575
  %v1825 = vunpack.c.h.b16 %v1575
  %v1826 = vunpack.c.l.b16 %v1576
  %v1827 = vunpack.c.h.b16 %v1576
  %v1828 = vunpack.c.l.b16 %v1577
  %v1829 = vunpack.c.h.b16 %v1577
  %v1830 = vunpack.c.l.b16 %v1578
  %v1831 = vunpack.c.h.b16 %v1578
  %v1832 = vunpack.c.l.b16 %v1579
  %v1833 = vunpack.c.h.b16 %v1579
  %v1834 = vunpack.c.l.b16 %v1580
  %v1835 = vunpack.c.h.b16 %v1580
  %v1836 = vunpack.c.l.b16 %v1581
  %v1837 = vunpack.c.h.b16 %v1581
  %v1838 = vunpack.c.l.b16 %v1582
  %v1839 = vunpack.c.h.b16 %v1582
  %v1840 = vunpack.c.l.b16 %v1583
  %v1841 = vunpack.c.h.b16 %v1583
  %v1842 = vunpack.c.l.b16 %v1584
  %v1843 = vunpack.c.h.b16 %v1584
  %v1844 = vunpack.c.l.b16 %v1585
  %v1845 = vunpack.c.h.b16 %v1585
  %v1846 = vpack.c.b16 %v1808, %v1806
  %v1847 = vpack.c.b16 %v1809, %v1807
  %v1848 = vpack.c.b16 %v1812, %v1810
  %v1849 = vpack.c.b16 %v1813, %v1811
  %v1850 = vpack.c.b16 %v1816, %v1814
  %v1851 = vpack.c.b16 %v1817, %v1815
  %v1852 = vpack.c.b16 %v1820, %v1818
  %v1853 = vpack.c.b16 %v1821, %v1819
  %v1854 = vpack.c.b16 %v1824, %v1822
  %v1855 = vpack.c.b16 %v1825, %v1823
  %v1856 = vpack.c.b16 %v1828, %v1826
  %v1857 = vpack.c.b16 %v1829, %v1827
  %v1858 = vpack.c.b16 %v1832, %v1830
  %v1859 = vpack.c.b16 %v1833, %v1831
  %v1860 = vpack.c.b16 %v1836, %v1834
  %v1861 = vpack.c.b16 %v1837, %v1835
  %v1862 = vpack.c.b16 %v1840, %v1838
  %v1863 = vpack.c.b16 %v1841, %v1839
  %v1864 = vpack.c.b16 %v1844, %v1842
  %v1865 = vpack.c.b16 %v1845, %v1843
  %v1887 = vsel %vm1713, %v1561, 0
  %v1890 = vsel %vm1713, %v1563, 0
  %v1893 = vsel %vm1713, %v1565, 0
  %1895 = vmatprep.subr.bf16.mxu0 %v1847
  %1896 = vmatpush1.bf16.msra.mxu0 %v1846
  %1897 = vmatprep.subr.bf16.mxu0 %v1849
  %1898 = vmatpush1.bf16.msra.mxu0 %v1848
  %1899 = vmatprep.subr.bf16.mxu0 %v1851
  %1900 = vmatpush1.bf16.msra.mxu0 %v1850
  %1901 = vmatprep.subr.bf16.mxu0 %v1853
  %1902 = vmatpush1.bf16.msra.mxu0 %v1852
  %1903 = vmatprep.subr.bf16.mxu0 %v1855
  %1904 = vmatpush1.bf16.msra.mxu0 %v1854
  %1905 = vmatprep.subr.bf16.mxu0 %v1857
  %1906 = vmatpush1.bf16.msra.mxu0 %v1856
  %1907 = vmatprep.subr.bf16.mxu0 %v1859
  %1908 = vmatpush1.bf16.msra.mxu0 %v1858
  %1909 = vmatprep.subr.bf16.mxu0 %v1861
  %1910 = vmatpush1.bf16.msra.mxu0 %v1860
  %1911 = vmatprep.subr.bf16.mxu0 %v1863
  %1912 = vmatpush1.bf16.msra.mxu0 %v1862
  %1913 = vmatprep.subr.bf16.mxu0 %v1865
  %1914 = vmatpush1.bf16.msra.mxu0 %v1864
  %1915 = vmatprep.subr.bf16.mxu0 0
  %1916 = vmatpush1.bf16.msra.mxu0 0
  %1917 = vmatprep.subr.bf16.mxu0 0
  %1918 = vmatpush1.bf16.msra.mxu0 0
  %1919 = vmatprep.subr.bf16.mxu0 0
  %1920 = vmatpush1.bf16.msra.mxu0 0
  %1921 = vmatprep.subr.bf16.mxu0 0
  %1922 = vmatpush1.bf16.msra.mxu0 0
  %1923 = vmatprep.subr.bf16.mxu0 0
  %1924 = vmatpush1.bf16.msra.mxu0 0
  %1925 = vmatprep.subr.bf16.mxu0 0
  %1926 = vmatpush1.bf16.msra.mxu0 0
  %1927 = vmatprep.mubr.bf16.mxu0 %v1887
  %1928 = vmatmul.mubr.bf16.gmra.mrb[0].mxu0 %v1560
  %v1929 = vpop.f32.mrb[0].mxu0
  %v1930 = vadd.f32 %v1758, %v1929
  %v1931 = vpop.f32.mrb[0].mxu0
  %v1932 = vadd.f32 %v1760, %v1931
  %v1933 = vpop.f32.mrb[0].mxu0
  %v1934 = vadd.f32 %v1762, %v1933
  %v1935 = vpop.f32.mrb[0].mxu0
  %v1936 = vadd.f32 %v1764, %v1935
  %1937 = vmatprep.mubr.bf16.mxu0 %v1890
  %1938 = vmatmul.mubr.bf16.gmra.mrb[0].mxu0 %v1562
  %v1939 = vpop.f32.mrb[0].mxu0
  %v1940 = vadd.f32 %v1768, %v1939
  %v1941 = vpop.f32.mrb[0].mxu0
  %v1942 = vadd.f32 %v1770, %v1941
  %v1943 = vpop.f32.mrb[0].mxu0
  %v1944 = vadd.f32 %v1772, %v1943
  %v1945 = vpop.f32.mrb[0].mxu0
  %v1946 = vadd.f32 %v1774, %v1945
  %1947 = vmatprep.mubr.bf16.mxu0 %v1893
  %1948 = vmatmul.mubr.bf16.gmra.mrb[0].mxu0 %v1564
  %v1949 = vpop.f32.mrb[0].mxu0
  %v1950 = vadd.f32 %v1778, %v1949
  %v1951 = vpop.f32.mrb[0].mxu0
  %v1952 = vadd.f32 %v1780, %v1951
  %v1953 = vpop.f32.mrb[0].mxu0
  %v1954 = vadd.f32 %v1782, %v1953
  %v1955 = vpop.f32.mrb[0].mxu0
  %v1956 = vadd.f32 %v1784, %v1955
  %1957 = vdwg.mxu0
  %v1958 = vpack.c.bf16 %v1554, %v1552
  %v1959 = vpack.c.bf16 %v1555, %v1553
  %s1960 = scalar_lea.vmem %s5, 320
  %v1961 = vld [vmem:[%s1960] sm:$0xff]
  %v1962 = vld [vmem:[%s1960 + $0x8] sm:$0xff]
  %v1963 = vld [vmem:[%s1960 + $0x10] sm:$0xff]
  %v1964 = vld [vmem:[%s1960 + $0x18] sm:$0xff]
  %v1965 = vld [vmem:[%s1960 + $0x20] sm:$0xff]
  %v1966 = vld [vmem:[%s1960 + $0x28] sm:$0xff]
  %v1967 = vld [vmem:[%s1960 + $0x30] sm:$0xff]
  %v1968 = vld [vmem:[%s1960 + $0x38] sm:$0xff]
  %v1969 = vld [vmem:[%s1960 + $0x40] sm:$0xff]
  %v1970 = vld [vmem:[%s1960 + $0x48] sm:$0xff]
  %v1971 = vld [vmem:[%s1960 + $0x50] sm:$0xff]
  %v1972 = vld [vmem:[%s1960 + $0x58] sm:$0xff]
  %v1973 = vld [vmem:[%s1960 + $0x60] sm:$0xff]
  %v1974 = vld [vmem:[%s1960 + $0x68] sm:$0xff]
  %v1975 = vld [vmem:[%s1960 + $0x70] sm:$0xff]
  %v1976 = vld [vmem:[%s1960 + $0x78] sm:$0xff]
  %v1977 = vld [vmem:[%s1960 + $0x80] sm:$0xff]
  %v1978 = vld [vmem:[%s1960 + $0x88] sm:$0xff]
  %v1979 = vld [vmem:[%s1960 + $0x90] sm:$0xff]
  %v1980 = vld [vmem:[%s1960 + $0x98] sm:$0xff]
  %v2001 = vunpack.c.l.b16 %v1961
  %v2002 = vunpack.c.h.b16 %v1961
  %v2003 = vunpack.c.l.b16 %v1962
  %v2004 = vunpack.c.h.b16 %v1962
  %v2005 = vunpack.c.l.b16 %v1963
  %v2006 = vunpack.c.h.b16 %v1963
  %v2007 = vunpack.c.l.b16 %v1964
  %v2008 = vunpack.c.h.b16 %v1964
  %v2009 = vunpack.c.l.b16 %v1965
  %v2010 = vunpack.c.h.b16 %v1965
  %v2011 = vunpack.c.l.b16 %v1966
  %v2012 = vunpack.c.h.b16 %v1966
  %v2013 = vunpack.c.l.b16 %v1967
  %v2014 = vunpack.c.h.b16 %v1967
  %v2015 = vunpack.c.l.b16 %v1968
  %v2016 = vunpack.c.h.b16 %v1968
  %v2017 = vunpack.c.l.b16 %v1969
  %v2018 = vunpack.c.h.b16 %v1969
  %v2019 = vunpack.c.l.b16 %v1970
  %v2020 = vunpack.c.h.b16 %v1970
  %v2021 = vunpack.c.l.b16 %v1971
  %v2022 = vunpack.c.h.b16 %v1971
  %v2023 = vunpack.c.l.b16 %v1972
  %v2024 = vunpack.c.h.b16 %v1972
  %v2025 = vunpack.c.l.b16 %v1973
  %v2026 = vunpack.c.h.b16 %v1973
  %v2027 = vunpack.c.l.b16 %v1974
  %v2028 = vunpack.c.h.b16 %v1974
  %v2029 = vunpack.c.l.b16 %v1975
  %v2030 = vunpack.c.h.b16 %v1975
  %v2031 = vunpack.c.l.b16 %v1976
  %v2032 = vunpack.c.h.b16 %v1976
  %v2033 = vunpack.c.l.b16 %v1977
  %v2034 = vunpack.c.h.b16 %v1977
  %v2035 = vunpack.c.l.b16 %v1978
  %v2036 = vunpack.c.h.b16 %v1978
  %v2037 = vunpack.c.l.b16 %v1979
  %v2038 = vunpack.c.h.b16 %v1979
  %v2039 = vunpack.c.l.b16 %v1980
  %v2040 = vunpack.c.h.b16 %v1980
  %v2041 = vpack.c.b16 %v2003, %v2001
  %v2042 = vpack.c.b16 %v2004, %v2002
  %v2043 = vpack.c.b16 %v2007, %v2005
  %v2044 = vpack.c.b16 %v2008, %v2006
  %v2045 = vpack.c.b16 %v2011, %v2009
  %v2046 = vpack.c.b16 %v2012, %v2010
  %v2047 = vpack.c.b16 %v2015, %v2013
  %v2048 = vpack.c.b16 %v2016, %v2014
  %v2049 = vpack.c.b16 %v2019, %v2017
  %v2050 = vpack.c.b16 %v2020, %v2018
  %v2051 = vpack.c.b16 %v2023, %v2021
  %v2052 = vpack.c.b16 %v2024, %v2022
  %v2053 = vpack.c.b16 %v2027, %v2025
  %v2054 = vpack.c.b16 %v2028, %v2026
  %v2055 = vpack.c.b16 %v2031, %v2029
  %v2056 = vpack.c.b16 %v2032, %v2030
  %v2057 = vpack.c.b16 %v2035, %v2033
  %v2058 = vpack.c.b16 %v2036, %v2034
  %v2059 = vpack.c.b16 %v2039, %v2037
  %v2060 = vpack.c.b16 %v2040, %v2038
  %v2082 = vsel %vm1713, %v1959, 0
  %2084 = vmatprep.subr.bf16.mxu0 %v2042
  %2085 = vmatpush1.bf16.msra.mxu0 %v2041
  %2086 = vmatprep.subr.bf16.mxu0 %v2044
  %2087 = vmatpush1.bf16.msra.mxu0 %v2043
  %2088 = vmatprep.subr.bf16.mxu0 %v2046
  %2089 = vmatpush1.bf16.msra.mxu0 %v2045
  %2090 = vmatprep.subr.bf16.mxu0 %v2048
  %2091 = vmatpush1.bf16.msra.mxu0 %v2047
  %2092 = vmatprep.subr.bf16.mxu0 %v2050
  %2093 = vmatpush1.bf16.msra.mxu0 %v2049
  %2094 = vmatprep.subr.bf16.mxu0 %v2052
  %2095 = vmatpush1.bf16.msra.mxu0 %v2051
  %2096 = vmatprep.subr.bf16.mxu0 %v2054
  %2097 = vmatpush1.bf16.msra.mxu0 %v2053
  %2098 = vmatprep.subr.bf16.mxu0 %v2056
  %2099 = vmatpush1.bf16.msra.mxu0 %v2055
  %2100 = vmatprep.subr.bf16.mxu0 %v2058
  %2101 = vmatpush1.bf16.msra.mxu0 %v2057
  %2102 = vmatprep.subr.bf16.mxu0 %v2060
  %2103 = vmatpush1.bf16.msra.mxu0 %v2059
  %2104 = vmatprep.subr.bf16.mxu0 0
  %2105 = vmatpush1.bf16.msra.mxu0 0
  %2106 = vmatprep.subr.bf16.mxu0 0
  %2107 = vmatpush1.bf16.msra.mxu0 0
  %2108 = vmatprep.subr.bf16.mxu0 0
  %2109 = vmatpush1.bf16.msra.mxu0 0
  %2110 = vmatprep.subr.bf16.mxu0 0
  %2111 = vmatpush1.bf16.msra.mxu0 0
  %2112 = vmatprep.subr.bf16.mxu0 0
  %2113 = vmatpush1.bf16.msra.mxu0 0
  %2114 = vmatprep.subr.bf16.mxu0 0
  %2115 = vmatpush1.bf16.msra.mxu0 0
  %2116 = vmatprep.mubr.bf16.mxu0 %v1890
  %2117 = vmatmul.mubr.bf16.gmra.mrb[0].mxu0 %v1562
  %v2118 = vpop.f32.mrb[0].mxu0
  %v2119 = vadd.f32 0.0, %v2118
  %v2120 = vpop.f32.mrb[0].mxu0
  %v2121 = vadd.f32 0.0, %v2120
  %v2122 = vpop.f32.mrb[0].mxu0
  %v2123 = vadd.f32 0.0, %v2122
  %v2124 = vpop.f32.mrb[0].mxu0
  %v2125 = vadd.f32 0.0, %v2124
  %2126 = vmatprep.mubr.bf16.mxu0 %v1893
  %2127 = vmatmul.mubr.bf16.gmra.mrb[0].mxu0 %v1564
  %v2128 = vpop.f32.mrb[0].mxu0
  %v2129 = vadd.f32 0.0, %v2128
  %v2130 = vpop.f32.mrb[0].mxu0
  %v2131 = vadd.f32 0.0, %v2130
  %v2132 = vpop.f32.mrb[0].mxu0
  %v2133 = vadd.f32 0.0, %v2132
  %v2134 = vpop.f32.mrb[0].mxu0
  %v2135 = vadd.f32 0.0, %v2134
  %2136 = vmatprep.mubr.bf16.mxu0 %v2082
  %2137 = vmatmul.mubr.bf16.gmra.mrb[0].mxu0 %v1958
  %v2138 = vpop.f32.mrb[0].mxu0
  %v2139 = vadd.f32 0.0, %v2138
  %v2140 = vpop.f32.mrb[0].mxu0
  %v2141 = vadd.f32 0.0, %v2140
  %v2142 = vpop.f32.mrb[0].mxu0
  %v2143 = vadd.f32 0.0, %v2142
  %v2144 = vpop.f32.mrb[0].mxu0
  %v2145 = vadd.f32 0.0, %v2144
  %2146 = vdwg.mxu0
  %v2147 = vadd.f32 %v1930, %v2119
  %v2148 = vadd.f32 %v1932, %v2121
  %v2149 = vadd.f32 %v1934, %v2123
  %v2150 = vadd.f32 %v1936, %v2125
  %v2151 = vadd.f32 %v1940, %v2129
  %v2152 = vadd.f32 %v1942, %v2131
  %v2153 = vadd.f32 %v1944, %v2133
  %v2154 = vadd.f32 %v1946, %v2135
  %v2155 = vadd.f32 %v1950, %v2139
  %v2156 = vadd.f32 %v1952, %v2141
  %v2157 = vadd.f32 %v1954, %v2143
  %v2158 = vadd.f32 %v1956, %v2145
  %v2159 = vpack.c.bf16 %v1556, %v1554
  %v2160 = vpack.c.bf16 %v1557, %v1555
  %s2161 = scalar_lea.vmem %s5, 480
  %v2162 = vld [vmem:[%s2161] sm:$0xff]
  %v2163 = vld [vmem:[%s2161 + $0x8] sm:$0xff]
  %v2164 = vld [vmem:[%s2161 + $0x10] sm:$0xff]
  %v2165 = vld [vmem:[%s2161 + $0x18] sm:$0xff]
  %v2166 = vld [vmem:[%s2161 + $0x20] sm:$0xff]
  %v2167 = vld [vmem:[%s2161 + $0x28] sm:$0xff]
  %v2168 = vld [vmem:[%s2161 + $0x30] sm:$0xff]
  %v2169 = vld [vmem:[%s2161 + $0x38] sm:$0xff]
  %v2170 = vld [vmem:[%s2161 + $0x40] sm:$0xff]
  %v2171 = vld [vmem:[%s2161 + $0x48] sm:$0xff]
  %v2172 = vld [vmem:[%s2161 + $0x50] sm:$0xff]
  %v2173 = vld [vmem:[%s2161 + $0x58] sm:$0xff]
  %v2174 = vld [vmem:[%s2161 + $0x60] sm:$0xff]
  %v2175 = vld [vmem:[%s2161 + $0x68] sm:$0xff]
  %v2176 = vld [vmem:[%s2161 + $0x70] sm:$0xff]
  %v2177 = vld [vmem:[%s2161 + $0x78] sm:$0xff]
  %v2178 = vld [vmem:[%s2161 + $0x80] sm:$0xff]
  %v2179 = vld [vmem:[%s2161 + $0x88] sm:$0xff]
  %v2180 = vld [vmem:[%s2161 + $0x90] sm:$0xff]
  %v2181 = vld [vmem:[%s2161 + $0x98] sm:$0xff]
  %v2202 = vunpack.c.l.b16 %v2162
  %v2203 = vunpack.c.h.b16 %v2162
  %v2204 = vunpack.c.l.b16 %v2163
  %v2205 = vunpack.c.h.b16 %v2163
  %v2206 = vunpack.c.l.b16 %v2164
  %v2207 = vunpack.c.h.b16 %v2164
  %v2208 = vunpack.c.l.b16 %v2165
  %v2209 = vunpack.c.h.b16 %v2165
  %v2210 = vunpack.c.l.b16 %v2166
  %v2211 = vunpack.c.h.b16 %v2166
  %v2212 = vunpack.c.l.b16 %v2167
  %v2213 = vunpack.c.h.b16 %v2167
  %v2214 = vunpack.c.l.b16 %v2168
  %v2215 = vunpack.c.h.b16 %v2168
  %v2216 = vunpack.c.l.b16 %v2169
  %v2217 = vunpack.c.h.b16 %v2169
  %v2218 = vunpack.c.l.b16 %v2170
  %v2219 = vunpack.c.h.b16 %v2170
  %v2220 = vunpack.c.l.b16 %v2171
  %v2221 = vunpack.c.h.b16 %v2171
  %v2222 = vunpack.c.l.b16 %v2172
  %v2223 = vunpack.c.h.b16 %v2172
  %v2224 = vunpack.c.l.b16 %v2173
  %v2225 = vunpack.c.h.b16 %v2173
  %v2226 = vunpack.c.l.b16 %v2174
  %v2227 = vunpack.c.h.b16 %v2174
  %v2228 = vunpack.c.l.b16 %v2175
  %v2229 = vunpack.c.h.b16 %v2175
  %v2230 = vunpack.c.l.b16 %v2176
  %v2231 = vunpack.c.h.b16 %v2176
  %v2232 = vunpack.c.l.b16 %v2177
  %v2233 = vunpack.c.h.b16 %v2177
  %v2234 = vunpack.c.l.b16 %v2178
  %v2235 = vunpack.c.h.b16 %v2178
  %v2236 = vunpack.c.l.b16 %v2179
  %v2237 = vunpack.c.h.b16 %v2179
  %v2238 = vunpack.c.l.b16 %v2180
  %v2239 = vunpack.c.h.b16 %v2180
  %v2240 = vunpack.c.l.b16 %v2181
  %v2241 = vunpack.c.h.b16 %v2181
  %v2242 = vpack.c.b16 %v2204, %v2202
  %v2243 = vpack.c.b16 %v2205, %v2203
  %v2244 = vpack.c.b16 %v2208, %v2206
  %v2245 = vpack.c.b16 %v2209, %v2207
  %v2246 = vpack.c.b16 %v2212, %v2210
  %v2247 = vpack.c.b16 %v2213, %v2211
  %v2248 = vpack.c.b16 %v2216, %v2214
  %v2249 = vpack.c.b16 %v2217, %v2215
  %v2250 = vpack.c.b16 %v2220, %v2218
  %v2251 = vpack.c.b16 %v2221, %v2219
  %v2252 = vpack.c.b16 %v2224, %v2222
  %v2253 = vpack.c.b16 %v2225, %v2223
  %v2254 = vpack.c.b16 %v2228, %v2226
  %v2255 = vpack.c.b16 %v2229, %v2227
  %v2256 = vpack.c.b16 %v2232, %v2230
  %v2257 = vpack.c.b16 %v2233, %v2231
  %v2258 = vpack.c.b16 %v2236, %v2234
  %v2259 = vpack.c.b16 %v2237, %v2235
  %v2260 = vpack.c.b16 %v2240, %v2238
  %v2261 = vpack.c.b16 %v2241, %v2239
  %v2283 = vsel %vm1713, %v2160, 0
  %2285 = vmatprep.subr.bf16.mxu0 %v2243
  %2286 = vmatpush1.bf16.msra.mxu0 %v2242
  %2287 = vmatprep.subr.bf16.mxu0 %v2245
  %2288 = vmatpush1.bf16.msra.mxu0 %v2244
  %2289 = vmatprep.subr.bf16.mxu0 %v2247
  %2290 = vmatpush1.bf16.msra.mxu0 %v2246
  %2291 = vmatprep.subr.bf16.mxu0 %v2249
  %2292 = vmatpush1.bf16.msra.mxu0 %v2248
  %2293 = vmatprep.subr.bf16.mxu0 %v2251
  %2294 = vmatpush1.bf16.msra.mxu0 %v2250
  %2295 = vmatprep.subr.bf16.mxu0 %v2253
  %2296 = vmatpush1.bf16.msra.mxu0 %v2252
  %2297 = vmatprep.subr.bf16.mxu0 %v2255
  %2298 = vmatpush1.bf16.msra.mxu0 %v2254
  %2299 = vmatprep.subr.bf16.mxu0 %v2257
  %2300 = vmatpush1.bf16.msra.mxu0 %v2256
  %2301 = vmatprep.subr.bf16.mxu0 %v2259
  %2302 = vmatpush1.bf16.msra.mxu0 %v2258
  %2303 = vmatprep.subr.bf16.mxu0 %v2261
  %2304 = vmatpush1.bf16.msra.mxu0 %v2260
  %2305 = vmatprep.subr.bf16.mxu0 0
  %2306 = vmatpush1.bf16.msra.mxu0 0
  %2307 = vmatprep.subr.bf16.mxu0 0
  %2308 = vmatpush1.bf16.msra.mxu0 0
  %2309 = vmatprep.subr.bf16.mxu0 0
  %2310 = vmatpush1.bf16.msra.mxu0 0
  %2311 = vmatprep.subr.bf16.mxu0 0
  %2312 = vmatpush1.bf16.msra.mxu0 0
  %2313 = vmatprep.subr.bf16.mxu0 0
  %2314 = vmatpush1.bf16.msra.mxu0 0
  %2315 = vmatprep.subr.bf16.mxu0 0
  %2316 = vmatpush1.bf16.msra.mxu0 0
  %2317 = vmatprep.mubr.bf16.mxu0 %v1718
  %2318 = vmatmul.mubr.bf16.gmra.mrb[0].mxu0 %v1588
  %v2319 = vpop.f32.mrb[0].mxu0
  %v2320 = vadd.f32 0.0, %v2319
  %v2321 = vpop.f32.mrb[0].mxu0
  %v2322 = vadd.f32 0.0, %v2321
  %v2323 = vpop.f32.mrb[0].mxu0
  %v2324 = vadd.f32 0.0, %v2323
  %v2325 = vpop.f32.mrb[0].mxu0
  %v2326 = vadd.f32 0.0, %v2325
  %2327 = vmatprep.mubr.bf16.mxu0 %v1721
  %2328 = vmatmul.mubr.bf16.gmra.mrb[0].mxu0 %v1590
  %v2329 = vpop.f32.mrb[0].mxu0
  %v2330 = vadd.f32 0.0, %v2329
  %v2331 = vpop.f32.mrb[0].mxu0
  %v2332 = vadd.f32 0.0, %v2331
  %v2333 = vpop.f32.mrb[0].mxu0
  %v2334 = vadd.f32 0.0, %v2333
  %v2335 = vpop.f32.mrb[0].mxu0
  %v2336 = vadd.f32 0.0, %v2335
  %2337 = vmatprep.mubr.bf16.mxu0 %v2283
  %2338 = vmatmul.mubr.bf16.gmra.mrb[0].mxu0 %v2159
  %v2339 = vpop.f32.mrb[0].mxu0
  %v2340 = vadd.f32 0.0, %v2339
  %v2341 = vpop.f32.mrb[0].mxu0
  %v2342 = vadd.f32 0.0, %v2341
  %v2343 = vpop.f32.mrb[0].mxu0
  %v2344 = vadd.f32 0.0, %v2343
  %v2345 = vpop.f32.mrb[0].mxu0
  %v2346 = vadd.f32 0.0, %v2345
  %2347 = vdwg.mxu0
  %v2348 = vadd.f32 %v2147, %v2320
  %v2349 = vadd.f32 %v2148, %v2322
  %v2350 = vadd.f32 %v2149, %v2324
  %v2351 = vadd.f32 %v2150, %v2326
  %v2352 = vadd.f32 %v2151, %v2330
  %v2353 = vadd.f32 %v2152, %v2332
  %v2354 = vadd.f32 %v2153, %v2334
  %v2355 = vadd.f32 %v2154, %v2336
  %v2356 = vadd.f32 %v2155, %v2340
  %v2357 = vadd.f32 %v2156, %v2342
  %v2358 = vadd.f32 %v2157, %v2344
  %v2359 = vadd.f32 %v2158, %v2346
  %v2360 = vpack.c.bf16 %v1558, %v1556
  %v2361 = vpack.c.bf16 %v1559, %v1557
  %s2362 = scalar_lea.vmem %s5, 640
  %v2363 = vld [vmem:[%s2362] sm:$0xff]
  %v2364 = vld [vmem:[%s2362 + $0x8] sm:$0xff]
  %v2365 = vld [vmem:[%s2362 + $0x10] sm:$0xff]
  %v2366 = vld [vmem:[%s2362 + $0x18] sm:$0xff]
  %v2367 = vld [vmem:[%s2362 + $0x20] sm:$0xff]
  %v2368 = vld [vmem:[%s2362 + $0x28] sm:$0xff]
  %v2369 = vld [vmem:[%s2362 + $0x30] sm:$0xff]
  %v2370 = vld [vmem:[%s2362 + $0x38] sm:$0xff]
  %v2371 = vld [vmem:[%s2362 + $0x40] sm:$0xff]
  %v2372 = vld [vmem:[%s2362 + $0x48] sm:$0xff]
  %v2373 = vld [vmem:[%s2362 + $0x50] sm:$0xff]
  %v2374 = vld [vmem:[%s2362 + $0x58] sm:$0xff]
  %v2375 = vld [vmem:[%s2362 + $0x60] sm:$0xff]
  %v2376 = vld [vmem:[%s2362 + $0x68] sm:$0xff]
  %v2377 = vld [vmem:[%s2362 + $0x70] sm:$0xff]
  %v2378 = vld [vmem:[%s2362 + $0x78] sm:$0xff]
  %v2379 = vld [vmem:[%s2362 + $0x80] sm:$0xff]
  %v2380 = vld [vmem:[%s2362 + $0x88] sm:$0xff]
  %v2381 = vld [vmem:[%s2362 + $0x90] sm:$0xff]
  %v2382 = vld [vmem:[%s2362 + $0x98] sm:$0xff]
  %v2403 = vunpack.c.l.b16 %v2363
  %v2404 = vunpack.c.h.b16 %v2363
  %v2405 = vunpack.c.l.b16 %v2364
  %v2406 = vunpack.c.h.b16 %v2364
  %v2407 = vunpack.c.l.b16 %v2365
  %v2408 = vunpack.c.h.b16 %v2365
  %v2409 = vunpack.c.l.b16 %v2366
  %v2410 = vunpack.c.h.b16 %v2366
  %v2411 = vunpack.c.l.b16 %v2367
  %v2412 = vunpack.c.h.b16 %v2367
  %v2413 = vunpack.c.l.b16 %v2368
  %v2414 = vunpack.c.h.b16 %v2368
  %v2415 = vunpack.c.l.b16 %v2369
  %v2416 = vunpack.c.h.b16 %v2369
  %v2417 = vunpack.c.l.b16 %v2370
  %v2418 = vunpack.c.h.b16 %v2370
  %v2419 = vunpack.c.l.b16 %v2371
  %v2420 = vunpack.c.h.b16 %v2371
  %v2421 = vunpack.c.l.b16 %v2372
  %v2422 = vunpack.c.h.b16 %v2372
  %v2423 = vunpack.c.l.b16 %v2373
  %v2424 = vunpack.c.h.b16 %v2373
  %v2425 = vunpack.c.l.b16 %v2374
  %v2426 = vunpack.c.h.b16 %v2374
  %v2427 = vunpack.c.l.b16 %v2375
  %v2428 = vunpack.c.h.b16 %v2375
  %v2429 = vunpack.c.l.b16 %v2376
  %v2430 = vunpack.c.h.b16 %v2376
  %v2431 = vunpack.c.l.b16 %v2377
  %v2432 = vunpack.c.h.b16 %v2377
  %v2433 = vunpack.c.l.b16 %v2378
  %v2434 = vunpack.c.h.b16 %v2378
  %v2435 = vunpack.c.l.b16 %v2379
  %v2436 = vunpack.c.h.b16 %v2379
  %v2437 = vunpack.c.l.b16 %v2380
  %v2438 = vunpack.c.h.b16 %v2380
  %v2439 = vunpack.c.l.b16 %v2381
  %v2440 = vunpack.c.h.b16 %v2381
  %v2441 = vunpack.c.l.b16 %v2382
  %v2442 = vunpack.c.h.b16 %v2382
  %v2443 = vpack.c.b16 %v2405, %v2403
  %v2444 = vpack.c.b16 %v2406, %v2404
  %v2445 = vpack.c.b16 %v2409, %v2407
  %v2446 = vpack.c.b16 %v2410, %v2408
  %v2447 = vpack.c.b16 %v2413, %v2411
  %v2448 = vpack.c.b16 %v2414, %v2412
  %v2449 = vpack.c.b16 %v2417, %v2415
  %v2450 = vpack.c.b16 %v2418, %v2416
  %v2451 = vpack.c.b16 %v2421, %v2419
  %v2452 = vpack.c.b16 %v2422, %v2420
  %v2453 = vpack.c.b16 %v2425, %v2423
  %v2454 = vpack.c.b16 %v2426, %v2424
  %v2455 = vpack.c.b16 %v2429, %v2427
  %v2456 = vpack.c.b16 %v2430, %v2428
  %v2457 = vpack.c.b16 %v2433, %v2431
  %v2458 = vpack.c.b16 %v2434, %v2432
  %v2459 = vpack.c.b16 %v2437, %v2435
  %v2460 = vpack.c.b16 %v2438, %v2436
  %v2461 = vpack.c.b16 %v2441, %v2439
  %v2462 = vpack.c.b16 %v2442, %v2440
  %v2484 = vsel %vm1713, %v2361, 0
  %2486 = vmatprep.subr.bf16.mxu0 %v2444
  %2487 = vmatpush1.bf16.msra.mxu0 %v2443
  %2488 = vmatprep.subr.bf16.mxu0 %v2446
  %2489 = vmatpush1.bf16.msra.mxu0 %v2445
  %2490 = vmatprep.subr.bf16.mxu0 %v2448
  %2491 = vmatpush1.bf16.msra.mxu0 %v2447
  %2492 = vmatprep.subr.bf16.mxu0 %v2450
  %2493 = vmatpush1.bf16.msra.mxu0 %v2449
  %2494 = vmatprep.subr.bf16.mxu0 %v2452
  %2495 = vmatpush1.bf16.msra.mxu0 %v2451
  %2496 = vmatprep.subr.bf16.mxu0 %v2454
  %2497 = vmatpush1.bf16.msra.mxu0 %v2453
  %2498 = vmatprep.subr.bf16.mxu0 %v2456
  %2499 = vmatpush1.bf16.msra.mxu0 %v2455
  %2500 = vmatprep.subr.bf16.mxu0 %v2458
  %2501 = vmatpush1.bf16.msra.mxu0 %v2457
  %2502 = vmatprep.subr.bf16.mxu0 %v2460
  %2503 = vmatpush1.bf16.msra.mxu0 %v2459
  %2504 = vmatprep.subr.bf16.mxu0 %v2462
  %2505 = vmatpush1.bf16.msra.mxu0 %v2461
  %2506 = vmatprep.subr.bf16.mxu0 0
  %2507 = vmatpush1.bf16.msra.mxu0 0
  %2508 = vmatprep.subr.bf16.mxu0 0
  %2509 = vmatpush1.bf16.msra.mxu0 0
  %2510 = vmatprep.subr.bf16.mxu0 0
  %2511 = vmatpush1.bf16.msra.mxu0 0
  %2512 = vmatprep.subr.bf16.mxu0 0
  %2513 = vmatpush1.bf16.msra.mxu0 0
  %2514 = vmatprep.subr.bf16.mxu0 0
  %2515 = vmatpush1.bf16.msra.mxu0 0
  %2516 = vmatprep.subr.bf16.mxu0 0
  %2517 = vmatpush1.bf16.msra.mxu0 0
  %2518 = vmatprep.mubr.bf16.mxu0 %v1893
  %2519 = vmatmul.mubr.bf16.gmra.mrb[0].mxu0 %v1564
  %v2520 = vpop.f32.mrb[0].mxu0
  %v2521 = vadd.f32 0.0, %v2520
  %v2522 = vpop.f32.mrb[0].mxu0
  %v2523 = vadd.f32 0.0, %v2522
  %v2524 = vpop.f32.mrb[0].mxu0
  %v2525 = vadd.f32 0.0, %v2524
  %v2526 = vpop.f32.mrb[0].mxu0
  %v2527 = vadd.f32 0.0, %v2526
  %2528 = vmatprep.mubr.bf16.mxu0 %v2082
  %2529 = vmatmul.mubr.bf16.gmra.mrb[0].mxu0 %v1958
  %v2530 = vpop.f32.mrb[0].mxu0
  %v2531 = vadd.f32 0.0, %v2530
  %v2532 = vpop.f32.mrb[0].mxu0
  %v2533 = vadd.f32 0.0, %v2532
  %v2534 = vpop.f32.mrb[0].mxu0
  %v2535 = vadd.f32 0.0, %v2534
  %v2536 = vpop.f32.mrb[0].mxu0
  %v2537 = vadd.f32 0.0, %v2536
  %2538 = vmatprep.mubr.bf16.mxu0 %v2484
  %2539 = vmatmul.mubr.bf16.gmra.mrb[0].mxu0 %v2360
  %v2540 = vpop.f32.mrb[0].mxu0
  %v2541 = vadd.f32 0.0, %v2540
  %v2542 = vpop.f32.mrb[0].mxu0
  %v2543 = vadd.f32 0.0, %v2542
  %v2544 = vpop.f32.mrb[0].mxu0
  %v2545 = vadd.f32 0.0, %v2544
  %v2546 = vpop.f32.mrb[0].mxu0
  %v2547 = vadd.f32 0.0, %v2546
  %2548 = vdwg.mxu0
  %v2549 = vadd.f32 %v2348, %v2521
  %v2550 = vadd.f32 %v2349, %v2523
  %v2551 = vadd.f32 %v2350, %v2525
  %v2552 = vadd.f32 %v2351, %v2527
  %v2553 = vadd.f32 %v2352, %v2531
  %v2554 = vadd.f32 %v2353, %v2533
  %v2555 = vadd.f32 %v2354, %v2535
  %v2556 = vadd.f32 %v2355, %v2537
  %v2557 = vadd.f32 %v2356, %v2541
  %v2558 = vadd.f32 %v2357, %v2543
  %v2559 = vadd.f32 %v2358, %v2545
  %v2560 = vadd.f32 %v2359, %v2547
  %v2561 = vld [vmem:[%s6] sm:$0x3]
  %v2563 = vlaneseq
  %v2564 = vshrl.u32 %v2563, 7
  %v2565 = vsub.s32 0, %v2564
  %v2566 = vrot.slane %v2561, %v2565
  %v2567 = vlaneseq
  %v2568 = vshrl.u32 %v2567, 7
  %v2569 = vsub.s32 1, %v2568
  %v2570 = vrot.slane %v2561, %v2569
  %v2573 = vadd.f32 %v2549, %v2566
  %v2574 = vadd.f32 %v2550, %v2570
  %v2575 = vadd.f32 %v2551, %v2566
  %v2576 = vadd.f32 %v2552, %v2570
  %v2577 = vadd.f32 %v2553, %v2566
  %v2578 = vadd.f32 %v2554, %v2570
  %v2579 = vadd.f32 %v2555, %v2566
  %v2580 = vadd.f32 %v2556, %v2570
  %v2581 = vadd.f32 %v2557, %v2566
  %v2582 = vadd.f32 %v2558, %v2570
  %v2583 = vadd.f32 %v2559, %v2566
  %v2584 = vadd.f32 %v2560, %v2570
  %v2585 = vmax.f32 %v2573, 0.0
  %v2586 = vmax.f32 %v2574, 0.0
  %v2587 = vmax.f32 %v2575, 0.0
  %v2588 = vmax.f32 %v2576, 0.0
  %v2589 = vmax.f32 %v2577, 0.0
  %v2590 = vmax.f32 %v2578, 0.0
  %v2591 = vmax.f32 %v2579, 0.0
  %v2592 = vmax.f32 %v2580, 0.0
  %v2593 = vmax.f32 %v2581, 0.0
  %v2594 = vmax.f32 %v2582, 0.0
  %v2595 = vmax.f32 %v2583, 0.0
  %v2596 = vmax.f32 %v2584, 0.0
  %v2597 = vpack.c.bf16 %v2585, %v2585
  %v2598 = vpack.c.bf16 %v2586, %v2586
  %v2601 = vunpack.c.l.b16 %v2597
  %v2602 = vunpack.c.l.b16 %v2598
  %v2603 = vpack.c.b16 %v2602, %v2601
  %2605 = vst [vmem:[#allocation2] sm:$0xff] %v2603
  %v2606 = vpack.c.bf16 %v2587, %v2587
  %v2607 = vpack.c.bf16 %v2588, %v2588
  %v2610 = vunpack.c.l.b16 %v2606
  %v2611 = vunpack.c.l.b16 %v2607
  %v2612 = vpack.c.b16 %v2611, %v2610
  %2614 = vst [vmem:[#allocation2 + $0x8] sm:$0xff] %v2612
  %v2615 = vpack.c.bf16 %v2589, %v2589
  %v2616 = vpack.c.bf16 %v2590, %v2590
  %v2619 = vunpack.c.l.b16 %v2615
  %v2620 = vunpack.c.l.b16 %v2616
  %v2621 = vpack.c.b16 %v2620, %v2619
  %2623 = vst [vmem:[#allocation2 + $0x10] sm:$0xff] %v2621
  %v2624 = vpack.c.bf16 %v2591, %v2591
  %v2625 = vpack.c.bf16 %v2592, %v2592
  %v2628 = vunpack.c.l.b16 %v2624
  %v2629 = vunpack.c.l.b16 %v2625
  %v2630 = vpack.c.b16 %v2629, %v2628
  %2632 = vst [vmem:[#allocation2 + $0x18] sm:$0xff] %v2630
  %v2633 = vpack.c.bf16 %v2593, %v2593
  %v2634 = vpack.c.bf16 %v2594, %v2594
  %v2637 = vunpack.c.l.b16 %v2633
  %v2638 = vunpack.c.l.b16 %v2634
  %v2639 = vpack.c.b16 %v2638, %v2637
  %2641 = vst [vmem:[#allocation2 + $0x20] sm:$0xff] %v2639
  %v2642 = vpack.c.bf16 %v2595, %v2595
  %v2643 = vpack.c.bf16 %v2596, %v2596
  %v2646 = vunpack.c.l.b16 %v2642
  %v2647 = vunpack.c.l.b16 %v2643
  %v2648 = vpack.c.b16 %v2647, %v2646
  %2650 = vst [vmem:[#allocation2 + $0x28] sm:$0xff] %v2648
  %v2651 = vld [vmem:[#allocation2] sm:$0xff]
  %v2652 = vld [vmem:[#allocation2 + $0x8] sm:$0xff]
  %v2653 = vld [vmem:[#allocation2 + $0x10] sm:$0xff]
  %v2654 = vld [vmem:[#allocation2 + $0x18] sm:$0xff]
  %v2655 = vld [vmem:[#allocation2 + $0x20] sm:$0xff]
  %v2656 = vld [vmem:[#allocation2 + $0x28] sm:$0xff]
  %v2657 = vld [vmem:[%s7] sm:$0xf]
  %v2658 = vld [vmem:[%s7 + $0x4] sm:$0xf]
  %v2659 = vld [vmem:[%s7 + $0x8] sm:$0xf]
  %v2660 = vld [vmem:[%s7 + $0xc] sm:$0xf]
  %v2661 = vld [vmem:[%s7 + $0x10] sm:$0xf]
  %v2662 = vld [vmem:[%s7 + $0x14] sm:$0xf]
  %v2663 = vld [vmem:[%s7 + $0x18] sm:$0xf]
  %v2664 = vld [vmem:[%s7 + $0x1c] sm:$0xf]
  %v2665 = vld [vmem:[%s7 + $0x20] sm:$0xf]
  %v2666 = vld [vmem:[%s7 + $0x24] sm:$0xf]
  %v2667 = vld [vmem:[%s7 + $0x28] sm:$0xf]
  %v2668 = vld [vmem:[%s7 + $0x2c] sm:$0xf]
  %v2669 = vld [vmem:[%s7 + $0x30] sm:$0xf]
  %v2670 = vld [vmem:[%s7 + $0x34] sm:$0xf]
  %v2671 = vld [vmem:[%s7 + $0x38] sm:$0xf]
  %v2672 = vld [vmem:[%s7 + $0x3c] sm:$0xf]
  %v2673 = vld [vmem:[%s7 + $0x40] sm:$0xf]
  %v2674 = vld [vmem:[%s7 + $0x44] sm:$0xf]
  %v2675 = vld [vmem:[%s7 + $0x48] sm:$0xf]
  %v2676 = vld [vmem:[%s7 + $0x4c] sm:$0xf]
  %v2677 = vld [vmem:[%s7 + $0x50] sm:$0xf]
  %v2678 = vld [vmem:[%s7 + $0x54] sm:$0xf]
  %v2679 = vld [vmem:[%s7 + $0x58] sm:$0xf]
  %v2680 = vld [vmem:[%s7 + $0x5c] sm:$0xf]
  %v2681 = vld [vmem:[%s7 + $0x60] sm:$0xf]
  %v2682 = vld [vmem:[%s7 + $0x64] sm:$0xf]
  %v2683 = vld [vmem:[%s7 + $0x68] sm:$0xf]
  %v2684 = vld [vmem:[%s7 + $0x6c] sm:$0xf]
  %v2685 = vld [vmem:[%s7 + $0x70] sm:$0xf]
  %v2686 = vld [vmem:[%s7 + $0x74] sm:$0xf]
  %v2687 = vld [vmem:[%s7 + $0x78] sm:$0xf]
  %v2688 = vld [vmem:[%s7 + $0x7c] sm:$0xf]
  %v2689 = vld [vmem:[%s7 + $0x80] sm:$0xf]
  %v2690 = vld [vmem:[%s7 + $0x84] sm:$0xf]
  %v2691 = vld [vmem:[%s7 + $0x88] sm:$0xf]
  %v2692 = vld [vmem:[%s7 + $0x8c] sm:$0xf]
  %v2693 = vld [vmem:[%s7 + $0x90] sm:$0xf]
  %v2694 = vld [vmem:[%s7 + $0x94] sm:$0xf]
  %v2695 = vld [vmem:[%s7 + $0x98] sm:$0xf]
  %v2696 = vld [vmem:[%s7 + $0x9c] sm:$0xf]
  %v2697 = vld [vmem:[%s7 + $0xa0] sm:$0xf]
  %v2698 = vld [vmem:[%s7 + $0xa4] sm:$0xf]
  %v2699 = vld [vmem:[%s7 + $0xa8] sm:$0xf]
  %v2700 = vld [vmem:[%s7 + $0xac] sm:$0xf]
  %v2701 = vld [vmem:[%s7 + $0xb0] sm:$0xf]
  %v2702 = vld [vmem:[%s7 + $0xb4] sm:$0xf]
  %v2703 = vld [vmem:[%s7 + $0xb8] sm:$0xf]
  %v2704 = vld [vmem:[%s7 + $0xbc] sm:$0xf]
  %v2705 = vld [vmem:[%s7 + $0xc0] sm:$0xf]
  %v2706 = vld [vmem:[%s7 + $0xc4] sm:$0xf]
  %v2707 = vld [vmem:[%s7 + $0xc8] sm:$0xf]
  %v2708 = vld [vmem:[%s7 + $0xcc] sm:$0xf]
  %v2709 = vld [vmem:[%s7 + $0xd0] sm:$0xf]
  %v2710 = vld [vmem:[%s7 + $0xd4] sm:$0xf]
  %v2711 = vld [vmem:[%s7 + $0xd8] sm:$0xf]
  %v2712 = vld [vmem:[%s7 + $0xdc] sm:$0xf]
  %v2713 = vld [vmem:[%s7 + $0xe0] sm:$0xf]
  %v2714 = vld [vmem:[%s7 + $0xe4] sm:$0xf]
  %v2715 = vld [vmem:[%s7 + $0xe8] sm:$0xf]
  %v2716 = vld [vmem:[%s7 + $0xec] sm:$0xf]
  %v2717 = vld [vmem:[%s7 + $0xf0] sm:$0xf]
  %v2718 = vld [vmem:[%s7 + $0xf4] sm:$0xf]
  %v2719 = vld [vmem:[%s7 + $0xf8] sm:$0xf]
  %v2720 = vld [vmem:[%s7 + $0xfc] sm:$0xf]
  %v2721 = vld [vmem:[%s7 + $0x100] sm:$0xf]
  %v2722 = vld [vmem:[%s7 + $0x104] sm:$0xf]
  %v2723 = vld [vmem:[%s7 + $0x108] sm:$0xf]
  %v2724 = vld [vmem:[%s7 + $0x10c] sm:$0xf]
  %v2725 = vld [vmem:[%s7 + $0x110] sm:$0xf]
  %v2726 = vld [vmem:[%s7 + $0x114] sm:$0xf]
  %v2727 = vld [vmem:[%s7 + $0x118] sm:$0xf]
  %v2728 = vld [vmem:[%s7 + $0x11c] sm:$0xf]
  %v2729 = vld [vmem:[%s7 + $0x120] sm:$0xf]
  %v2730 = vld [vmem:[%s7 + $0x124] sm:$0xf]
  %v2731 = vld [vmem:[%s7 + $0x128] sm:$0xf]
  %v2732 = vld [vmem:[%s7 + $0x12c] sm:$0xf]
  %v2733 = vld [vmem:[%s7 + $0x130] sm:$0xf]
  %v2734 = vld [vmem:[%s7 + $0x134] sm:$0xf]
  %v2735 = vld [vmem:[%s7 + $0x138] sm:$0xf]
  %v2736 = vld [vmem:[%s7 + $0x13c] sm:$0xf]
  %v2737 = vld [vmem:[%s7 + $0x140] sm:$0xf]
  %v2738 = vld [vmem:[%s7 + $0x144] sm:$0xf]
  %v2739 = vld [vmem:[%s7 + $0x148] sm:$0xf]
  %v2740 = vld [vmem:[%s7 + $0x14c] sm:$0xf]
  %v2741 = vld [vmem:[%s7 + $0x150] sm:$0xf]
  %v2742 = vld [vmem:[%s7 + $0x154] sm:$0xf]
  %v2743 = vld [vmem:[%s7 + $0x158] sm:$0xf]
  %v2744 = vld [vmem:[%s7 + $0x15c] sm:$0xf]
  %v2745 = vld [vmem:[%s7 + $0x160] sm:$0xf]
  %v2746 = vld [vmem:[%s7 + $0x164] sm:$0xf]
  %v2747 = vld [vmem:[%s7 + $0x168] sm:$0xf]
  %v2748 = vld [vmem:[%s7 + $0x16c] sm:$0xf]
  %v2749 = vld [vmem:[%s7 + $0x170] sm:$0xf]
  %v2750 = vld [vmem:[%s7 + $0x174] sm:$0xf]
  %v2751 = vld [vmem:[%s7 + $0x178] sm:$0xf]
  %v2752 = vld [vmem:[%s7 + $0x17c] sm:$0xf]
  %v2753 = vld [vmem:[%s7 + $0x180] sm:$0xf]
  %v2754 = vld [vmem:[%s7 + $0x184] sm:$0xf]
  %v2755 = vld [vmem:[%s7 + $0x188] sm:$0xf]
  %v2756 = vld [vmem:[%s7 + $0x18c] sm:$0xf]
  %v2757 = vld [vmem:[%s7 + $0x190] sm:$0xf]
  %v2758 = vld [vmem:[%s7 + $0x194] sm:$0xf]
  %v2759 = vld [vmem:[%s7 + $0x198] sm:$0xf]
  %v2760 = vld [vmem:[%s7 + $0x19c] sm:$0xf]
  %v2761 = vld [vmem:[%s7 + $0x1a0] sm:$0xf]
  %v2762 = vld [vmem:[%s7 + $0x1a4] sm:$0xf]
  %v2763 = vld [vmem:[%s7 + $0x1a8] sm:$0xf]
  %v2764 = vld [vmem:[%s7 + $0x1ac] sm:$0xf]
  %v2765 = vld [vmem:[%s7 + $0x1b0] sm:$0xf]
  %v2766 = vld [vmem:[%s7 + $0x1b4] sm:$0xf]
  %v2767 = vld [vmem:[%s7 + $0x1b8] sm:$0xf]
  %v2768 = vld [vmem:[%s7 + $0x1bc] sm:$0xf]
  %v2769 = vld [vmem:[%s7 + $0x1c0] sm:$0xf]
  %v2770 = vld [vmem:[%s7 + $0x1c4] sm:$0xf]
  %v2771 = vld [vmem:[%s7 + $0x1c8] sm:$0xf]
  %v2772 = vld [vmem:[%s7 + $0x1cc] sm:$0xf]
  %v2773 = vld [vmem:[%s7 + $0x1d0] sm:$0xf]
  %v2774 = vld [vmem:[%s7 + $0x1d4] sm:$0xf]
  %v2775 = vld [vmem:[%s7 + $0x1d8] sm:$0xf]
  %v2776 = vld [vmem:[%s7 + $0x1dc] sm:$0xf]
  %v2777 = vld [vmem:[%s7 + $0x1e0] sm:$0xf]
  %v2778 = vld [vmem:[%s7 + $0x1e4] sm:$0xf]
  %v2779 = vld [vmem:[%s7 + $0x1e8] sm:$0xf]
  %v2780 = vld [vmem:[%s7 + $0x1ec] sm:$0xf]
  %v2781 = vld [vmem:[%s7 + $0x1f0] sm:$0xf]
  %v2782 = vld [vmem:[%s7 + $0x1f4] sm:$0xf]
  %v2783 = vld [vmem:[%s7 + $0x1f8] sm:$0xf]
  %v2784 = vld [vmem:[%s7 + $0x1fc] sm:$0xf]
  %v2785 = vld [vmem:[%s7 + $0x200] sm:$0xf]
  %v2786 = vld [vmem:[%s7 + $0x204] sm:$0xf]
  %v2787 = vld [vmem:[%s7 + $0x208] sm:$0xf]
  %v2788 = vld [vmem:[%s7 + $0x20c] sm:$0xf]
  %v2789 = vld [vmem:[%s7 + $0x210] sm:$0xf]
  %v2790 = vld [vmem:[%s7 + $0x214] sm:$0xf]
  %v2791 = vld [vmem:[%s7 + $0x218] sm:$0xf]
  %v2792 = vld [vmem:[%s7 + $0x21c] sm:$0xf]
  %v2793 = vld [vmem:[%s7 + $0x220] sm:$0xf]
  %v2794 = vld [vmem:[%s7 + $0x224] sm:$0xf]
  %v2795 = vld [vmem:[%s7 + $0x228] sm:$0xf]
  %v2796 = vld [vmem:[%s7 + $0x22c] sm:$0xf]
  %v2797 = vld [vmem:[%s7 + $0x230] sm:$0xf]
  %v2798 = vld [vmem:[%s7 + $0x234] sm:$0xf]
  %v2799 = vld [vmem:[%s7 + $0x238] sm:$0xf]
  %v2800 = vld [vmem:[%s7 + $0x23c] sm:$0xf]
  %v2801 = vld [vmem:[%s7 + $0x240] sm:$0xf]
  %v2802 = vld [vmem:[%s7 + $0x244] sm:$0xf]
  %v2803 = vld [vmem:[%s7 + $0x248] sm:$0xf]
  %v2804 = vld [vmem:[%s7 + $0x24c] sm:$0xf]
  %v2805 = vld [vmem:[%s7 + $0x250] sm:$0xf]
  %v2806 = vld [vmem:[%s7 + $0x254] sm:$0xf]
  %v2807 = vld [vmem:[%s7 + $0x258] sm:$0xf]
  %v2808 = vld [vmem:[%s7 + $0x25c] sm:$0xf]
  %v2809 = vld [vmem:[%s7 + $0x260] sm:$0xf]
  %v2810 = vld [vmem:[%s7 + $0x264] sm:$0xf]
  %v2811 = vld [vmem:[%s7 + $0x268] sm:$0xf]
  %v2812 = vld [vmem:[%s7 + $0x26c] sm:$0xf]
  %v2813 = vld [vmem:[%s7 + $0x270] sm:$0xf]
  %v2814 = vld [vmem:[%s7 + $0x274] sm:$0xf]
  %v2815 = vld [vmem:[%s7 + $0x278] sm:$0xf]
  %v2816 = vld [vmem:[%s7 + $0x27c] sm:$0xf]
  %v2817 = vld [vmem:[%s7 + $0x280] sm:$0xf]
  %v2818 = vld [vmem:[%s7 + $0x284] sm:$0xf]
  %v2819 = vld [vmem:[%s7 + $0x288] sm:$0xf]
  %v2820 = vld [vmem:[%s7 + $0x28c] sm:$0xf]
  %v2821 = vld [vmem:[%s7 + $0x290] sm:$0xf]
  %v2822 = vld [vmem:[%s7 + $0x294] sm:$0xf]
  %v2823 = vld [vmem:[%s7 + $0x298] sm:$0xf]
  %v2824 = vld [vmem:[%s7 + $0x29c] sm:$0xf]
  %v2825 = vld [vmem:[%s7 + $0x2a0] sm:$0xf]
  %v2826 = vld [vmem:[%s7 + $0x2a4] sm:$0xf]
  %v2827 = vld [vmem:[%s7 + $0x2a8] sm:$0xf]
  %v2828 = vld [vmem:[%s7 + $0x2ac] sm:$0xf]
  %v2829 = vld [vmem:[%s7 + $0x2b0] sm:$0xf]
  %v2830 = vld [vmem:[%s7 + $0x2b4] sm:$0xf]
  %v2831 = vld [vmem:[%s7 + $0x2b8] sm:$0xf]
  %v2832 = vld [vmem:[%s7 + $0x2bc] sm:$0xf]
  %v2833 = vld [vmem:[%s7 + $0x2c0] sm:$0xf]
  %v2834 = vld [vmem:[%s7 + $0x2c4] sm:$0xf]
  %v2835 = vld [vmem:[%s7 + $0x2c8] sm:$0xf]
  %v2836 = vld [vmem:[%s7 + $0x2cc] sm:$0xf]
  %v2837 = vld [vmem:[%s7 + $0x2d0] sm:$0xf]
  %v2838 = vld [vmem:[%s7 + $0x2d4] sm:$0xf]
  %v2839 = vld [vmem:[%s7 + $0x2d8] sm:$0xf]
  %v2840 = vld [vmem:[%s7 + $0x2dc] sm:$0xf]
  %v2841 = vld [vmem:[%s7 + $0x2e0] sm:$0xf]
  %v2842 = vld [vmem:[%s7 + $0x2e4] sm:$0xf]
  %v2843 = vld [vmem:[%s7 + $0x2e8] sm:$0xf]
  %v2844 = vld [vmem:[%s7 + $0x2ec] sm:$0xf]
  %v2845 = vld [vmem:[%s7 + $0x2f0] sm:$0xf]
  %v2846 = vld [vmem:[%s7 + $0x2f4] sm:$0xf]
  %v2847 = vld [vmem:[%s7 + $0x2f8] sm:$0xf]
  %v2848 = vld [vmem:[%s7 + $0x2fc] sm:$0xf]
  %v2849 = vld [vmem:[%s8] sm:$0x1]
  %v2851 = vlaneseq
  %v2852 = vshrl.u32 %v2851, 7
  %v2853 = vsub.s32 0, %v2852
  %v2854 = vrot.slane %v2849, %v2853
  %v2862 = vunpack.c.l.b16 %v2651
  %v2863 = vunpack.c.h.b16 %v2651
  %v2864 = vunpack.c.l.b16 %v2652
  %v2865 = vunpack.c.h.b16 %v2652
  %v2866 = vunpack.c.l.b16 %v2653
  %v2867 = vunpack.c.h.b16 %v2653
  %v2868 = vunpack.c.l.b16 %v2654
  %v2869 = vunpack.c.h.b16 %v2654
  %v2870 = vunpack.c.l.b16 %v2655
  %v2871 = vunpack.c.h.b16 %v2655
  %v2872 = vunpack.c.l.b16 %v2656
  %v2873 = vunpack.c.h.b16 %v2656
  %v2874 = vpack.c.b16 %v2862, %v2862
  %v2875 = vpack.c.b16 %v2863, %v2863
  %v2876 = vpack.c.b16 %v2864, %v2864
  %v2877 = vpack.c.b16 %v2865, %v2865
  %v2878 = vpack.c.b16 %v2866, %v2866
  %v2879 = vpack.c.b16 %v2867, %v2867
  %v2880 = vpack.c.b16 %v2868, %v2868
  %v2881 = vpack.c.b16 %v2869, %v2869
  %v2882 = vpack.c.b16 %v2870, %v2870
  %v2883 = vpack.c.b16 %v2871, %v2871
  %v2884 = vpack.c.b16 %v2872, %v2872
  %v2885 = vpack.c.b16 %v2873, %v2873
  %v3090 = vunpack.c.l.b16 %v2657
  %v3091 = vunpack.c.l.b16 %v2658
  %v3092 = vunpack.c.l.b16 %v2659
  %v3093 = vunpack.c.l.b16 %v2660
  %v3094 = vunpack.c.l.b16 %v2661
  %v3095 = vunpack.c.l.b16 %v2662
  %v3096 = vunpack.c.l.b16 %v2663
  %v3097 = vunpack.c.l.b16 %v2664
  %v3098 = vunpack.c.l.b16 %v2665
  %v3099 = vunpack.c.l.b16 %v2666
  %v3100 = vunpack.c.l.b16 %v2667
  %v3101 = vunpack.c.l.b16 %v2668
  %v3102 = vunpack.c.l.b16 %v2669
  %v3103 = vunpack.c.l.b16 %v2670
  %v3104 = vunpack.c.l.b16 %v2671
  %v3105 = vunpack.c.l.b16 %v2672
  %v3106 = vunpack.c.l.b16 %v2673
  %v3107 = vunpack.c.l.b16 %v2674
  %v3108 = vunpack.c.l.b16 %v2675
  %v3109 = vunpack.c.l.b16 %v2676
  %v3110 = vunpack.c.l.b16 %v2677
  %v3111 = vunpack.c.l.b16 %v2678
  %v3112 = vunpack.c.l.b16 %v2679
  %v3113 = vunpack.c.l.b16 %v2680
  %v3114 = vunpack.c.l.b16 %v2681
  %v3115 = vunpack.c.l.b16 %v2682
  %v3116 = vunpack.c.l.b16 %v2683
  %v3117 = vunpack.c.l.b16 %v2684
  %v3118 = vunpack.c.l.b16 %v2685
  %v3119 = vunpack.c.l.b16 %v2686
  %v3120 = vunpack.c.l.b16 %v2687
  %v3121 = vunpack.c.l.b16 %v2688
  %v3122 = vunpack.c.l.b16 %v2689
  %v3123 = vunpack.c.l.b16 %v2690
  %v3124 = vunpack.c.l.b16 %v2691
  %v3125 = vunpack.c.l.b16 %v2692
  %v3126 = vunpack.c.l.b16 %v2693
  %v3127 = vunpack.c.l.b16 %v2694
  %v3128 = vunpack.c.l.b16 %v2695
  %v3129 = vunpack.c.l.b16 %v2696
  %v3130 = vunpack.c.l.b16 %v2697
  %v3131 = vunpack.c.l.b16 %v2698
  %v3132 = vunpack.c.l.b16 %v2699
  %v3133 = vunpack.c.l.b16 %v2700
  %v3134 = vunpack.c.l.b16 %v2701
  %v3135 = vunpack.c.l.b16 %v2702
  %v3136 = vunpack.c.l.b16 %v2703
  %v3137 = vunpack.c.l.b16 %v2704
  %v3138 = vunpack.c.l.b16 %v2705
  %v3139 = vunpack.c.l.b16 %v2706
  %v3140 = vunpack.c.l.b16 %v2707
  %v3141 = vunpack.c.l.b16 %v2708
  %v3142 = vunpack.c.l.b16 %v2709
  %v3143 = vunpack.c.l.b16 %v2710
  %v3144 = vunpack.c.l.b16 %v2711
  %v3145 = vunpack.c.l.b16 %v2712
  %v3146 = vunpack.c.l.b16 %v2713
  %v3147 = vunpack.c.l.b16 %v2714
  %v3148 = vunpack.c.l.b16 %v2715
  %v3149 = vunpack.c.l.b16 %v2716
  %v3150 = vunpack.c.l.b16 %v2717
  %v3151 = vunpack.c.l.b16 %v2718
  %v3152 = vunpack.c.l.b16 %v2719
  %v3153 = vunpack.c.l.b16 %v2720
  %v3154 = vunpack.c.l.b16 %v2721
  %v3155 = vunpack.c.l.b16 %v2722
  %v3156 = vunpack.c.l.b16 %v2723
  %v3157 = vunpack.c.l.b16 %v2724
  %v3158 = vunpack.c.l.b16 %v2725
  %v3159 = vunpack.c.l.b16 %v2726
  %v3160 = vunpack.c.l.b16 %v2727
  %v3161 = vunpack.c.l.b16 %v2728
  %v3162 = vunpack.c.l.b16 %v2729
  %v3163 = vunpack.c.l.b16 %v2730
  %v3164 = vunpack.c.l.b16 %v2731
  %v3165 = vunpack.c.l.b16 %v2732
  %v3166 = vunpack.c.l.b16 %v2733
  %v3167 = vunpack.c.l.b16 %v2734
  %v3168 = vunpack.c.l.b16 %v2735
  %v3169 = vunpack.c.l.b16 %v2736
  %v3170 = vunpack.c.l.b16 %v2737
  %v3171 = vunpack.c.l.b16 %v2738
  %v3172 = vunpack.c.l.b16 %v2739
  %v3173 = vunpack.c.l.b16 %v2740
  %v3174 = vunpack.c.l.b16 %v2741
  %v3175 = vunpack.c.l.b16 %v2742
  %v3176 = vunpack.c.l.b16 %v2743
  %v3177 = vunpack.c.l.b16 %v2744
  %v3178 = vunpack.c.l.b16 %v2745
  %v3179 = vunpack.c.l.b16 %v2746
  %v3180 = vunpack.c.l.b16 %v2747
  %v3181 = vunpack.c.l.b16 %v2748
  %v3182 = vunpack.c.l.b16 %v2749
  %v3183 = vunpack.c.l.b16 %v2750
  %v3184 = vunpack.c.l.b16 %v2751
  %v3185 = vunpack.c.l.b16 %v2752
  %v3186 = vunpack.c.l.b16 %v2753
  %v3187 = vunpack.c.l.b16 %v2754
  %v3188 = vunpack.c.l.b16 %v2755
  %v3189 = vunpack.c.l.b16 %v2756
  %v3190 = vunpack.c.l.b16 %v2757
  %v3191 = vunpack.c.l.b16 %v2758
  %v3192 = vunpack.c.l.b16 %v2759
  %v3193 = vunpack.c.l.b16 %v2760
  %v3194 = vunpack.c.l.b16 %v2761
  %v3195 = vunpack.c.l.b16 %v2762
  %v3196 = vunpack.c.l.b16 %v2763
  %v3197 = vunpack.c.l.b16 %v2764
  %v3198 = vunpack.c.l.b16 %v2765
  %v3199 = vunpack.c.l.b16 %v2766
  %v3200 = vunpack.c.l.b16 %v2767
  %v3201 = vunpack.c.l.b16 %v2768
  %v3202 = vunpack.c.l.b16 %v2769
  %v3203 = vunpack.c.l.b16 %v2770
  %v3204 = vunpack.c.l.b16 %v2771
  %v3205 = vunpack.c.l.b16 %v2772
  %v3206 = vunpack.c.l.b16 %v2773
  %v3207 = vunpack.c.l.b16 %v2774
  %v3208 = vunpack.c.l.b16 %v2775
  %v3209 = vunpack.c.l.b16 %v2776
  %v3210 = vunpack.c.l.b16 %v2777
  %v3211 = vunpack.c.l.b16 %v2778
  %v3212 = vunpack.c.l.b16 %v2779
  %v3213 = vunpack.c.l.b16 %v2780
  %v3214 = vunpack.c.l.b16 %v2781
  %v3215 = vunpack.c.l.b16 %v2782
  %v3216 = vunpack.c.l.b16 %v2783
  %v3217 = vunpack.c.l.b16 %v2784
  %v3218 = vunpack.c.l.b16 %v2785
  %v3219 = vunpack.c.l.b16 %v2786
  %v3220 = vunpack.c.l.b16 %v2787
  %v3221 = vunpack.c.l.b16 %v2788
  %v3222 = vunpack.c.l.b16 %v2789
  %v3223 = vunpack.c.l.b16 %v2790
  %v3224 = vunpack.c.l.b16 %v2791
  %v3225 = vunpack.c.l.b16 %v2792
  %v3226 = vunpack.c.l.b16 %v2793
  %v3227 = vunpack.c.l.b16 %v2794
  %v3228 = vunpack.c.l.b16 %v2795
  %v3229 = vunpack.c.l.b16 %v2796
  %v3230 = vunpack.c.l.b16 %v2797
  %v3231 = vunpack.c.l.b16 %v2798
  %v3232 = vunpack.c.l.b16 %v2799
  %v3233 = vunpack.c.l.b16 %v2800
  %v3234 = vunpack.c.l.b16 %v2801
  %v3235 = vunpack.c.l.b16 %v2802
  %v3236 = vunpack.c.l.b16 %v2803
  %v3237 = vunpack.c.l.b16 %v2804
  %v3238 = vunpack.c.l.b16 %v2805
  %v3239 = vunpack.c.l.b16 %v2806
  %v3240 = vunpack.c.l.b16 %v2807
  %v3241 = vunpack.c.l.b16 %v2808
  %v3242 = vunpack.c.l.b16 %v2809
  %v3243 = vunpack.c.l.b16 %v2810
  %v3244 = vunpack.c.l.b16 %v2811
  %v3245 = vunpack.c.l.b16 %v2812
  %v3246 = vunpack.c.l.b16 %v2813
  %v3247 = vunpack.c.l.b16 %v2814
  %v3248 = vunpack.c.l.b16 %v2815
  %v3249 = vunpack.c.l.b16 %v2816
  %v3250 = vunpack.c.l.b16 %v2817
  %v3251 = vunpack.c.l.b16 %v2818
  %v3252 = vunpack.c.l.b16 %v2819
  %v3253 = vunpack.c.l.b16 %v2820
  %v3254 = vunpack.c.l.b16 %v2821
  %v3255 = vunpack.c.l.b16 %v2822
  %v3256 = vunpack.c.l.b16 %v2823
  %v3257 = vunpack.c.l.b16 %v2824
  %v3258 = vunpack.c.l.b16 %v2825
  %v3259 = vunpack.c.l.b16 %v2826
  %v3260 = vunpack.c.l.b16 %v2827
  %v3261 = vunpack.c.l.b16 %v2828
  %v3262 = vunpack.c.l.b16 %v2829
  %v3263 = vunpack.c.l.b16 %v2830
  %v3264 = vunpack.c.l.b16 %v2831
  %v3265 = vunpack.c.l.b16 %v2832
  %v3266 = vunpack.c.l.b16 %v2833
  %v3267 = vunpack.c.l.b16 %v2834
  %v3268 = vunpack.c.l.b16 %v2835
  %v3269 = vunpack.c.l.b16 %v2836
  %v3270 = vunpack.c.l.b16 %v2837
  %v3271 = vunpack.c.l.b16 %v2838
  %v3272 = vunpack.c.l.b16 %v2839
  %v3273 = vunpack.c.l.b16 %v2840
  %v3274 = vunpack.c.l.b16 %v2841
  %v3275 = vunpack.c.l.b16 %v2842
  %v3276 = vunpack.c.l.b16 %v2843
  %v3277 = vunpack.c.l.b16 %v2844
  %v3278 = vunpack.c.l.b16 %v2845
  %v3279 = vunpack.c.l.b16 %v2846
  %v3280 = vunpack.c.l.b16 %v2847
  %v3281 = vunpack.c.l.b16 %v2848
  %v3282 = vpack.c.b16 %v3091, %v3090
  %v3283 = vpack.c.b16 %v3093, %v3092
  %v3284 = vpack.c.b16 %v3095, %v3094
  %v3285 = vpack.c.b16 %v3097, %v3096
  %v3286 = vpack.c.b16 %v3099, %v3098
  %v3287 = vpack.c.b16 %v3101, %v3100
  %v3288 = vpack.c.b16 %v3103, %v3102
  %v3289 = vpack.c.b16 %v3105, %v3104
  %v3290 = vpack.c.b16 %v3107, %v3106
  %v3291 = vpack.c.b16 %v3109, %v3108
  %v3292 = vpack.c.b16 %v3111, %v3110
  %v3293 = vpack.c.b16 %v3113, %v3112
  %v3294 = vpack.c.b16 %v3115, %v3114
  %v3295 = vpack.c.b16 %v3117, %v3116
  %v3296 = vpack.c.b16 %v3119, %v3118
  %v3297 = vpack.c.b16 %v3121, %v3120
  %v3298 = vpack.c.b16 %v3123, %v3122
  %v3299 = vpack.c.b16 %v3125, %v3124
  %v3300 = vpack.c.b16 %v3127, %v3126
  %v3301 = vpack.c.b16 %v3129, %v3128
  %v3302 = vpack.c.b16 %v3131, %v3130
  %v3303 = vpack.c.b16 %v3133, %v3132
  %v3304 = vpack.c.b16 %v3135, %v3134
  %v3305 = vpack.c.b16 %v3137, %v3136
  %v3306 = vpack.c.b16 %v3139, %v3138
  %v3307 = vpack.c.b16 %v3141, %v3140
  %v3308 = vpack.c.b16 %v3143, %v3142
  %v3309 = vpack.c.b16 %v3145, %v3144
  %v3310 = vpack.c.b16 %v3147, %v3146
  %v3311 = vpack.c.b16 %v3149, %v3148
  %v3312 = vpack.c.b16 %v3151, %v3150
  %v3313 = vpack.c.b16 %v3153, %v3152
  %v3314 = vpack.c.b16 %v3155, %v3154
  %v3315 = vpack.c.b16 %v3157, %v3156
  %v3316 = vpack.c.b16 %v3159, %v3158
  %v3317 = vpack.c.b16 %v3161, %v3160
  %v3318 = vpack.c.b16 %v3163, %v3162
  %v3319 = vpack.c.b16 %v3165, %v3164
  %v3320 = vpack.c.b16 %v3167, %v3166
  %v3321 = vpack.c.b16 %v3169, %v3168
  %v3322 = vpack.c.b16 %v3171, %v3170
  %v3323 = vpack.c.b16 %v3173, %v3172
  %v3324 = vpack.c.b16 %v3175, %v3174
  %v3325 = vpack.c.b16 %v3177, %v3176
  %v3326 = vpack.c.b16 %v3179, %v3178
  %v3327 = vpack.c.b16 %v3181, %v3180
  %v3328 = vpack.c.b16 %v3183, %v3182
  %v3329 = vpack.c.b16 %v3185, %v3184
  %v3330 = vpack.c.b16 %v3187, %v3186
  %v3331 = vpack.c.b16 %v3189, %v3188
  %v3332 = vpack.c.b16 %v3191, %v3190
  %v3333 = vpack.c.b16 %v3193, %v3192
  %v3334 = vpack.c.b16 %v3195, %v3194
  %v3335 = vpack.c.b16 %v3197, %v3196
  %v3336 = vpack.c.b16 %v3199, %v3198
  %v3337 = vpack.c.b16 %v3201, %v3200
  %v3338 = vpack.c.b16 %v3203, %v3202
  %v3339 = vpack.c.b16 %v3205, %v3204
  %v3340 = vpack.c.b16 %v3207, %v3206
  %v3341 = vpack.c.b16 %v3209, %v3208
  %v3342 = vpack.c.b16 %v3211, %v3210
  %v3343 = vpack.c.b16 %v3213, %v3212
  %v3344 = vpack.c.b16 %v3215, %v3214
  %v3345 = vpack.c.b16 %v3217, %v3216
  %v3346 = vpack.c.b16 %v3219, %v3218
  %v3347 = vpack.c.b16 %v3221, %v3220
  %v3348 = vpack.c.b16 %v3223, %v3222
  %v3349 = vpack.c.b16 %v3225, %v3224
  %v3350 = vpack.c.b16 %v3227, %v3226
  %v3351 = vpack.c.b16 %v3229, %v3228
  %v3352 = vpack.c.b16 %v3231, %v3230
  %v3353 = vpack.c.b16 %v3233, %v3232
  %v3354 = vpack.c.b16 %v3235, %v3234
  %v3355 = vpack.c.b16 %v3237, %v3236
  %v3356 = vpack.c.b16 %v3239, %v3238
  %v3357 = vpack.c.b16 %v3241, %v3240
  %v3358 = vpack.c.b16 %v3243, %v3242
  %v3359 = vpack.c.b16 %v3245, %v3244
  %v3360 = vpack.c.b16 %v3247, %v3246
  %v3361 = vpack.c.b16 %v3249, %v3248
  %v3362 = vpack.c.b16 %v3251, %v3250
  %v3363 = vpack.c.b16 %v3253, %v3252
  %v3364 = vpack.c.b16 %v3255, %v3254
  %v3365 = vpack.c.b16 %v3257, %v3256
  %v3366 = vpack.c.b16 %v3259, %v3258
  %v3367 = vpack.c.b16 %v3261, %v3260
  %v3368 = vpack.c.b16 %v3263, %v3262
  %v3369 = vpack.c.b16 %v3265, %v3264
  %v3370 = vpack.c.b16 %v3267, %v3266
  %v3371 = vpack.c.b16 %v3269, %v3268
  %v3372 = vpack.c.b16 %v3271, %v3270
  %v3373 = vpack.c.b16 %v3273, %v3272
  %v3374 = vpack.c.b16 %v3275, %v3274
  %v3375 = vpack.c.b16 %v3277, %v3276
  %v3376 = vpack.c.b16 %v3279, %v3278
  %v3377 = vpack.c.b16 %v3281, %v3280
  %3474 = vmatprep.subr.bf16.mxu0 0
  %3475 = vmatpush1.bf16.msra.mxu0 %v3282
  %3476 = vmatprep.subr.bf16.mxu0 0
  %3477 = vmatpush1.bf16.msra.mxu0 %v3283
  %3478 = vmatprep.subr.bf16.mxu0 0
  %3479 = vmatpush1.bf16.msra.mxu0 %v3284
  %3480 = vmatprep.subr.bf16.mxu0 0
  %3481 = vmatpush1.bf16.msra.mxu0 %v3285
  %3482 = vmatprep.subr.bf16.mxu0 0
  %3483 = vmatpush1.bf16.msra.mxu0 %v3286
  %3484 = vmatprep.subr.bf16.mxu0 0
  %3485 = vmatpush1.bf16.msra.mxu0 %v3287
  %3486 = vmatprep.subr.bf16.mxu0 0
  %3487 = vmatpush1.bf16.msra.mxu0 %v3288
  %3488 = vmatprep.subr.bf16.mxu0 0
  %3489 = vmatpush1.bf16.msra.mxu0 %v3289
  %3490 = vmatprep.subr.bf16.mxu0 0
  %3491 = vmatpush1.bf16.msra.mxu0 %v3290
  %3492 = vmatprep.subr.bf16.mxu0 0
  %3493 = vmatpush1.bf16.msra.mxu0 %v3291
  %3494 = vmatprep.subr.bf16.mxu0 0
  %3495 = vmatpush1.bf16.msra.mxu0 %v3292
  %3496 = vmatprep.subr.bf16.mxu0 0
  %3497 = vmatpush1.bf16.msra.mxu0 %v3293
  %3498 = vmatprep.subr.bf16.mxu0 0
  %3499 = vmatpush1.bf16.msra.mxu0 %v3294
  %3500 = vmatprep.subr.bf16.mxu0 0
  %3501 = vmatpush1.bf16.msra.mxu0 %v3295
  %3502 = vmatprep.subr.bf16.mxu0 0
  %3503 = vmatpush1.bf16.msra.mxu0 %v3296
  %3504 = vmatprep.subr.bf16.mxu0 0
  %3505 = vmatpush1.bf16.msra.mxu0 %v3297
  %3506 = vmatprep.mubr.bf16.mxu0 %v2875
  %3507 = vmatmul.mubr.bf16.gmra.mrb[0].mxu0 %v2874
  %v3508 = vpop.f32.mrb[0].mxu0
  %v3509 = vadd.f32 %v2854, %v3508
  %v3510 = vpop.f32.mrb[0].mxu0
  %v3511 = vpop.f32.mrb[0].mxu0
  %v3512 = vpop.f32.mrb[0].mxu0
  %3513 = vdwg.mxu0
  %3514 = vmatprep.subr.bf16.mxu0 0
  %3515 = vmatpush1.bf16.msra.mxu0 %v3298
  %3516 = vmatprep.subr.bf16.mxu0 0
  %3517 = vmatpush1.bf16.msra.mxu0 %v3299
  %3518 = vmatprep.subr.bf16.mxu0 0
  %3519 = vmatpush1.bf16.msra.mxu0 %v3300
  %3520 = vmatprep.subr.bf16.mxu0 0
  %3521 = vmatpush1.bf16.msra.mxu0 %v3301
  %3522 = vmatprep.subr.bf16.mxu0 0
  %3523 = vmatpush1.bf16.msra.mxu0 %v3302
  %3524 = vmatprep.subr.bf16.mxu0 0
  %3525 = vmatpush1.bf16.msra.mxu0 %v3303
  %3526 = vmatprep.subr.bf16.mxu0 0
  %3527 = vmatpush1.bf16.msra.mxu0 %v3304
  %3528 = vmatprep.subr.bf16.mxu0 0
  %3529 = vmatpush1.bf16.msra.mxu0 %v3305
  %3530 = vmatprep.subr.bf16.mxu0 0
  %3531 = vmatpush1.bf16.msra.mxu0 %v3306
  %3532 = vmatprep.subr.bf16.mxu0 0
  %3533 = vmatpush1.bf16.msra.mxu0 %v3307
  %3534 = vmatprep.subr.bf16.mxu0 0
  %3535 = vmatpush1.bf16.msra.mxu0 %v3308
  %3536 = vmatprep.subr.bf16.mxu0 0
  %3537 = vmatpush1.bf16.msra.mxu0 %v3309
  %3538 = vmatprep.subr.bf16.mxu0 0
  %3539 = vmatpush1.bf16.msra.mxu0 %v3310
  %3540 = vmatprep.subr.bf16.mxu0 0
  %3541 = vmatpush1.bf16.msra.mxu0 %v3311
  %3542 = vmatprep.subr.bf16.mxu0 0
  %3543 = vmatpush1.bf16.msra.mxu0 %v3312
  %3544 = vmatprep.subr.bf16.mxu0 0
  %3545 = vmatpush1.bf16.msra.mxu0 %v3313
  %3546 = vmatprep.mubr.bf16.mxu0 %v2877
  %3547 = vmatmul.mubr.bf16.gmra.mrb[0].mxu0 %v2876
  %v3548 = vpop.f32.mrb[0].mxu0
  %v3549 = vadd.f32 %v3509, %v3548
  %v3550 = vpop.f32.mrb[0].mxu0
  %v3551 = vpop.f32.mrb[0].mxu0
  %v3552 = vpop.f32.mrb[0].mxu0
  %3553 = vdwg.mxu0
  %3554 = vmatprep.subr.bf16.mxu0 0
  %3555 = vmatpush1.bf16.msra.mxu0 %v3314
  %3556 = vmatprep.subr.bf16.mxu0 0
  %3557 = vmatpush1.bf16.msra.mxu0 %v3315
  %3558 = vmatprep.subr.bf16.mxu0 0
  %3559 = vmatpush1.bf16.msra.mxu0 %v3316
  %3560 = vmatprep.subr.bf16.mxu0 0
  %3561 = vmatpush1.bf16.msra.mxu0 %v3317
  %3562 = vmatprep.subr.bf16.mxu0 0
  %3563 = vmatpush1.bf16.msra.mxu0 %v3318
  %3564 = vmatprep.subr.bf16.mxu0 0
  %3565 = vmatpush1.bf16.msra.mxu0 %v3319
  %3566 = vmatprep.subr.bf16.mxu0 0
  %3567 = vmatpush1.bf16.msra.mxu0 %v3320
  %3568 = vmatprep.subr.bf16.mxu0 0
  %3569 = vmatpush1.bf16.msra.mxu0 %v3321
  %3570 = vmatprep.subr.bf16.mxu0 0
  %3571 = vmatpush1.bf16.msra.mxu0 %v3322
  %3572 = vmatprep.subr.bf16.mxu0 0
  %3573 = vmatpush1.bf16.msra.mxu0 %v3323
  %3574 = vmatprep.subr.bf16.mxu0 0
  %3575 = vmatpush1.bf16.msra.mxu0 %v3324
  %3576 = vmatprep.subr.bf16.mxu0 0
  %3577 = vmatpush1.bf16.msra.mxu0 %v3325
  %3578 = vmatprep.subr.bf16.mxu0 0
  %3579 = vmatpush1.bf16.msra.mxu0 %v3326
  %3580 = vmatprep.subr.bf16.mxu0 0
  %3581 = vmatpush1.bf16.msra.mxu0 %v3327
  %3582 = vmatprep.subr.bf16.mxu0 0
  %3583 = vmatpush1.bf16.msra.mxu0 %v3328
  %3584 = vmatprep.subr.bf16.mxu0 0
  %3585 = vmatpush1.bf16.msra.mxu0 %v3329
  %3586 = vmatprep.mubr.bf16.mxu0 %v2879
  %3587 = vmatmul.mubr.bf16.gmra.mrb[0].mxu0 %v2878
  %v3588 = vpop.f32.mrb[0].mxu0
  %v3589 = vadd.f32 %v3549, %v3588
  %v3590 = vpop.f32.mrb[0].mxu0
  %v3591 = vpop.f32.mrb[0].mxu0
  %v3592 = vpop.f32.mrb[0].mxu0
  %3593 = vdwg.mxu0
  %3594 = vmatprep.subr.bf16.mxu0 0
  %3595 = vmatpush1.bf16.msra.mxu0 %v3330
  %3596 = vmatprep.subr.bf16.mxu0 0
  %3597 = vmatpush1.bf16.msra.mxu0 %v3331
  %3598 = vmatprep.subr.bf16.mxu0 0
  %3599 = vmatpush1.bf16.msra.mxu0 %v3332
  %3600 = vmatprep.subr.bf16.mxu0 0
  %3601 = vmatpush1.bf16.msra.mxu0 %v3333
  %3602 = vmatprep.subr.bf16.mxu0 0
  %3603 = vmatpush1.bf16.msra.mxu0 %v3334
  %3604 = vmatprep.subr.bf16.mxu0 0
  %3605 = vmatpush1.bf16.msra.mxu0 %v3335
  %3606 = vmatprep.subr.bf16.mxu0 0
  %3607 = vmatpush1.bf16.msra.mxu0 %v3336
  %3608 = vmatprep.subr.bf16.mxu0 0
  %3609 = vmatpush1.bf16.msra.mxu0 %v3337
  %3610 = vmatprep.subr.bf16.mxu0 0
  %3611 = vmatpush1.bf16.msra.mxu0 %v3338
  %3612 = vmatprep.subr.bf16.mxu0 0
  %3613 = vmatpush1.bf16.msra.mxu0 %v3339
  %3614 = vmatprep.subr.bf16.mxu0 0
  %3615 = vmatpush1.bf16.msra.mxu0 %v3340
  %3616 = vmatprep.subr.bf16.mxu0 0
  %3617 = vmatpush1.bf16.msra.mxu0 %v3341
  %3618 = vmatprep.subr.bf16.mxu0 0
  %3619 = vmatpush1.bf16.msra.mxu0 %v3342
  %3620 = vmatprep.subr.bf16.mxu0 0
  %3621 = vmatpush1.bf16.msra.mxu0 %v3343
  %3622 = vmatprep.subr.bf16.mxu0 0
  %3623 = vmatpush1.bf16.msra.mxu0 %v3344
  %3624 = vmatprep.subr.bf16.mxu0 0
  %3625 = vmatpush1.bf16.msra.mxu0 %v3345
  %3626 = vmatprep.mubr.bf16.mxu0 %v2881
  %3627 = vmatmul.mubr.bf16.gmra.mrb[0].mxu0 %v2880
  %v3628 = vpop.f32.mrb[0].mxu0
  %v3629 = vadd.f32 %v3589, %v3628
  %v3630 = vpop.f32.mrb[0].mxu0
  %v3631 = vpop.f32.mrb[0].mxu0
  %v3632 = vpop.f32.mrb[0].mxu0
  %3633 = vdwg.mxu0
  %3634 = vmatprep.subr.bf16.mxu0 0
  %3635 = vmatpush1.bf16.msra.mxu0 %v3346
  %3636 = vmatprep.subr.bf16.mxu0 0
  %3637 = vmatpush1.bf16.msra.mxu0 %v3347
  %3638 = vmatprep.subr.bf16.mxu0 0
  %3639 = vmatpush1.bf16.msra.mxu0 %v3348
  %3640 = vmatprep.subr.bf16.mxu0 0
  %3641 = vmatpush1.bf16.msra.mxu0 %v3349
  %3642 = vmatprep.subr.bf16.mxu0 0
  %3643 = vmatpush1.bf16.msra.mxu0 %v3350
  %3644 = vmatprep.subr.bf16.mxu0 0
  %3645 = vmatpush1.bf16.msra.mxu0 %v3351
  %3646 = vmatprep.subr.bf16.mxu0 0
  %3647 = vmatpush1.bf16.msra.mxu0 %v3352
  %3648 = vmatprep.subr.bf16.mxu0 0
  %3649 = vmatpush1.bf16.msra.mxu0 %v3353
  %3650 = vmatprep.subr.bf16.mxu0 0
  %3651 = vmatpush1.bf16.msra.mxu0 %v3354
  %3652 = vmatprep.subr.bf16.mxu0 0
  %3653 = vmatpush1.bf16.msra.mxu0 %v3355
  %3654 = vmatprep.subr.bf16.mxu0 0
  %3655 = vmatpush1.bf16.msra.mxu0 %v3356
  %3656 = vmatprep.subr.bf16.mxu0 0
  %3657 = vmatpush1.bf16.msra.mxu0 %v3357
  %3658 = vmatprep.subr.bf16.mxu0 0
  %3659 = vmatpush1.bf16.msra.mxu0 %v3358
  %3660 = vmatprep.subr.bf16.mxu0 0
  %3661 = vmatpush1.bf16.msra.mxu0 %v3359
  %3662 = vmatprep.subr.bf16.mxu0 0
  %3663 = vmatpush1.bf16.msra.mxu0 %v3360
  %3664 = vmatprep.subr.bf16.mxu0 0
  %3665 = vmatpush1.bf16.msra.mxu0 %v3361
  %3666 = vmatprep.mubr.bf16.mxu0 %v2883
  %3667 = vmatmul.mubr.bf16.gmra.mrb[0].mxu0 %v2882
  %v3668 = vpop.f32.mrb[0].mxu0
  %v3669 = vadd.f32 %v3629, %v3668
  %v3670 = vpop.f32.mrb[0].mxu0
  %v3671 = vpop.f32.mrb[0].mxu0
  %v3672 = vpop.f32.mrb[0].mxu0
  %3673 = vdwg.mxu0
  %3674 = vmatprep.subr.bf16.mxu0 0
  %3675 = vmatpush1.bf16.msra.mxu0 %v3362
  %3676 = vmatprep.subr.bf16.mxu0 0
  %3677 = vmatpush1.bf16.msra.mxu0 %v3363
  %3678 = vmatprep.subr.bf16.mxu0 0
  %3679 = vmatpush1.bf16.msra.mxu0 %v3364
  %3680 = vmatprep.subr.bf16.mxu0 0
  %3681 = vmatpush1.bf16.msra.mxu0 %v3365
  %3682 = vmatprep.subr.bf16.mxu0 0
  %3683 = vmatpush1.bf16.msra.mxu0 %v3366
  %3684 = vmatprep.subr.bf16.mxu0 0
  %3685 = vmatpush1.bf16.msra.mxu0 %v3367
  %3686 = vmatprep.subr.bf16.mxu0 0
  %3687 = vmatpush1.bf16.msra.mxu0 %v3368
  %3688 = vmatprep.subr.bf16.mxu0 0
  %3689 = vmatpush1.bf16.msra.mxu0 %v3369
  %3690 = vmatprep.subr.bf16.mxu0 0
  %3691 = vmatpush1.bf16.msra.mxu0 %v3370
  %3692 = vmatprep.subr.bf16.mxu0 0
  %3693 = vmatpush1.bf16.msra.mxu0 %v3371
  %3694 = vmatprep.subr.bf16.mxu0 0
  %3695 = vmatpush1.bf16.msra.mxu0 %v3372
  %3696 = vmatprep.subr.bf16.mxu0 0
  %3697 = vmatpush1.bf16.msra.mxu0 %v3373
  %3698 = vmatprep.subr.bf16.mxu0 0
  %3699 = vmatpush1.bf16.msra.mxu0 %v3374
  %3700 = vmatprep.subr.bf16.mxu0 0
  %3701 = vmatpush1.bf16.msra.mxu0 %v3375
  %3702 = vmatprep.subr.bf16.mxu0 0
  %3703 = vmatpush1.bf16.msra.mxu0 %v3376
  %3704 = vmatprep.subr.bf16.mxu0 0
  %3705 = vmatpush1.bf16.msra.mxu0 %v3377
  %3706 = vmatprep.mubr.bf16.mxu0 %v2885
  %3707 = vmatmul.mubr.bf16.gmra.mrb[0].mxu0 %v2884
  %v3708 = vpop.f32.mrb[0].mxu0
  %v3709 = vadd.f32 %v3669, %v3708
  %v3710 = vpop.f32.mrb[0].mxu0
  %v3711 = vpop.f32.mrb[0].mxu0
  %v3712 = vpop.f32.mrb[0].mxu0
  %3713 = vdwg.mxu0
  %3714 = vst.msk [vmem:[%s9] sm:$0xff] %vm1713, %v3709
  // Predicated region
  $region38: #{cnn_forward.1} parent=0 // pred_check
    _
  $region39: #{cnn_forward.1} parent=0 // pred_check_branch
    %3716 = sbr.rel (0) target = $region41
  $region40: #{cnn_forward.1} parent=0 // pred_region
    _
  $region41: #{cnn_forward.1} parent=0 // pred_fallthru
    _
  // Predicated region
  $region42: #{cnn_forward.1} parent=0 // pred_check
    _
  $region43: #{cnn_forward.1} parent=0 // pred_check_branch
    %3718 = sbr.rel (0) target = $region45
  $region44: #{cnn_forward.1} parent=0 // pred_region
    _
  $region45: #{cnn_forward.1} parent=0 // pred_fallthru
    _

</llo_original>
